<compile_context>
chip_gen: v5e
topology: v5e:2x2
jax: 0.10.0
libtpu: 0.0.40
codegen_flags: <defaults>
</compile_context>

<pallas_src>
import functools

import jax
import jax.numpy as jnp
import numpy as np
from jax.experimental import pallas as pl
from jax.experimental.pallas import tpu as pltpu


def _round_up(x, m):
    return (x + m - 1) // m * m


# ----------------------------------------------------------------------------
# Fused kernel: one grid step = one batch image.
# ----------------------------------------------------------------------------
def fused_encoder_kernel(xcol_ref, w1_ref, w2_ref, t1_ref, t2_ref,
                         o_ref, p_ref,
                         hcol_ref, pstg_ref,
                         *, H, W, Hp, Wp, Cout):
    # xcol_ref : (1, H, W, k1p)      bf16  wrapper-packed conv1 im2col input
    # w1_ref   : (k1p, Cp)           bf16  conv1 weights (BN1 scale folded in)
    # w2_ref   : (9*Cp, Cp)          bf16  conv2 weights (BN2 scale folded in)
    # t*_ref   : (1, Cp)             f32   folded BN shift (beta + (bias-mean)*scale)
    # o_ref    : (1, Cout, H*W)      f32   conv2+BN+ReLU output, packed NCHW
    # p_ref    : (1, Cout, Hp*Wp)    f32   2x2 ceil-mode max-pooled output, packed NCHW
    # hcol_ref : (H+2, W, 3*Cp)      bf16  conv1 output staged pre-shifted per kw tap
    # pstg_ref : (Hp, W(+1), Cp)     f32   pool staging after the H-pair max
    c = w2_ref.shape[1]                       # lane-padded channel count Cp
    HW = H * W

    # ---- conv1: single MXU matmul on the packed im2col tile ------------------
    x_col = xcol_ref[0].reshape(HW, xcol_ref.shape[3])
    acc1 = jnp.dot(x_col, w1_ref[...], preferred_element_type=jnp.float32)
    h1 = jnp.maximum(acc1 + t1_ref[...], 0.0)             # BN shift + ReLU, f32
    h1b = h1.astype(hcol_ref.dtype).reshape(H, W, c)      # padded lanes are exactly 0

    # ---- stage conv1 output once, pre-shifted for the 3 kw taps --------------
    # Invariant: hcol[r, x, dx*c:(dx+1)*c] == zero-padded-h1[r, x+dx].
    # Only the constant border cells below are NOT covered by these writes, so we
    # re-zero just those every step (cheap, and safe even if the batch axis is
    # sharded across TensorCores).
    zrow = jnp.zeros((1, W, 3 * c), hcol_ref.dtype)
    hcol_ref[0:1] = zrow                                   # top halo row
    hcol_ref[H + 1:H + 2] = zrow                           # bottom halo row
    zcol = jnp.zeros((H, 1, c), hcol_ref.dtype)
    hcol_ref[1:H + 1, 0:1, 0:c] = zcol                     # left halo of the dx=0 tap
    hcol_ref[1:H + 1, W - 1:W, 2 * c:3 * c] = zcol         # right halo of the dx=2 tap

    hcol_ref[1:H + 1, 1:W, 0:c] = h1b[:, 0:W - 1, :]       # dx = 0 tap
    hcol_ref[1:H + 1, :, c:2 * c] = h1b                    # dx = 1 tap
    hcol_ref[1:H + 1, 0:W - 1, 2 * c:3 * c] = h1b[:, 1:W, :]   # dx = 2 tap

    # ---- conv2: 3 accumulated matmuls (one per kh row), K = 3*c ---------------
    acc2 = None
    for dy in range(3):
        pat = hcol_ref[dy:dy + H].reshape(HW, 3 * c)       # contiguous read, no copy loop
        part = jnp.dot(pat, w2_ref[dy * 3 * c:(dy + 1) * 3 * c, :],
                       preferred_element_type=jnp.float32)
        acc2 = part if acc2 is None else acc2 + part
    h2 = jnp.maximum(acc2 + t2_ref[...], 0.0)              # (HW, c) f32

    # ---- maxpool: H-pair max on the value (leading-dim regroup is free) -------
    h2_3 = h2.reshape(H, W, c)
    if H % 2 == 1:                                         # ceil_mode pad (post-ReLU >= 0)
        h2_3 = jnp.pad(h2_3, ((0, 1), (0, 0), (0, 0)))
    h2_4 = h2_3.reshape(Hp, 2, W, c)
    pstg_ref[:, 0:W, :] = jnp.maximum(h2_4[:, 0], h2_4[:, 1])
    if W % 2 == 1:                                         # ceil_mode pad column
        pstg_ref[:, W:W + 1, :] = jnp.zeros((Hp, 1, c), pstg_ref.dtype)

    # ---- conv2 output, packed NCHW: only the real channels hit HBM ------------
    o_ref[0] = jnp.transpose(h2)[0:Cout, :].astype(o_ref.dtype)

    # ---- maxpool: W-pair max via sublane-strided reads of the staging ---------
    wa = pstg_ref[:, pl.ds(0, Wp, stride=2), :]
    wb = pstg_ref[:, pl.ds(1, Wp, stride=2), :]
    pooled = jnp.maximum(wa, wb).reshape(Hp * Wp, c)
    p_ref[0] = jnp.transpose(pooled)[0:Cout, :].astype(p_ref.dtype)


# ----------------------------------------------------------------------------
# Wrapper: layout plumbing (NCHW packing, BN folding, conv1 im2col, weight tiles).
# ----------------------------------------------------------------------------
def encoder_forward(p, x_nchw, eps=1e-5):
    N, Cin, H, W = x_nchw.shape
    Cout = p["w1"].shape[0]
    cout_p = _round_up(Cout, 128)                 # lane-dense channels for the MXU
    k1p = _round_up(9 * Cin, 128)                 # conv1 contraction, not 9*round_up(Cin)
    Hp, Wp = -(-H // 2), -(-W // 2)               # ceil_mode=True
    Ww = W + (W % 2)                              # pool staging width (even)

    # ---- fold BN scale into the conv weights; keep only the per-channel shift ----
    s1 = p["gamma1"] / jnp.sqrt(p["var1"] + eps)
    t1 = p["beta1"] + (p["bias1"] - p["mean1"]) * s1
    s2 = p["gamma2"] / jnp.sqrt(p["var2"] + eps)
    t2 = p["beta2"] + (p["bias2"] - p["mean2"]) * s2

    w1_hwio = jnp.transpose(p["w1"], (2, 3, 1, 0)) * s1           # (3,3,Cin,Cout)
    w2_hwio = jnp.transpose(p["w2"], (2, 3, 1, 0)) * s2           # (3,3,Cout,Cout)

    w1_col = w1_hwio.reshape(9 * Cin, Cout)
    w1_col = jnp.pad(w1_col, ((0, k1p - 9 * Cin), (0, cout_p - Cout))).astype(jnp.bfloat16)
    w2_col = jnp.pad(w2_hwio, ((0, 0), (0, 0),
                               (0, cout_p - Cout), (0, cout_p - Cout)))
    w2_col = w2_col.reshape(9 * cout_p, cout_p).astype(jnp.bfloat16)

    t1v = jnp.pad(t1, (0, cout_p - Cout))[None, :].astype(jnp.float32)
    t2v = jnp.pad(t2, (0, cout_p - Cout))[None, :].astype(jnp.float32)

    # ---- conv1 im2col on the (tiny) input, lane-packed K = k1p -------------------
    x = jnp.transpose(x_nchw, (0, 2, 3, 1))                        # NCHW -> NHWC
    xp = jnp.pad(x, ((0, 0), (1, 1), (1, 1), (0, 0)))
    taps = [xp[:, dy:dy + H, dx:dx + W, :] for dy in range(3) for dx in range(3)]
    x_col = jnp.concatenate(taps, axis=-1)                         # (N,H,W,9*Cin)
    x_col = jnp.pad(x_col, ((0, 0), (0, 0), (0, 0), (0, k1p - 9 * Cin)))
    x_col = x_col.astype(jnp.bfloat16)

    kernel = functools.partial(fused_encoder_kernel,
                               H=H, W=W, Hp=Hp, Wp=Wp, Cout=Cout)
    vec_spec = pl.BlockSpec((1, cout_p), lambda n: (0, 0))

    # ---- VMEM budget from the actual buffers (double-buffered blocks + scratch) --
    blk_bytes = (H * W * k1p * 2 + k1p * cout_p * 2 + 9 * cout_p * cout_p * 2
                 + 2 * cout_p * 4 + Cout * H * W * 4 + Cout * Hp * Wp * 4)
    scr_bytes = (H + 2) * W * 3 * cout_p * 2 + Hp * Ww * cout_p * 4
    est = 2 * blk_bytes + scr_bytes + 6 * H * W * cout_p * 4       # + f32 value temps
    try:
        phys = int(pltpu.get_tpu_info().vmem_capacity_bytes)
    except Exception:
        phys = 128 * 1024 * 1024
    vmem_limit = int(min(phys * 3 // 4, max(32 * 1024 * 1024, 2 * est)))

    out, pooled = pl.pallas_call(
        kernel,
        out_shape=(jax.ShapeDtypeStruct((N, Cout, H * W), jnp.float32),
                   jax.ShapeDtypeStruct((N, Cout, Hp * Wp), jnp.float32)),
        grid_spec=pltpu.PrefetchScalarGridSpec(
            num_scalar_prefetch=0,
            grid=(N,),
            in_specs=[
                pl.BlockSpec((1, H, W, k1p), lambda n: (n, 0, 0, 0)),
                pl.BlockSpec((k1p, cout_p), lambda n: (0, 0)),
                pl.BlockSpec((9 * cout_p, cout_p), lambda n: (0, 0)),
                vec_spec, vec_spec,
            ],
            out_specs=[
                pl.BlockSpec((1, Cout, H * W), lambda n: (n, 0, 0)),
                pl.BlockSpec((1, Cout, Hp * Wp), lambda n: (n, 0, 0)),
            ],
            scratch_shapes=[
                pltpu.VMEM((H + 2, W, 3 * cout_p), jnp.bfloat16),   # pre-shifted conv1 out
                pltpu.VMEM((Hp, Ww, cout_p), jnp.float32),          # pool staging
            ]),
        compiler_params=pltpu.CompilerParams(
            dimension_semantics=("parallel",),
            vmem_limit_bytes=vmem_limit),
    )(x_col, w1_col, w2_col, t1v, t2v)

    # Packed (N, Cout, H*W) -> NCHW is a free reshape; no slice / transpose passes.
    return out.reshape(N, Cout, H, W), pooled.reshape(N, Cout, Hp, Wp)


# ----------------------------------------------------------------------------
# Parameters (deterministic synthetic init) and pure-JAX reference.
# ----------------------------------------------------------------------------
def init_encoder_params(key, cin, cout):
    ks = jax.random.split(key, 12)
    b1 = 1.0 / float(np.sqrt(cin * 9))
    b2 = 1.0 / float(np.sqrt(cout * 9))
    u = lambda k, s, b: jax.random.uniform(k, s, jnp.float32, -b, b)
    n = lambda k, s: jax.random.normal(k, s, jnp.float32)
    return dict(
        w1=u(ks[0], (cout, cin, 3, 3), b1),   bias1=u(ks[1], (cout,), b1),
        gamma1=1.0 + 0.1 * n(ks[2], (cout,)), beta1=0.1 * n(ks[3], (cout,)),
        mean1=0.1 * n(ks[4], (cout,)),        var1=1.0 + 0.1 * jnp.abs(n(ks[5], (cout,))),
        w2=u(ks[6], (cout, cout, 3, 3), b2),  bias2=u(ks[7], (cout,), b2),
        gamma2=1.0 + 0.1 * n(ks[8], (cout,)), beta2=0.1 * n(ks[9], (cout,)),
        mean2=0.1 * n(ks[10], (cout,)),       var2=1.0 + 0.1 * jnp.abs(n(ks[11], (cout,))),
    )


def reference_forward(p, x_nchw, eps=1e-5):
    x = jnp.transpose(x_nchw, (0, 2, 3, 1))
    def block(x, w_oihw, bias, gamma, beta, mean, var):
        w = jnp.transpose(w_oihw, (2, 3, 1, 0))
        y = jax.lax.conv_general_dilated(
            x, w, (1, 1), "SAME", dimension_numbers=("NHWC", "HWIO", "NHWC"),
            precision=jax.lax.Precision.HIGHEST) + bias
        y = (y - mean) / jnp.sqrt(var + eps) * gamma + beta
        return jnp.maximum(y, 0.0)
    h = block(x, p["w1"], p["bias1"], p["gamma1"], p["beta1"], p["mean1"], p["var1"])
    h = block(h, p["w2"], p["bias2"], p["gamma2"], p["beta2"], p["mean2"], p["var2"])
    N, H, W, C = h.shape
    hp = h.reshape(N, H // 2, 2, W // 2, 2, C).max(axis=(2, 4))
    return jnp.transpose(h, (0, 3, 1, 2)), jnp.transpose(hp, (0, 3, 1, 2))


if __name__ == "__main__":
    N, Cin, Cout, H, W = 2, 4, 8, 16, 16
    key = jax.random.PRNGKey(0)
    kx, kp = jax.random.split(key)
    x_nchw = jax.random.normal(kx, (N, Cin, H, W), jnp.float32)
    params = init_encoder_params(kp, Cin, Cout)

    x_out, x_pooled = encoder_forward(params, x_nchw)
    jax.block_until_ready((x_out, x_pooled))

    assert x_out.shape == (N, Cout, H, W)
    assert x_pooled.shape == (N, Cout, H // 2, W // 2)

    x_ref, xp_ref = reference_forward(params, x_nchw)
    # bf16 matmul operands / folded-scale bf16 weights (f32 accumulation) -> loose tol.
    assert np.allclose(np.asarray(x_out), np.asarray(x_ref), rtol=5e-2, atol=5e-2)
    assert np.allclose(np.asarray(x_pooled), np.asarray(xp_ref), rtol=5e-2, atol=5e-2)

    print("KERNEL_OK")
</pallas_src>

<mosaic_0001>
module attributes {stable_mosaic.version = 11 : i64} {
  func.func @fused_encoder_kernel(%arg0: i32, %arg1: memref<1x16x16x128xbf16, #tpu.memory_space<vmem>>, %arg2: memref<128x128xbf16, #tpu.memory_space<vmem>>, %arg3: memref<1152x128xbf16, #tpu.memory_space<vmem>>, %arg4: memref<1x128xf32, #tpu.memory_space<vmem>>, %arg5: memref<1x128xf32, #tpu.memory_space<vmem>>, %arg6: memref<1x8x256xf32, #tpu.memory_space<vmem>>, %arg7: memref<1x8x64xf32, #tpu.memory_space<vmem>>, %arg8: memref<18x16x384xbf16, #tpu.memory_space<vmem>>, %arg9: memref<8x16x128xf32, #tpu.memory_space<vmem>>) attributes {dimension_semantics = [#tpu.dimension_semantics<parallel>], iteration_bounds = array<i64: 2>, scalar_prefetch = 0 : i64, scratch_operands = 2 : i64, tpu.core_type = #tpu.core_type<tc>, window_params = [{transform_indices = @transform_0, window_bounds = array<i64: 1, 16, 16, 128>}, {pipeline_mode = #tpu.pipeline_mode<synchronous>, transform_indices = @transform_1, window_bounds = array<i64: 128, 128>}, {pipeline_mode = #tpu.pipeline_mode<synchronous>, transform_indices = @transform_2, window_bounds = array<i64: 1152, 128>}, {pipeline_mode = #tpu.pipeline_mode<synchronous>, transform_indices = @transform_3, window_bounds = array<i64: 1, 128>}, {pipeline_mode = #tpu.pipeline_mode<synchronous>, transform_indices = @transform_4, window_bounds = array<i64: 1, 128>}, {transform_indices = @transform_5, window_bounds = array<i64: 1, 8, 256>}, {transform_indices = @transform_6, window_bounds = array<i64: 1, 8, 64>}]} {
    %c0 = arith.constant 0 : index
    %c0_0 = arith.constant 0 : index
    %c0_1 = arith.constant 0 : index
    %c0_2 = arith.constant 0 : index
    %0 = vector.load %arg1[%c0, %c0_0, %c0_1, %c0_2] : memref<1x16x16x128xbf16, #tpu.memory_space<vmem>>, vector<1x16x16x128xbf16>
    %1 = vector.shape_cast %0 : vector<1x16x16x128xbf16> to vector<16x16x128xbf16>
    %2 = vector.shape_cast %1 : vector<16x16x128xbf16> to vector<256x128xbf16>
    %c0_3 = arith.constant 0 : index
    %c0_4 = arith.constant 0 : index
    %3 = vector.load %arg2[%c0_3, %c0_4] : memref<128x128xbf16, #tpu.memory_space<vmem>>, vector<128x128xbf16>
    %cst = arith.constant dense<0.000000e+00> : vector<256x128xf32>
    %4 = tpu.matmul %2, %3, %cst {dimension_numbers = #tpu.dot_dimension_numbers<[1], [0], [0], [1], [0, 0, 1, 1], [], []>} : vector<256x128xbf16>, vector<128x128xbf16>, vector<256x128xf32> -> vector<256x128xf32>
    %c0_5 = arith.constant 0 : index
    %c0_6 = arith.constant 0 : index
    %5 = vector.load %arg4[%c0_5, %c0_6] : memref<1x128xf32, #tpu.memory_space<vmem>>, vector<1x128xf32>
    %6 = vector.broadcast %5 : vector<1x128xf32> to vector<256x128xf32>
    %7 = arith.addf %4, %6 : vector<256x128xf32>
    %cst_7 = arith.constant 0.000000e+00 : f32
    %8 = vector.broadcast %cst_7 : f32 to vector<256x128xf32>
    %9 = arith.maximumf %7, %8 : vector<256x128xf32>
    %10 = arith.truncf %9 : vector<256x128xf32> to vector<256x128xbf16>
    %11 = vector.shape_cast %10 : vector<256x128xbf16> to vector<16x16x128xbf16>
    %cst_8 = arith.constant 0.000000e+00 : bf16
    %12 = vector.broadcast %cst_8 : bf16 to vector<1x16x384xbf16>
    %c0_9 = arith.constant 0 : index
    %c0_10 = arith.constant 0 : index
    %c0_11 = arith.constant 0 : index
    %13 = vector.load %arg8[%c0_9, %c0_10, %c0_11] : memref<18x16x384xbf16, #tpu.memory_space<vmem>>, vector<1x16x384xbf16>
    tpu.vector_store %arg8[%c0_9, %c0_10, %c0_11], %12 {strides = array<i32>} : memref<18x16x384xbf16, #tpu.memory_space<vmem>>, vector<1x16x384xbf16>,
    %c17 = arith.constant 17 : index
    %c0_12 = arith.constant 0 : index
    %c0_13 = arith.constant 0 : index
    %14 = vector.load %arg8[%c17, %c0_12, %c0_13] : memref<18x16x384xbf16, #tpu.memory_space<vmem>>, vector<1x16x384xbf16>
    tpu.vector_store %arg8[%c17, %c0_12, %c0_13], %12 {strides = array<i32>} : memref<18x16x384xbf16, #tpu.memory_space<vmem>>, vector<1x16x384xbf16>,
    %cst_14 = arith.constant 0.000000e+00 : bf16
    %15 = vector.broadcast %cst_14 : bf16 to vector<16x1x128xbf16>
    %c1 = arith.constant 1 : index
    %c0_15 = arith.constant 0 : index
    %c0_16 = arith.constant 0 : index
    %16 = vector.load %arg8[%c1, %c0_15, %c0_16] : memref<18x16x384xbf16, #tpu.memory_space<vmem>>, vector<16x1x128xbf16>
    tpu.vector_store %arg8[%c1, %c0_15, %c0_16], %15 {strides = array<i32>} : memref<18x16x384xbf16, #tpu.memory_space<vmem>>, vector<16x1x128xbf16>,
    %c1_17 = arith.constant 1 : index
    %c15 = arith.constant 15 : index
    %c256 = arith.constant 256 : index
    %17 = vector.load %arg8[%c1_17, %c15, %c256] : memref<18x16x384xbf16, #tpu.memory_space<vmem>>, vector<16x1x128xbf16>
    tpu.vector_store %arg8[%c1_17, %c15, %c256], %15 {strides = array<i32>} : memref<18x16x384xbf16, #tpu.memory_space<vmem>>, vector<16x1x128xbf16>,
    %18 = vector.extract_strided_slice %11 {offsets = [0, 0, 0], sizes = [16, 15, 128], strides = [1, 1, 1]} : vector<16x16x128xbf16> to vector<16x15x128xbf16>
    %c1_18 = arith.constant 1 : index
    %c1_19 = arith.constant 1 : index
    %c0_20 = arith.constant 0 : index
    %19 = vector.load %arg8[%c1_18, %c1_19, %c0_20] : memref<18x16x384xbf16, #tpu.memory_space<vmem>>, vector<16x15x128xbf16>
    tpu.vector_store %arg8[%c1_18, %c1_19, %c0_20], %18 {strides = array<i32>} : memref<18x16x384xbf16, #tpu.memory_space<vmem>>, vector<16x15x128xbf16>,
    %c1_21 = arith.constant 1 : index
    %c0_22 = arith.constant 0 : index
    %c128 = arith.constant 128 : index
    %20 = vector.load %arg8[%c1_21, %c0_22, %c128] : memref<18x16x384xbf16, #tpu.memory_space<vmem>>, vector<16x16x128xbf16>
    tpu.vector_store %arg8[%c1_21, %c0_22, %c128], %11 {strides = array<i32>} : memref<18x16x384xbf16, #tpu.memory_space<vmem>>, vector<16x16x128xbf16>,
    %21 = vector.extract_strided_slice %11 {offsets = [0, 1, 0], sizes = [16, 15, 128], strides = [1, 1, 1]} : vector<16x16x128xbf16> to vector<16x15x128xbf16>
    %c1_23 = arith.constant 1 : index
    %c0_24 = arith.constant 0 : index
    %c256_25 = arith.constant 256 : index
    %22 = vector.load %arg8[%c1_23, %c0_24, %c256_25] : memref<18x16x384xbf16, #tpu.memory_space<vmem>>, vector<16x15x128xbf16>
    tpu.vector_store %arg8[%c1_23, %c0_24, %c256_25], %21 {strides = array<i32>} : memref<18x16x384xbf16, #tpu.memory_space<vmem>>, vector<16x15x128xbf16>,
    %c0_26 = arith.constant 0 : index
    %c0_27 = arith.constant 0 : index
    %c0_28 = arith.constant 0 : index
    %23 = vector.load %arg8[%c0_26, %c0_27, %c0_28] : memref<18x16x384xbf16, #tpu.memory_space<vmem>>, vector<16x16x384xbf16>
    %24 = vector.shape_cast %23 : vector<16x16x384xbf16> to vector<256x384xbf16>
    %c0_29 = arith.constant 0 : index
    %c0_30 = arith.constant 0 : index
    %25 = vector.load %arg3[%c0_29, %c0_30] : memref<1152x128xbf16, #tpu.memory_space<vmem>>, vector<384x128xbf16>
    %cst_31 = arith.constant dense<0.000000e+00> : vector<256x128xf32>
    %26 = tpu.matmul %24, %25, %cst_31 {dimension_numbers = #tpu.dot_dimension_numbers<[1], [0], [0], [1], [0, 0, 1, 1], [], []>} : vector<256x384xbf16>, vector<384x128xbf16>, vector<256x128xf32> -> vector<256x128xf32>
    %c1_32 = arith.constant 1 : index
    %c0_33 = arith.constant 0 : index
    %c0_34 = arith.constant 0 : index
    %27 = vector.load %arg8[%c1_32, %c0_33, %c0_34] : memref<18x16x384xbf16, #tpu.memory_space<vmem>>, vector<16x16x384xbf16>
    %28 = vector.shape_cast %27 : vector<16x16x384xbf16> to vector<256x384xbf16>
    %c384 = arith.constant 384 : index
    %c0_35 = arith.constant 0 : index
    %29 = vector.load %arg3[%c384, %c0_35] : memref<1152x128xbf16, #tpu.memory_space<vmem>>, vector<384x128xbf16>
    %cst_36 = arith.constant dense<0.000000e+00> : vector<256x128xf32>
    %30 = tpu.matmul %28, %29, %cst_36 {dimension_numbers = #tpu.dot_dimension_numbers<[1], [0], [0], [1], [0, 0, 1, 1], [], []>} : vector<256x384xbf16>, vector<384x128xbf16>, vector<256x128xf32> -> vector<256x128xf32>
    %31 = arith.addf %26, %30 : vector<256x128xf32>
    %c2 = arith.constant 2 : index
    %c0_37 = arith.constant 0 : index
    %c0_38 = arith.constant 0 : index
    %32 = vector.load %arg8[%c2, %c0_37, %c0_38] : memref<18x16x384xbf16, #tpu.memory_space<vmem>>, vector<16x16x384xbf16>
    %33 = vector.shape_cast %32 : vector<16x16x384xbf16> to vector<256x384xbf16>
    %c768 = arith.constant 768 : index
    %c0_39 = arith.constant 0 : index
    %34 = vector.load %arg3[%c768, %c0_39] : memref<1152x128xbf16, #tpu.memory_space<vmem>>, vector<384x128xbf16>
    %cst_40 = arith.constant dense<0.000000e+00> : vector<256x128xf32>
    %35 = tpu.matmul %33, %34, %cst_40 {dimension_numbers = #tpu.dot_dimension_numbers<[1], [0], [0], [1], [0, 0, 1, 1], [], []>} : vector<256x384xbf16>, vector<384x128xbf16>, vector<256x128xf32> -> vector<256x128xf32>
    %36 = arith.addf %31, %35 : vector<256x128xf32>
    %c0_41 = arith.constant 0 : index
    %c0_42 = arith.constant 0 : index
    %37 = vector.load %arg5[%c0_41, %c0_42] : memref<1x128xf32, #tpu.memory_space<vmem>>, vector<1x128xf32>
    %38 = vector.broadcast %37 : vector<1x128xf32> to vector<256x128xf32>
    %39 = arith.addf %36, %38 : vector<256x128xf32>
    %cst_43 = arith.constant 0.000000e+00 : f32
    %40 = vector.broadcast %cst_43 : f32 to vector<256x128xf32>
    %41 = arith.maximumf %39, %40 : vector<256x128xf32>
    %42 = vector.shape_cast %41 : vector<256x128xf32> to vector<16x16x128xf32>
    %43 = vector.shape_cast %42 : vector<16x16x128xf32> to vector<8x2x16x128xf32>
    %44 = vector.extract_strided_slice %43 {offsets = [0, 0, 0, 0], sizes = [8, 1, 16, 128], strides = [1, 1, 1, 1]} : vector<8x2x16x128xf32> to vector<8x1x16x128xf32>
    %45 = vector.shape_cast %44 : vector<8x1x16x128xf32> to vector<8x16x128xf32>
    %46 = vector.extract_strided_slice %43 {offsets = [0, 1, 0, 0], sizes = [8, 1, 16, 128], strides = [1, 1, 1, 1]} : vector<8x2x16x128xf32> to vector<8x1x16x128xf32>
    %47 = vector.shape_cast %46 : vector<8x1x16x128xf32> to vector<8x16x128xf32>
    %48 = arith.maximumf %45, %47 : vector<8x16x128xf32>
    %c0_44 = arith.constant 0 : index
    %c0_45 = arith.constant 0 : index
    %c0_46 = arith.constant 0 : index
    %49 = vector.load %arg9[%c0_44, %c0_45, %c0_46] : memref<8x16x128xf32, #tpu.memory_space<vmem>>, vector<8x16x128xf32>
    tpu.vector_store %arg9[%c0_44, %c0_45, %c0_46], %48 {strides = array<i32>} : memref<8x16x128xf32, #tpu.memory_space<vmem>>, vector<8x16x128xf32>,
    %50 = tpu.transpose %41, [1, 0] : vector<256x128xf32> -> vector<128x256xf32>
    %51 = vector.extract_strided_slice %50 {offsets = [0, 0], sizes = [8, 256], strides = [1, 1]} : vector<128x256xf32> to vector<8x256xf32>
    %c0_47 = arith.constant 0 : index
    %c0_48 = arith.constant 0 : index
    %c0_49 = arith.constant 0 : index
    %52 = vector.load %arg6[%c0_47, %c0_48, %c0_49] : memref<1x8x256xf32, #tpu.memory_space<vmem>>, vector<1x8x256xf32>
    %53 = vector.shape_cast %52 : vector<1x8x256xf32> to vector<8x256xf32>
    %54 = vector.shape_cast %51 : vector<8x256xf32> to vector<1x8x256xf32>
    tpu.vector_store %arg6[%c0_47, %c0_48, %c0_49], %54 {strides = array<i32>} : memref<1x8x256xf32, #tpu.memory_space<vmem>>, vector<1x8x256xf32>,
    %c0_50 = arith.constant 0 : index
    %c0_51 = arith.constant 0 : index
    %c0_52 = arith.constant 0 : index
    %55 = tpu.strided_load %arg9[%c0_50, %c0_51, %c0_52] {strides = array<i32: 1, 2, 1>} : memref<8x16x128xf32, #tpu.memory_space<vmem>>, vector<8x8x128xf32>
    %c0_53 = arith.constant 0 : index
    %c1_54 = arith.constant 1 : index
    %c0_55 = arith.constant 0 : index
    %56 = tpu.strided_load %arg9[%c0_53, %c1_54, %c0_55] {strides = array<i32: 1, 2, 1>} : memref<8x16x128xf32, #tpu.memory_space<vmem>>, vector<8x8x128xf32>
    %57 = arith.maximumf %55, %56 : vector<8x8x128xf32>
    %58 = vector.shape_cast %57 : vector<8x8x128xf32> to vector<64x128xf32>
    %59 = tpu.transpose %58, [1, 0] : vector<64x128xf32> -> vector<128x64xf32>
    %60 = vector.extract_strided_slice %59 {offsets = [0, 0], sizes = [8, 64], strides = [1, 1]} : vector<128x64xf32> to vector<8x64xf32>
    %c0_56 = arith.constant 0 : index
    %c0_57 = arith.constant 0 : index
    %c0_58 = arith.constant 0 : index
    %61 = vector.load %arg7[%c0_56, %c0_57, %c0_58] : memref<1x8x64xf32, #tpu.memory_space<vmem>>, vector<1x8x64xf32>
    %62 = vector.shape_cast %61 : vector<1x8x64xf32> to vector<8x64xf32>
    %63 = vector.shape_cast %60 : vector<8x64xf32> to vector<1x8x64xf32>
    tpu.vector_store %arg7[%c0_56, %c0_57, %c0_58], %63 {strides = array<i32>} : memref<1x8x64xf32, #tpu.memory_space<vmem>>, vector<1x8x64xf32>,
    return
  }
  func.func @transform_0(%arg0: i32) -> (i32, i32, i32, i32) {
    %c0_i32 = arith.constant 0 : i32
    %c0_i32_0 = arith.constant 0 : i32
    %c0_i32_1 = arith.constant 0 : i32
    %c0_i32_2 = arith.constant 0 : i32
    return %arg0, %c0_i32, %c0_i32_0, %c0_i32_1 : i32, i32, i32, i32
  }
  func.func @transform_1(%arg0: i32) -> (i32, i32) {
    %c0_i32 = arith.constant 0 : i32
    %c0_i32_0 = arith.constant 0 : i32
    %c0_i32_1 = arith.constant 0 : i32
    return %c0_i32, %c0_i32_0 : i32, i32
  }
  func.func @transform_2(%arg0: i32) -> (i32, i32) {
    %c0_i32 = arith.constant 0 : i32
    %c0_i32_0 = arith.constant 0 : i32
    %c0_i32_1 = arith.constant 0 : i32
    return %c0_i32, %c0_i32_0 : i32, i32
  }
  func.func @transform_3(%arg0: i32) -> (i32, i32) {
    %c0_i32 = arith.constant 0 : i32
    %c0_i32_0 = arith.constant 0 : i32
    %c0_i32_1 = arith.constant 0 : i32
    return %c0_i32, %c0_i32_0 : i32, i32
  }
  func.func @transform_4(%arg0: i32) -> (i32, i32) {
    %c0_i32 = arith.constant 0 : i32
    %c0_i32_0 = arith.constant 0 : i32
    %c0_i32_1 = arith.constant 0 : i32
    return %c0_i32, %c0_i32_0 : i32, i32
  }
  func.func @transform_5(%arg0: i32) -> (i32, i32, i32) {
    %c0_i32 = arith.constant 0 : i32
    %c0_i32_0 = arith.constant 0 : i32
    %c0_i32_1 = arith.constant 0 : i32
    return %arg0, %c0_i32, %c0_i32_0 : i32, i32, i32
  }
  func.func @transform_6(%arg0: i32) -> (i32, i32, i32) {
    %c0_i32 = arith.constant 0 : i32
    %c0_i32_0 = arith.constant 0 : i32
    %c0_i32_1 = arith.constant 0 : i32
    return %arg0, %c0_i32, %c0_i32_0 : i32, i32, i32
  }
}

</mosaic_0001>

<llo_original>
// kernel: tpu_custom_call.1
$region0: #{tpu_custom_call.1}
  #allocation0 [shape = 'u32[]', space=smem, size = 0x4, offset = 0x4, fixed_abs, tag = 'smem constant byte address 0x4 - core index']
  #allocation1 [shape = 'u32[72,128]{1,0:T(1,128)}', space=vmem, size = 0x9000, scoped, tag = 'internal scratch']
  #allocation2 [shape = 'bf16[18,16,384]{2,1,0:T(8,128)(2,1)}', space=vmem, size = 0x36000, scoped, tag = 'scratch operand']
  #allocation3 [shape = 'f32[8,16,128]{2,1,0:T(8,128)}', space=vmem, size = 0x10000, scoped, tag = 'scratch operand']
  %s0 = inlined_call_operand.hbm [shape: bf16[2,16,16,128], index: 0, kind: input, shape index: {}]
  %s1 = inlined_call_operand.hbm [shape: bf16[128,128], index: 1, kind: input, shape index: {}]
  %s2 = inlined_call_operand.hbm [shape: bf16[1152,128], index: 2, kind: input, shape index: {}]
  %s3 = inlined_call_operand.vmem [shape: f32[1,128], index: 3, kind: input, shape index: {}]
  %s4 = inlined_call_operand.vmem [shape: f32[1,128], index: 4, kind: input, shape index: {}]
  %s5 = inlined_call_operand.hbm [shape: f32[2,8,256], index: 5, kind: output, shape index: {0}]
  %s6 = inlined_call_operand.hbm [shape: f32[2,8,64], index: 6, kind: output, shape index: {1}]
  %7 = xla_tuple %s5, %s6
  %s8 = sld [smem:[#allocation0]]
  $region73: #{tpu_custom_call.1} parent=0
    _
  %s10 = ssub.s32 1, %s8
  %s11 = scalar_select 0, %s10, %s8
  $region1: #{tpu_custom_call.1} parent=0
    #allocation4 [shape = 'u8[131072]{0}', space=vmem, size = 0x20000, scoped, tag = 'input window, operand 0']
    #allocation5 [shape = 's32[2]{0}', space=sflag, size = 0x8, scoped, tag = 'scoped memory for tpu_custom_call.1']
    #allocation6 [shape = 's32[2]{0}', space=sflag, size = 0x8, scoped, tag = 'scoped memory for tpu_custom_call.1']
    #allocation7 [shape = 'u8[32768]{0}', space=vmem, size = 0x8000, scoped, tag = 'input window, operand 1, single buffered']
    #allocation8 [shape = 's32[1]{0}', space=sflag, size = 0x4, scoped, tag = 'scoped memory for tpu_custom_call.1']
    #allocation9 [shape = 'u8[294912]{0}', space=vmem, size = 0x48000, scoped, tag = 'input window, operand 2, single buffered']
    #allocation10 [shape = 'u8[16384]{0}', space=vmem, size = 0x4000, scoped, tag = 'output window, operand 0']
    #allocation11 [shape = 'u8[8192]{0}', space=vmem, size = 0x2000, scoped, tag = 'output window, operand 1']
    #allocation12 [shape = 's32[2]{0}', space=sflag, size = 0x8, scoped, tag = 'scoped memory for tpu_custom_call.1']
    %12 = vsyncpa [#allocation5], 0
    %s13 = scalar_lea.sflag [#allocation5], 1
    %14 = vsyncpa %s13, 0
    %15 = vsyncpa [#allocation8], 0
    %16 = vsyncpa [#allocation6], 0
    %s17 = scalar_lea.sflag [#allocation6], 1
    %18 = vsyncpa %s17, 0
    %19 = vsyncpa [#allocation12], 0
    %s20 = scalar_lea.sflag [#allocation12], 1
    %21 = vsyncpa %s20, 0
    loop: start=0, step=1, limit=4
    $region2: #{tpu_custom_call.1} parent=1 // loop_pre_header
      _
    $region3: #{tpu_custom_call.1} parent=1 // loop_header
      %s23 = sphi 0, %s27
      %p24 = scmp.ge.s32.totalorder %s23, 4
      %s33 = sphi 0, %s35
      %s36 = sphi 0, %s33
      %s37 = sphi 0, %s36
      %s53 = sphi 0, %s37
      %s57 = sphi 0, %s57
      %s59 = sphi 0, %s57
      %s60 = sphi 0, %s59
      %s74 = sphi 0, %s60
      %s78 = sphi 0, %s78
      %s80 = sphi 0, %s78
      %s81 = sphi 0, %s80
      %s95 = sphi 0, %s81
      %s99 = sphi 0, %s99
      %s101 = sphi 0, %s99
      %s102 = sphi 0, %s101
      %s116 = sphi 0, %s102
      %s120 = sphi 0, %s120
      %s122 = sphi 0, %s120
      %s123 = sphi 0, %s122
      %s137 = sphi 0, %s123
      %s143 = sphi 0, %s145
      %s146 = sphi 0, %s143
      %s147 = sphi 0, %s146
      %s163 = sphi 0, %s147
      %s169 = sphi 0, %s171
      %s172 = sphi 0, %s169
      %s173 = sphi 0, %s172
      %s189 = sphi 0, %s173
    $region4: #{tpu_custom_call.1} parent=1 // loop_header_branch
      %26 = sbr.rel (%p24) target = $region8
    $region5: #{tpu_custom_call.1} parent=1 // loop_body
      %s28 = ssub.s32 %s23, 1
      %s29 = ssub.s32 %s23, 2
      %s30 = sadd.s32 %s23, 1
      %s31 = ssub.s32 %s23, %s30
      %p32 = scmp.eq.s32.totalorder %s31, 0
      %s34 = sadd.s32 %s33, 1
      %s35 = scalar_select %p32, %s33, %s34
      %p38 = pneg %p32
      %p39 = scmp.eq.s32.totalorder %s23, 1
      %p40 = por %p38, %p39
      %p41 = scmp.ne.s32.totalorder %s33, %s36
      %p42 = scmp.eq.s32.totalorder %s23, 0
      %p43 = por %p41, %p42
      %p44 = scmp.ne.s32.totalorder %s33, %s36
      %p45 = scmp.eq.s32.totalorder %s28, 1
      %p46 = por %p44, %p45
      %p47 = scmp.ne.s32.totalorder %s36, %s37
      %p48 = scmp.eq.s32.totalorder %s28, 0
      %p49 = por %p47, %p48
      %p50 = scmp.ne.s32.totalorder %s36, %s37
      %p51 = scmp.eq.s32.totalorder %s29, 1
      %p52 = por %p50, %p51
      %p54 = scmp.ne.s32.totalorder %s37, %s53
      %p55 = scmp.eq.s32.totalorder %s29, 0
      %p56 = por %p54, %p55
      %s58 = sadd.s32 %s57, 1
      %p61 = scmp.eq.s32.totalorder %s23, 1
      %p62 = scmp.ne.s32.totalorder %s57, %s59
      %p63 = scmp.eq.s32.totalorder %s23, 0
      %p64 = por %p62, %p63
      %p65 = scmp.ne.s32.totalorder %s57, %s59
      %p66 = scmp.eq.s32.totalorder %s28, 1
      %p67 = por %p65, %p66
      %p68 = scmp.ne.s32.totalorder %s59, %s60
      %p69 = scmp.eq.s32.totalorder %s28, 0
      %p70 = por %p68, %p69
      %p71 = scmp.ne.s32.totalorder %s59, %s60
      %p72 = scmp.eq.s32.totalorder %s29, 1
      %p73 = por %p71, %p72
      %p75 = scmp.ne.s32.totalorder %s60, %s74
      %p76 = scmp.eq.s32.totalorder %s29, 0
      %p77 = por %p75, %p76
      %s79 = sadd.s32 %s78, 1
      %p82 = scmp.eq.s32.totalorder %s23, 1
      %p83 = scmp.ne.s32.totalorder %s78, %s80
      %p84 = scmp.eq.s32.totalorder %s23, 0
      %p85 = por %p83, %p84
      %p86 = scmp.ne.s32.totalorder %s78, %s80
      %p87 = scmp.eq.s32.totalorder %s28, 1
      %p88 = por %p86, %p87
      %p89 = scmp.ne.s32.totalorder %s80, %s81
      %p90 = scmp.eq.s32.totalorder %s28, 0
      %p91 = por %p89, %p90
      %p92 = scmp.ne.s32.totalorder %s80, %s81
      %p93 = scmp.eq.s32.totalorder %s29, 1
      %p94 = por %p92, %p93
      %p96 = scmp.ne.s32.totalorder %s81, %s95
      %p97 = scmp.eq.s32.totalorder %s29, 0
      %p98 = por %p96, %p97
      %s100 = sadd.s32 %s99, 1
      %p103 = scmp.eq.s32.totalorder %s23, 1
      %p104 = scmp.ne.s32.totalorder %s99, %s101
      %p105 = scmp.eq.s32.totalorder %s23, 0
      %p106 = por %p104, %p105
      %p107 = scmp.ne.s32.totalorder %s99, %s101
      %p108 = scmp.eq.s32.totalorder %s28, 1
      %p109 = por %p107, %p108
      %p110 = scmp.ne.s32.totalorder %s101, %s102
      %p111 = scmp.eq.s32.totalorder %s28, 0
      %p112 = por %p110, %p111
      %p113 = scmp.ne.s32.totalorder %s101, %s102
      %p114 = scmp.eq.s32.totalorder %s29, 1
      %p115 = por %p113, %p114
      %p117 = scmp.ne.s32.totalorder %s102, %s116
      %p118 = scmp.eq.s32.totalorder %s29, 0
      %p119 = por %p117, %p118
      %s121 = sadd.s32 %s120, 1
      %p124 = scmp.eq.s32.totalorder %s23, 1
      %p125 = scmp.ne.s32.totalorder %s120, %s122
      %p126 = scmp.eq.s32.totalorder %s23, 0
      %p127 = por %p125, %p126
      %p128 = scmp.ne.s32.totalorder %s120, %s122
      %p129 = scmp.eq.s32.totalorder %s28, 1
      %p130 = por %p128, %p129
      %p131 = scmp.ne.s32.totalorder %s122, %s123
      %p132 = scmp.eq.s32.totalorder %s28, 0
      %p133 = por %p131, %p132
      %p134 = scmp.ne.s32.totalorder %s122, %s123
      %p135 = scmp.eq.s32.totalorder %s29, 1
      %p136 = por %p134, %p135
      %p138 = scmp.ne.s32.totalorder %s123, %s137
      %p139 = scmp.eq.s32.totalorder %s29, 0
      %p140 = por %p138, %p139
      %s141 = ssub.s32 %s23, %s30
      %p142 = scmp.eq.s32.totalorder %s141, 0
      %s144 = sadd.s32 %s143, 1
      %s145 = scalar_select %p142, %s143, %s144
      %p148 = pneg %p142
      %p149 = scmp.eq.s32.totalorder %s23, 1
      %p150 = por %p148, %p149
      %p151 = scmp.ne.s32.totalorder %s143, %s146
      %p152 = scmp.eq.s32.totalorder %s23, 0
      %p153 = por %p151, %p152
      %p154 = scmp.ne.s32.totalorder %s143, %s146
      %p155 = scmp.eq.s32.totalorder %s28, 1
      %p156 = por %p154, %p155
      %p157 = scmp.ne.s32.totalorder %s146, %s147
      %p158 = scmp.eq.s32.totalorder %s28, 0
      %p159 = por %p157, %p158
      %p160 = scmp.ne.s32.totalorder %s146, %s147
      %p161 = scmp.eq.s32.totalorder %s29, 1
      %p162 = por %p160, %p161
      %p164 = scmp.ne.s32.totalorder %s147, %s163
      %p165 = scmp.eq.s32.totalorder %s29, 0
      %p166 = por %p164, %p165
      %s167 = ssub.s32 %s23, %s30
      %p168 = scmp.eq.s32.totalorder %s167, 0
      %s170 = sadd.s32 %s169, 1
      %s171 = scalar_select %p168, %s169, %s170
      %p174 = pneg %p168
      %p175 = scmp.eq.s32.totalorder %s23, 1
      %p176 = por %p174, %p175
      %p177 = scmp.ne.s32.totalorder %s169, %s172
      %p178 = scmp.eq.s32.totalorder %s23, 0
      %p179 = por %p177, %p178
      %p180 = scmp.ne.s32.totalorder %s169, %s172
      %p181 = scmp.eq.s32.totalorder %s28, 1
      %p182 = por %p180, %p181
      %p183 = scmp.ne.s32.totalorder %s172, %s173
      %p184 = scmp.eq.s32.totalorder %s28, 0
      %p185 = por %p183, %p184
      %p186 = scmp.ne.s32.totalorder %s172, %s173
      %p187 = scmp.eq.s32.totalorder %s29, 1
      %p188 = por %p186, %p187
      %p190 = scmp.ne.s32.totalorder %s173, %s189
      %p191 = scmp.eq.s32.totalorder %s29, 0
      %p192 = por %p190, %p191
      %p193 = scmp.le.s32.totalorder 1, %s23
      %p194 = scmp.lt.s32.totalorder %s23, 3
      %p195 = pnand %p193, %p194
      %p196 = pneg %p195
      // Predicated region
      $region9: #{tpu_custom_call.1} parent=5 // pred_check
        _
      $region10: #{tpu_custom_call.1} parent=5 // pred_check_branch
        %198 = sbr.rel (%p195) target = $region12
      $region11: #{tpu_custom_call.1} parent=5 // pred_region
        %s199 = ssub.s32 %s23, 1
        // Predicated region
        $region13: #{tpu_custom_call.1} parent=11 // pred_check
          %p200 = pneg %p70
        $region14: #{tpu_custom_call.1} parent=11 // pred_check_branch
          %202 = sbr.rel (%p200) target = $region16
        $region15: #{tpu_custom_call.1} parent=11 // pred_region
          %204 = vsyncadd [#allocation8], 0
          %s205 = sshll.u32 %s1, 4
          %s206 = int_to_ptr.hbm [resolvable:$true] %s205
          %s207 = sshll.u32 [#allocation7], 4
          %s208 = int_to_ptr.vmem [resolvable:$true] %s207
          %213 = dma.hbm_to_vmem [thread:$0]  %s206, 1024, %s208, [#allocation8], 64, 64, 4
        $region16: #{tpu_custom_call.1} parent=11 // pred_fallthru
          _
        // Predicated region
        $region17: #{tpu_custom_call.1} parent=11 // pred_check
          %p214 = pneg %p91
        $region18: #{tpu_custom_call.1} parent=11 // pred_check_branch
          %216 = sbr.rel (%p214) target = $region20
        $region19: #{tpu_custom_call.1} parent=11 // pred_region
          %218 = vsyncadd [#allocation8], 0
          %s219 = sshll.u32 %s2, 4
          %s220 = int_to_ptr.hbm [resolvable:$true] %s219
          %s221 = sshll.u32 [#allocation9], 4
          %s222 = int_to_ptr.vmem [resolvable:$true] %s221
          %227 = dma.hbm_to_vmem [thread:$0]  %s220, 9216, %s222, [#allocation8], 64, 64, 4
        $region20: #{tpu_custom_call.1} parent=11 // pred_fallthru
          _
        // Predicated region
        $region21: #{tpu_custom_call.1} parent=11 // pred_check
          %p228 = pneg %p112
        $region22: #{tpu_custom_call.1} parent=11 // pred_check_branch
          %230 = sbr.rel (%p228) target = $region24
        $region23: #{tpu_custom_call.1} parent=11 // pred_region
          _
        $region24: #{tpu_custom_call.1} parent=11 // pred_fallthru
          _
        // Predicated region
        $region25: #{tpu_custom_call.1} parent=11 // pred_check
          %p231 = pneg %p133
        $region26: #{tpu_custom_call.1} parent=11 // pred_check_branch
          %233 = sbr.rel (%p231) target = $region28
        $region27: #{tpu_custom_call.1} parent=11 // pred_region
          _
        $region28: #{tpu_custom_call.1} parent=11 // pred_fallthru
          _
      $region12: #{tpu_custom_call.1} parent=5 // pred_fallthru
        _
      %p234 = scmp.lt.s32.totalorder %s23, 2
      // Predicated region
      $region29: #{tpu_custom_call.1} parent=5 // pred_check
        %p235 = pneg %p234
      $region30: #{tpu_custom_call.1} parent=5 // pred_check_branch
        %237 = sbr.rel (%p235) target = $region32
      $region31: #{tpu_custom_call.1} parent=5 // pred_region
        // Predicated region
        $region33: #{tpu_custom_call.1} parent=31 // pred_check
          %p238 = pneg %p43
        $region34: #{tpu_custom_call.1} parent=31 // pred_check_branch
          %240 = sbr.rel (%p238) target = $region36
        $region35: #{tpu_custom_call.1} parent=31 // pred_region
          %s241 = sand.u32 %s33, 1
          %s242 = scalar_lea.sflag [#allocation5], %s241
          %s243 = sand.u32 %s33, 1
          %s244 = smul.addr %s243, 128
          %s245 = scalar_lea.vmem [#allocation4], %s244
          %247 = vsyncadd %s242, 0
          %s248 = smul.addr %s23, 32
          %s249 = smul.addr %s248, 4
          %s250 = scalar_lea.hbm %s0, %s249
          %s251 = sshll.u32 %s250, 4
          %s252 = int_to_ptr.hbm [resolvable:$true] %s251
          %s253 = sshll.u32 %s245, 4
          %s254 = int_to_ptr.vmem [resolvable:$true] %s253
          %259 = dma.hbm_to_vmem [thread:$0]  %s252, 2048, %s254, %s242, 64, 64, 4
        $region36: #{tpu_custom_call.1} parent=31 // pred_fallthru
          _
      $region32: #{tpu_custom_call.1} parent=5 // pred_fallthru
        _
      %p260 = scmp.le.s32.totalorder 1, %s23
      %p261 = scmp.lt.s32.totalorder %s23, 3
      %p262 = pnand %p260, %p261
      %p263 = pneg %p262
      // Predicated region
      $region37: #{tpu_custom_call.1} parent=5 // pred_check
        _
      $region38: #{tpu_custom_call.1} parent=5 // pred_check_branch
        %265 = sbr.rel (%p262) target = $region40
      $region39: #{tpu_custom_call.1} parent=5 // pred_region
        %s266 = ssub.s32 %s23, 1
        %s267 = sand.u32 %s36, 1
        %s268 = scalar_lea.sflag [#allocation5], %s267
        %s269 = sand.u32 %s36, 1
        %s270 = smul.addr %s269, 128
        %s271 = scalar_lea.vmem [#allocation4], %s270
        // Predicated region
        $region41: #{tpu_custom_call.1} parent=39 // pred_check
          %p272 = pneg %p49
        $region42: #{tpu_custom_call.1} parent=39 // pred_check_branch
          %274 = sbr.rel (%p272) target = $region44
        $region43: #{tpu_custom_call.1} parent=39 // pred_region
          %276 = dma.done %s268, 2048
        $region44: #{tpu_custom_call.1} parent=39 // pred_fallthru
          _
        // Predicated region
        $region45: #{tpu_custom_call.1} parent=39 // pred_check
          %p277 = pneg %p70
        $region46: #{tpu_custom_call.1} parent=39 // pred_check_branch
          %279 = sbr.rel (%p277) target = $region48
        $region47: #{tpu_custom_call.1} parent=39 // pred_region
          %281 = dma.done [#allocation8], 1024
        $region48: #{tpu_custom_call.1} parent=39 // pred_fallthru
          _
        // Predicated region
        $region49: #{tpu_custom_call.1} parent=39 // pred_check
          %p282 = pneg %p91
        $region50: #{tpu_custom_call.1} parent=39 // pred_check_branch
          %284 = sbr.rel (%p282) target = $region52
        $region51: #{tpu_custom_call.1} parent=39 // pred_region
          %286 = dma.done [#allocation8], 9216
        $region52: #{tpu_custom_call.1} parent=39 // pred_fallthru
          _
        %s287 = sand.u32 %s36, 1
        %s288 = scalar_lea.sflag [#allocation5], %s287
        %s289 = sand.u32 %s36, 1
        %s290 = smul.addr %s289, 128
        %s291 = scalar_lea.vmem [#allocation4], %s290
        %p292 = pneg %p49
        %p293 = pneg %p46
        %p294 = pneg %p70
        %p295 = pneg %p67
        %p296 = pneg %p91
        %p297 = pneg %p88
        %p298 = pneg %p112
        %p299 = pneg %p109
        %p300 = pneg %p133
        %p301 = pneg %p130
        %p302 = pneg %p159
        %p303 = pneg %p156
        %s304 = sand.u32 %s146, 1
        %s305 = scalar_lea.sflag [#allocation6], %s304
        %s306 = sand.u32 %s146, 1
        %s307 = smul.addr %s306, 16
        %s308 = scalar_lea.vmem [#allocation10], %s307
        %p309 = pneg %p185
        %p310 = pneg %p182
        %s311 = sand.u32 %s172, 1
        %s312 = scalar_lea.sflag [#allocation12], %s311
        %s313 = sand.u32 %s172, 1
        %s314 = smul.addr %s313, 8
        %s315 = scalar_lea.vmem [#allocation11], %s314
        %v317 = vld [vmem:[%s271] sm:$0xf]
        %v318 = vld [vmem:[%s271 + $0x4] sm:$0xf]
        %v319 = vld [vmem:[%s271 + $0x8] sm:$0xf]
        %v320 = vld [vmem:[%s271 + $0xc] sm:$0xf]
        %v321 = vld [vmem:[%s271 + $0x10] sm:$0xf]
        %v322 = vld [vmem:[%s271 + $0x14] sm:$0xf]
        %v323 = vld [vmem:[%s271 + $0x18] sm:$0xf]
        %v324 = vld [vmem:[%s271 + $0x1c] sm:$0xf]
        %v325 = vld [vmem:[%s271 + $0x20] sm:$0xf]
        %v326 = vld [vmem:[%s271 + $0x24] sm:$0xf]
        %v327 = vld [vmem:[%s271 + $0x28] sm:$0xf]
        %v328 = vld [vmem:[%s271 + $0x2c] sm:$0xf]
        %v329 = vld [vmem:[%s271 + $0x30] sm:$0xf]
        %v330 = vld [vmem:[%s271 + $0x34] sm:$0xf]
        %v331 = vld [vmem:[%s271 + $0x38] sm:$0xf]
        %v332 = vld [vmem:[%s271 + $0x3c] sm:$0xf]
        %v333 = vld [vmem:[%s271 + $0x40] sm:$0xf]
        %v334 = vld [vmem:[%s271 + $0x44] sm:$0xf]
        %v335 = vld [vmem:[%s271 + $0x48] sm:$0xf]
        %v336 = vld [vmem:[%s271 + $0x4c] sm:$0xf]
        %v337 = vld [vmem:[%s271 + $0x50] sm:$0xf]
        %v338 = vld [vmem:[%s271 + $0x54] sm:$0xf]
        %v339 = vld [vmem:[%s271 + $0x58] sm:$0xf]
        %v340 = vld [vmem:[%s271 + $0x5c] sm:$0xf]
        %v341 = vld [vmem:[%s271 + $0x60] sm:$0xf]
        %v342 = vld [vmem:[%s271 + $0x64] sm:$0xf]
        %v343 = vld [vmem:[%s271 + $0x68] sm:$0xf]
        %v344 = vld [vmem:[%s271 + $0x6c] sm:$0xf]
        %v345 = vld [vmem:[%s271 + $0x70] sm:$0xf]
        %v346 = vld [vmem:[%s271 + $0x74] sm:$0xf]
        %v347 = vld [vmem:[%s271 + $0x78] sm:$0xf]
        %v348 = vld [vmem:[%s271 + $0x7c] sm:$0xf]
        %v349 = vld [vmem:[#allocation7] sm:$0xf]
        %v350 = vld [vmem:[#allocation7 + $0x4] sm:$0xf]
        %v351 = vld [vmem:[#allocation7 + $0x8] sm:$0xf]
        %v352 = vld [vmem:[#allocation7 + $0xc] sm:$0xf]
        %v353 = vld [vmem:[#allocation7 + $0x10] sm:$0xf]
        %v354 = vld [vmem:[#allocation7 + $0x14] sm:$0xf]
        %v355 = vld [vmem:[#allocation7 + $0x18] sm:$0xf]
        %v356 = vld [vmem:[#allocation7 + $0x1c] sm:$0xf]
        %v357 = vld [vmem:[#allocation7 + $0x20] sm:$0xf]
        %v358 = vld [vmem:[#allocation7 + $0x24] sm:$0xf]
        %v359 = vld [vmem:[#allocation7 + $0x28] sm:$0xf]
        %v360 = vld [vmem:[#allocation7 + $0x2c] sm:$0xf]
        %v361 = vld [vmem:[#allocation7 + $0x30] sm:$0xf]
        %v362 = vld [vmem:[#allocation7 + $0x34] sm:$0xf]
        %v363 = vld [vmem:[#allocation7 + $0x38] sm:$0xf]
        %v364 = vld [vmem:[#allocation7 + $0x3c] sm:$0xf]
        %v365 = vld [vmem:[%s3] sm:$0x1]
        %v367 = vperm.slane %v365, 0
        %v401 = vunpack.c.l.b16 %v317
        %v402 = vunpack.c.l.b16 %v318
        %v403 = vunpack.c.l.b16 %v319
        %v404 = vunpack.c.l.b16 %v320
        %v405 = vunpack.c.l.b16 %v321
        %v406 = vunpack.c.l.b16 %v322
        %v407 = vunpack.c.l.b16 %v323
        %v408 = vunpack.c.l.b16 %v324
        %v409 = vunpack.c.l.b16 %v325
        %v410 = vunpack.c.l.b16 %v326
        %v411 = vunpack.c.l.b16 %v327
        %v412 = vunpack.c.l.b16 %v328
        %v413 = vunpack.c.l.b16 %v329
        %v414 = vunpack.c.l.b16 %v330
        %v415 = vunpack.c.l.b16 %v331
        %v416 = vunpack.c.l.b16 %v332
        %v417 = vunpack.c.l.b16 %v333
        %v418 = vunpack.c.l.b16 %v334
        %v419 = vunpack.c.l.b16 %v335
        %v420 = vunpack.c.l.b16 %v336
        %v421 = vunpack.c.l.b16 %v337
        %v422 = vunpack.c.l.b16 %v338
        %v423 = vunpack.c.l.b16 %v339
        %v424 = vunpack.c.l.b16 %v340
        %v425 = vunpack.c.l.b16 %v341
        %v426 = vunpack.c.l.b16 %v342
        %v427 = vunpack.c.l.b16 %v343
        %v428 = vunpack.c.l.b16 %v344
        %v429 = vunpack.c.l.b16 %v345
        %v430 = vunpack.c.l.b16 %v346
        %v431 = vunpack.c.l.b16 %v347
        %v432 = vunpack.c.l.b16 %v348
        %v433 = vpack.c.b16 %v402, %v401
        %v434 = vpack.c.b16 %v404, %v403
        %v435 = vpack.c.b16 %v406, %v405
        %v436 = vpack.c.b16 %v408, %v407
        %v437 = vpack.c.b16 %v410, %v409
        %v438 = vpack.c.b16 %v412, %v411
        %v439 = vpack.c.b16 %v414, %v413
        %v440 = vpack.c.b16 %v416, %v415
        %v441 = vpack.c.b16 %v418, %v417
        %v442 = vpack.c.b16 %v420, %v419
        %v443 = vpack.c.b16 %v422, %v421
        %v444 = vpack.c.b16 %v424, %v423
        %v445 = vpack.c.b16 %v426, %v425
        %v446 = vpack.c.b16 %v428, %v427
        %v447 = vpack.c.b16 %v430, %v429
        %v448 = vpack.c.b16 %v432, %v431
        %v481 = vunpack.c.l.b16 %v349
        %v482 = vunpack.c.l.b16 %v350
        %v483 = vunpack.c.l.b16 %v351
        %v484 = vunpack.c.l.b16 %v352
        %v485 = vunpack.c.l.b16 %v353
        %v486 = vunpack.c.l.b16 %v354
        %v487 = vunpack.c.l.b16 %v355
        %v488 = vunpack.c.l.b16 %v356
        %v489 = vunpack.c.l.b16 %v357
        %v490 = vunpack.c.l.b16 %v358
        %v491 = vunpack.c.l.b16 %v359
        %v492 = vunpack.c.l.b16 %v360
        %v493 = vunpack.c.l.b16 %v361
        %v494 = vunpack.c.l.b16 %v362
        %v495 = vunpack.c.l.b16 %v363
        %v496 = vunpack.c.l.b16 %v364
        %v497 = vpack.c.b16 %v482, %v481
        %v498 = vpack.c.b16 %v484, %v483
        %v499 = vpack.c.b16 %v486, %v485
        %v500 = vpack.c.b16 %v488, %v487
        %v501 = vpack.c.b16 %v490, %v489
        %v502 = vpack.c.b16 %v492, %v491
        %v503 = vpack.c.b16 %v494, %v493
        %v504 = vpack.c.b16 %v496, %v495
        %513 = vmatpush.bf16.msra.mxu0 %v504
        %514 = vmatpush.bf16.msra.mxu0 %v503
        %515 = vmatpush.bf16.msra.mxu0 %v502
        %516 = vmatpush.bf16.msra.mxu0 %v501
        %517 = vmatpush.bf16.msra.mxu0 %v500
        %518 = vmatpush.bf16.msra.mxu0 %v499
        %519 = vmatpush.bf16.msra.mxu0 %v498
        %520 = vmatpush.bf16.msra.mxu0 %v497
        %521 = vmatmul.bf16.gmra.mxu0 %v433
        %v522 = vpop.f32.mrf.mxu0
        %v523 = vadd.f32 %v367, %v522
        %v524 = vpop.f32.mrf.mxu0
        %v525 = vadd.f32 %v367, %v524
        %526 = vmatmul.bf16.gmra.mxu0 %v434
        %v527 = vpop.f32.mrf.mxu0
        %v528 = vadd.f32 %v367, %v527
        %v529 = vpop.f32.mrf.mxu0
        %v530 = vadd.f32 %v367, %v529
        %531 = vmatmul.bf16.gmra.mxu0 %v435
        %v532 = vpop.f32.mrf.mxu0
        %v533 = vadd.f32 %v367, %v532
        %v534 = vpop.f32.mrf.mxu0
        %v535 = vadd.f32 %v367, %v534
        %536 = vmatmul.bf16.gmra.mxu0 %v436
        %v537 = vpop.f32.mrf.mxu0
        %v538 = vadd.f32 %v367, %v537
        %v539 = vpop.f32.mrf.mxu0
        %v540 = vadd.f32 %v367, %v539
        %541 = vmatmul.bf16.gmra.mxu0 %v437
        %v542 = vpop.f32.mrf.mxu0
        %v543 = vadd.f32 %v367, %v542
        %v544 = vpop.f32.mrf.mxu0
        %v545 = vadd.f32 %v367, %v544
        %546 = vmatmul.bf16.gmra.mxu0 %v438
        %v547 = vpop.f32.mrf.mxu0
        %v548 = vadd.f32 %v367, %v547
        %v549 = vpop.f32.mrf.mxu0
        %v550 = vadd.f32 %v367, %v549
        %551 = vmatmul.bf16.gmra.mxu0 %v439
        %v552 = vpop.f32.mrf.mxu0
        %v553 = vadd.f32 %v367, %v552
        %v554 = vpop.f32.mrf.mxu0
        %v555 = vadd.f32 %v367, %v554
        %556 = vmatmul.bf16.gmra.mxu0 %v440
        %v557 = vpop.f32.mrf.mxu0
        %v558 = vadd.f32 %v367, %v557
        %v559 = vpop.f32.mrf.mxu0
        %v560 = vadd.f32 %v367, %v559
        %561 = vmatmul.bf16.gmra.mxu0 %v441
        %v562 = vpop.f32.mrf.mxu0
        %v563 = vadd.f32 %v367, %v562
        %v564 = vpop.f32.mrf.mxu0
        %v565 = vadd.f32 %v367, %v564
        %566 = vmatmul.bf16.gmra.mxu0 %v442
        %v567 = vpop.f32.mrf.mxu0
        %v568 = vadd.f32 %v367, %v567
        %v569 = vpop.f32.mrf.mxu0
        %v570 = vadd.f32 %v367, %v569
        %571 = vmatmul.bf16.gmra.mxu0 %v443
        %v572 = vpop.f32.mrf.mxu0
        %v573 = vadd.f32 %v367, %v572
        %v574 = vpop.f32.mrf.mxu0
        %v575 = vadd.f32 %v367, %v574
        %576 = vmatmul.bf16.gmra.mxu0 %v444
        %v577 = vpop.f32.mrf.mxu0
        %v578 = vadd.f32 %v367, %v577
        %v579 = vpop.f32.mrf.mxu0
        %v580 = vadd.f32 %v367, %v579
        %581 = vmatmul.bf16.gmra.mxu0 %v445
        %v582 = vpop.f32.mrf.mxu0
        %v583 = vadd.f32 %v367, %v582
        %v584 = vpop.f32.mrf.mxu0
        %v585 = vadd.f32 %v367, %v584
        %586 = vmatmul.bf16.gmra.mxu0 %v446
        %v587 = vpop.f32.mrf.mxu0
        %v588 = vadd.f32 %v367, %v587
        %v589 = vpop.f32.mrf.mxu0
        %v590 = vadd.f32 %v367, %v589
        %591 = vmatmul.bf16.gmra.mxu0 %v447
        %v592 = vpop.f32.mrf.mxu0
        %v593 = vadd.f32 %v367, %v592
        %v594 = vpop.f32.mrf.mxu0
        %v595 = vadd.f32 %v367, %v594
        %596 = vmatmul.bf16.gmra.mxu0 %v448
        %v597 = vpop.f32.mrf.mxu0
        %v598 = vadd.f32 %v367, %v597
        %v599 = vpop.f32.mrf.mxu0
        %v600 = vadd.f32 %v367, %v599
        %601 = vdwg.mxu0
        %v602 = vmax.f32 %v523, 0.0
        %v603 = vmax.f32 %v525, 0.0
        %v604 = vmax.f32 %v528, 0.0
        %v605 = vmax.f32 %v530, 0.0
        %v606 = vmax.f32 %v533, 0.0
        %v607 = vmax.f32 %v535, 0.0
        %v608 = vmax.f32 %v538, 0.0
        %v609 = vmax.f32 %v540, 0.0
        %v610 = vmax.f32 %v543, 0.0
        %v611 = vmax.f32 %v545, 0.0
        %v612 = vmax.f32 %v548, 0.0
        %v613 = vmax.f32 %v550, 0.0
        %v614 = vmax.f32 %v553, 0.0
        %v615 = vmax.f32 %v555, 0.0
        %v616 = vmax.f32 %v558, 0.0
        %v617 = vmax.f32 %v560, 0.0
        %v618 = vmax.f32 %v563, 0.0
        %v619 = vmax.f32 %v565, 0.0
        %v620 = vmax.f32 %v568, 0.0
        %v621 = vmax.f32 %v570, 0.0
        %v622 = vmax.f32 %v573, 0.0
        %v623 = vmax.f32 %v575, 0.0
        %v624 = vmax.f32 %v578, 0.0
        %v625 = vmax.f32 %v580, 0.0
        %v626 = vmax.f32 %v583, 0.0
        %v627 = vmax.f32 %v585, 0.0
        %v628 = vmax.f32 %v588, 0.0
        %v629 = vmax.f32 %v590, 0.0
        %v630 = vmax.f32 %v593, 0.0
        %v631 = vmax.f32 %v595, 0.0
        %v632 = vmax.f32 %v598, 0.0
        %v633 = vmax.f32 %v600, 0.0
        %v634 = vpack.c.bf16 %v602, %v602
        %v635 = vpack.c.bf16 %v603, %v603
        %v636 = vpack.c.bf16 %v604, %v604
        %v637 = vpack.c.bf16 %v605, %v605
        %v638 = vpack.c.bf16 %v606, %v606
        %v639 = vpack.c.bf16 %v607, %v607
        %v640 = vpack.c.bf16 %v608, %v608
        %v641 = vpack.c.bf16 %v609, %v609
        %v642 = vpack.c.bf16 %v610, %v610
        %v643 = vpack.c.bf16 %v611, %v611
        %v644 = vpack.c.bf16 %v612, %v612
        %v645 = vpack.c.bf16 %v613, %v613
        %v646 = vpack.c.bf16 %v614, %v614
        %v647 = vpack.c.bf16 %v615, %v615
        %v648 = vpack.c.bf16 %v616, %v616
        %v649 = vpack.c.bf16 %v617, %v617
        %v650 = vpack.c.bf16 %v618, %v618
        %v651 = vpack.c.bf16 %v619, %v619
        %v652 = vpack.c.bf16 %v620, %v620
        %v653 = vpack.c.bf16 %v621, %v621
        %v654 = vpack.c.bf16 %v622, %v622
        %v655 = vpack.c.bf16 %v623, %v623
        %v656 = vpack.c.bf16 %v624, %v624
        %v657 = vpack.c.bf16 %v625, %v625
        %v658 = vpack.c.bf16 %v626, %v626
        %v659 = vpack.c.bf16 %v627, %v627
        %v660 = vpack.c.bf16 %v628, %v628
        %v661 = vpack.c.bf16 %v629, %v629
        %v662 = vpack.c.bf16 %v630, %v630
        %v663 = vpack.c.bf16 %v631, %v631
        %v664 = vpack.c.bf16 %v632, %v632
        %v665 = vpack.c.bf16 %v633, %v633
        %666 = vst [vmem:[#allocation2] sm:$0xff] 0
        %667 = vst [vmem:[#allocation2 + $0x8] sm:$0xf] 0
        %668 = vst [vmem:[#allocation2 + $0xc] sm:$0xff] 0
        %669 = vst [vmem:[#allocation2 + $0x14] sm:$0xf] 0
        %s670 = scalar_lea.vmem [#allocation2], 408
        %671 = vst [vmem:[%s670] sm:$0xff] 0
        %672 = vst [vmem:[%s670 + $0x8] sm:$0xf] 0
        %673 = vst [vmem:[%s670 + $0xc] sm:$0xff] 0
        %674 = vst [vmem:[%s670 + $0x14] sm:$0xf] 0
        %s675 = scalar_lea.vmem [#allocation2], 24
        %vm676 = vcmask 1040384
        %vm677 = vsmask.f32 256
        %vm678 = vmand %vm676, %vm677
        %v679 = vld [vmem:[%s675] sm:$0x1]
        %v680 = vsel %vm678, 0, %v679
        %681 = vst [vmem:[%s675] sm:$0x1] %v680
        %v682 = vld [vmem:[%s675 + $0x18] sm:$0x1]
        %v683 = vsel %vm678, 0, %v682
        %684 = vst [vmem:[%s675 + $0x18] sm:$0x1] %v683
        %v685 = vld [vmem:[%s675 + $0x30] sm:$0x1]
        %v686 = vsel %vm678, 0, %v685
        %687 = vst [vmem:[%s675 + $0x30] sm:$0x1] %v686
        %v688 = vld [vmem:[%s675 + $0x48] sm:$0x1]
        %v689 = vsel %vm678, 0, %v688
        %690 = vst [vmem:[%s675 + $0x48] sm:$0x1] %v689
        %v691 = vld [vmem:[%s675 + $0x60] sm:$0x1]
        %v692 = vsel %vm678, 0, %v691
        %693 = vst [vmem:[%s675 + $0x60] sm:$0x1] %v692
        %v694 = vld [vmem:[%s675 + $0x78] sm:$0x1]
        %v695 = vsel %vm678, 0, %v694
        %696 = vst [vmem:[%s675 + $0x78] sm:$0x1] %v695
        %v697 = vld [vmem:[%s675 + $0x90] sm:$0x1]
        %v698 = vsel %vm678, 0, %v697
        %699 = vst [vmem:[%s675 + $0x90] sm:$0x1] %v698
        %v700 = vld [vmem:[%s675 + $0xa8] sm:$0x1]
        %v701 = vsel %vm678, 0, %v700
        %702 = vst [vmem:[%s675 + $0xa8] sm:$0x1] %v701
        %v703 = vld [vmem:[%s675 + $0xc0] sm:$0x1]
        %v704 = vsel %vm678, 0, %v703
        %705 = vst [vmem:[%s675 + $0xc0] sm:$0x1] %v704
        %v706 = vld [vmem:[%s675 + $0xd8] sm:$0x1]
        %v707 = vsel %vm678, 0, %v706
        %708 = vst [vmem:[%s675 + $0xd8] sm:$0x1] %v707
        %v709 = vld [vmem:[%s675 + $0xf0] sm:$0x1]
        %v710 = vsel %vm678, 0, %v709
        %711 = vst [vmem:[%s675 + $0xf0] sm:$0x1] %v710
        %v712 = vld [vmem:[%s675 + $0x108] sm:$0x1]
        %v713 = vsel %vm678, 0, %v712
        %714 = vst [vmem:[%s675 + $0x108] sm:$0x1] %v713
        %v715 = vld [vmem:[%s675 + $0x120] sm:$0x1]
        %v716 = vsel %vm678, 0, %v715
        %717 = vst [vmem:[%s675 + $0x120] sm:$0x1] %v716
        %v718 = vld [vmem:[%s675 + $0x138] sm:$0x1]
        %v719 = vsel %vm678, 0, %v718
        %720 = vst [vmem:[%s675 + $0x138] sm:$0x1] %v719
        %v721 = vld [vmem:[%s675 + $0x150] sm:$0x1]
        %v722 = vsel %vm678, 0, %v721
        %723 = vst [vmem:[%s675 + $0x150] sm:$0x1] %v722
        %v724 = vld [vmem:[%s675 + $0x168] sm:$0x1]
        %v725 = vsel %vm678, 0, %v724
        %726 = vst [vmem:[%s675 + $0x168] sm:$0x1] %v725
        %vm727 = vcmask 1043459
        %vm728 = vsmask.f32 7950
        %vm729 = vmand %vm727, %vm728
        %v730 = vld [vmem:[%s675 + $0x14] sm:$0x8]
        %v731 = vsel %vm729, 0, %v730
        %732 = vst [vmem:[%s675 + $0x14] sm:$0x8] %v731
        %v733 = vld [vmem:[%s675 + $0x2c] sm:$0x8]
        %v734 = vsel %vm729, 0, %v733
        %735 = vst [vmem:[%s675 + $0x2c] sm:$0x8] %v734
        %v736 = vld [vmem:[%s675 + $0x44] sm:$0x8]
        %v737 = vsel %vm729, 0, %v736
        %738 = vst [vmem:[%s675 + $0x44] sm:$0x8] %v737
        %v739 = vld [vmem:[%s675 + $0x5c] sm:$0x8]
        %v740 = vsel %vm729, 0, %v739
        %741 = vst [vmem:[%s675 + $0x5c] sm:$0x8] %v740
        %v742 = vld [vmem:[%s675 + $0x74] sm:$0x8]
        %v743 = vsel %vm729, 0, %v742
        %744 = vst [vmem:[%s675 + $0x74] sm:$0x8] %v743
        %v745 = vld [vmem:[%s675 + $0x8c] sm:$0x8]
        %v746 = vsel %vm729, 0, %v745
        %747 = vst [vmem:[%s675 + $0x8c] sm:$0x8] %v746
        %v748 = vld [vmem:[%s675 + $0xa4] sm:$0x8]
        %v749 = vsel %vm729, 0, %v748
        %750 = vst [vmem:[%s675 + $0xa4] sm:$0x8] %v749
        %v751 = vld [vmem:[%s675 + $0xbc] sm:$0x8]
        %v752 = vsel %vm729, 0, %v751
        %753 = vst [vmem:[%s675 + $0xbc] sm:$0x8] %v752
        %v754 = vld [vmem:[%s675 + $0xd4] sm:$0x8]
        %v755 = vsel %vm729, 0, %v754
        %756 = vst [vmem:[%s675 + $0xd4] sm:$0x8] %v755
        %v757 = vld [vmem:[%s675 + $0xec] sm:$0x8]
        %v758 = vsel %vm729, 0, %v757
        %759 = vst [vmem:[%s675 + $0xec] sm:$0x8] %v758
        %v760 = vld [vmem:[%s675 + $0x104] sm:$0x8]
        %v761 = vsel %vm729, 0, %v760
        %762 = vst [vmem:[%s675 + $0x104] sm:$0x8] %v761
        %v763 = vld [vmem:[%s675 + $0x11c] sm:$0x8]
        %v764 = vsel %vm729, 0, %v763
        %765 = vst [vmem:[%s675 + $0x11c] sm:$0x8] %v764
        %v766 = vld [vmem:[%s675 + $0x134] sm:$0x8]
        %v767 = vsel %vm729, 0, %v766
        %768 = vst [vmem:[%s675 + $0x134] sm:$0x8] %v767
        %v769 = vld [vmem:[%s675 + $0x14c] sm:$0x8]
        %v770 = vsel %vm729, 0, %v769
        %771 = vst [vmem:[%s675 + $0x14c] sm:$0x8] %v770
        %v772 = vld [vmem:[%s675 + $0x164] sm:$0x8]
        %v773 = vsel %vm729, 0, %v772
        %774 = vst [vmem:[%s675 + $0x164] sm:$0x8] %v773
        %v775 = vld [vmem:[%s675 + $0x17c] sm:$0x8]
        %v776 = vsel %vm729, 0, %v775
        %777 = vst [vmem:[%s675 + $0x17c] sm:$0x8] %v776
        %vm778 = vsmask.f32 4368
        %vm779 = vmor %vm677, %vm778
        %v781 = vshrl.u32 %v634, 16
        %v783 = vrot.slane %v781, 7
        %v784 = vshll.u32 %v634, 16
        %v786 = vor.u32 %v783, %v784
        %v787 = vrot.slane %v783, 4
        %v789 = vshrl.u32 %v635, 16
        %v791 = vrot.slane %v789, 7
        %v792 = vshll.u32 %v635, 16
        %v794 = vor.u32 %v791, %v792
        %v795 = vsel %vm779, %v787, %v794
        %v797 = vshrl.u32 %v636, 16
        %v799 = vrot.slane %v797, 7
        %v800 = vshll.u32 %v636, 16
        %v802 = vor.u32 %v799, %v800
        %v803 = vrot.slane %v799, 4
        %v805 = vshrl.u32 %v637, 16
        %v807 = vrot.slane %v805, 7
        %v808 = vshll.u32 %v637, 16
        %v810 = vor.u32 %v807, %v808
        %v811 = vsel %vm779, %v803, %v810
        %v813 = vshrl.u32 %v638, 16
        %v815 = vrot.slane %v813, 7
        %v816 = vshll.u32 %v638, 16
        %v818 = vor.u32 %v815, %v816
        %v819 = vrot.slane %v815, 4
        %v821 = vshrl.u32 %v639, 16
        %v823 = vrot.slane %v821, 7
        %v824 = vshll.u32 %v639, 16
        %v826 = vor.u32 %v823, %v824
        %v827 = vsel %vm779, %v819, %v826
        %v829 = vshrl.u32 %v640, 16
        %v831 = vrot.slane %v829, 7
        %v832 = vshll.u32 %v640, 16
        %v834 = vor.u32 %v831, %v832
        %v835 = vrot.slane %v831, 4
        %v837 = vshrl.u32 %v641, 16
        %v839 = vrot.slane %v837, 7
        %v840 = vshll.u32 %v641, 16
        %v842 = vor.u32 %v839, %v840
        %v843 = vsel %vm779, %v835, %v842
        %v845 = vshrl.u32 %v642, 16
        %v847 = vrot.slane %v845, 7
        %v848 = vshll.u32 %v642, 16
        %v850 = vor.u32 %v847, %v848
        %v851 = vrot.slane %v847, 4
        %v853 = vshrl.u32 %v643, 16
        %v855 = vrot.slane %v853, 7
        %v856 = vshll.u32 %v643, 16
        %v858 = vor.u32 %v855, %v856
        %v859 = vsel %vm779, %v851, %v858
        %v861 = vshrl.u32 %v644, 16
        %v863 = vrot.slane %v861, 7
        %v864 = vshll.u32 %v644, 16
        %v866 = vor.u32 %v863, %v864
        %v867 = vrot.slane %v863, 4
        %v869 = vshrl.u32 %v645, 16
        %v871 = vrot.slane %v869, 7
        %v872 = vshll.u32 %v645, 16
        %v874 = vor.u32 %v871, %v872
        %v875 = vsel %vm779, %v867, %v874
        %v877 = vshrl.u32 %v646, 16
        %v879 = vrot.slane %v877, 7
        %v880 = vshll.u32 %v646, 16
        %v882 = vor.u32 %v879, %v880
        %v883 = vrot.slane %v879, 4
        %v885 = vshrl.u32 %v647, 16
        %v887 = vrot.slane %v885, 7
        %v888 = vshll.u32 %v647, 16
        %v890 = vor.u32 %v887, %v888
        %v891 = vsel %vm779, %v883, %v890
        %v893 = vshrl.u32 %v648, 16
        %v895 = vrot.slane %v893, 7
        %v896 = vshll.u32 %v648, 16
        %v898 = vor.u32 %v895, %v896
        %v899 = vrot.slane %v895, 4
        %v901 = vshrl.u32 %v649, 16
        %v903 = vrot.slane %v901, 7
        %v904 = vshll.u32 %v649, 16
        %v906 = vor.u32 %v903, %v904
        %v907 = vsel %vm779, %v899, %v906
        %v909 = vshrl.u32 %v650, 16
        %v911 = vrot.slane %v909, 7
        %v912 = vshll.u32 %v650, 16
        %v914 = vor.u32 %v911, %v912
        %v915 = vrot.slane %v911, 4
        %v917 = vshrl.u32 %v651, 16
        %v919 = vrot.slane %v917, 7
        %v920 = vshll.u32 %v651, 16
        %v922 = vor.u32 %v919, %v920
        %v923 = vsel %vm779, %v915, %v922
        %v925 = vshrl.u32 %v652, 16
        %v927 = vrot.slane %v925, 7
        %v928 = vshll.u32 %v652, 16
        %v930 = vor.u32 %v927, %v928
        %v931 = vrot.slane %v927, 4
        %v933 = vshrl.u32 %v653, 16
        %v935 = vrot.slane %v933, 7
        %v936 = vshll.u32 %v653, 16
        %v938 = vor.u32 %v935, %v936
        %v939 = vsel %vm779, %v931, %v938
        %v941 = vshrl.u32 %v654, 16
        %v943 = vrot.slane %v941, 7
        %v944 = vshll.u32 %v654, 16
        %v946 = vor.u32 %v943, %v944
        %v947 = vrot.slane %v943, 4
        %v949 = vshrl.u32 %v655, 16
        %v951 = vrot.slane %v949, 7
        %v952 = vshll.u32 %v655, 16
        %v954 = vor.u32 %v951, %v952
        %v955 = vsel %vm779, %v947, %v954
        %v957 = vshrl.u32 %v656, 16
        %v959 = vrot.slane %v957, 7
        %v960 = vshll.u32 %v656, 16
        %v962 = vor.u32 %v959, %v960
        %v963 = vrot.slane %v959, 4
        %v965 = vshrl.u32 %v657, 16
        %v967 = vrot.slane %v965, 7
        %v968 = vshll.u32 %v657, 16
        %v970 = vor.u32 %v967, %v968
        %v971 = vsel %vm779, %v963, %v970
        %v973 = vshrl.u32 %v658, 16
        %v975 = vrot.slane %v973, 7
        %v976 = vshll.u32 %v658, 16
        %v978 = vor.u32 %v975, %v976
        %v979 = vrot.slane %v975, 4
        %v981 = vshrl.u32 %v659, 16
        %v983 = vrot.slane %v981, 7
        %v984 = vshll.u32 %v659, 16
        %v986 = vor.u32 %v983, %v984
        %v987 = vsel %vm779, %v979, %v986
        %v989 = vshrl.u32 %v660, 16
        %v991 = vrot.slane %v989, 7
        %v992 = vshll.u32 %v660, 16
        %v994 = vor.u32 %v991, %v992
        %v995 = vrot.slane %v991, 4
        %v997 = vshrl.u32 %v661, 16
        %v999 = vrot.slane %v997, 7
        %v1000 = vshll.u32 %v661, 16
        %v1002 = vor.u32 %v999, %v1000
        %v1003 = vsel %vm779, %v995, %v1002
        %v1005 = vshrl.u32 %v662, 16
        %v1007 = vrot.slane %v1005, 7
        %v1008 = vshll.u32 %v662, 16
        %v1010 = vor.u32 %v1007, %v1008
        %v1011 = vrot.slane %v1007, 4
        %v1013 = vshrl.u32 %v663, 16
        %v1015 = vrot.slane %v1013, 7
        %v1016 = vshll.u32 %v663, 16
        %v1018 = vor.u32 %v1015, %v1016
        %v1019 = vsel %vm779, %v1011, %v1018
        %v1021 = vshrl.u32 %v664, 16
        %v1023 = vrot.slane %v1021, 7
        %v1024 = vshll.u32 %v664, 16
        %v1026 = vor.u32 %v1023, %v1024
        %v1027 = vrot.slane %v1023, 4
        %v1029 = vshrl.u32 %v665, 16
        %v1031 = vrot.slane %v1029, 7
        %v1032 = vshll.u32 %v665, 16
        %v1034 = vor.u32 %v1031, %v1032
        %v1035 = vsel %vm779, %v1027, %v1034
        %vm1068 = vcmask 1043456
        %vm1069 = vsmask.f32 7938
        %vm1070 = vmand %vm1068, %vm1069
        %v1071 = vld [vmem:[%s675] sm:$0xf]
        %v1072 = vsel %vm1070, %v786, %v1071
        %1073 = vst [vmem:[%s675] sm:$0xf] %v1072
        %1074 = vst [vmem:[%s675 + $0xc] sm:$0xf] %v795
        %v1075 = vld [vmem:[%s675 + $0x18] sm:$0xf]
        %v1076 = vsel %vm1070, %v802, %v1075
        %1077 = vst [vmem:[%s675 + $0x18] sm:$0xf] %v1076
        %1078 = vst [vmem:[%s675 + $0x24] sm:$0xf] %v811
        %v1079 = vld [vmem:[%s675 + $0x30] sm:$0xf]
        %v1080 = vsel %vm1070, %v818, %v1079
        %1081 = vst [vmem:[%s675 + $0x30] sm:$0xf] %v1080
        %1082 = vst [vmem:[%s675 + $0x3c] sm:$0xf] %v827
        %v1083 = vld [vmem:[%s675 + $0x48] sm:$0xf]
        %v1084 = vsel %vm1070, %v834, %v1083
        %1085 = vst [vmem:[%s675 + $0x48] sm:$0xf] %v1084
        %1086 = vst [vmem:[%s675 + $0x54] sm:$0xf] %v843
        %v1087 = vld [vmem:[%s675 + $0x60] sm:$0xf]
        %v1088 = vsel %vm1070, %v850, %v1087
        %1089 = vst [vmem:[%s675 + $0x60] sm:$0xf] %v1088
        %1090 = vst [vmem:[%s675 + $0x6c] sm:$0xf] %v859
        %v1091 = vld [vmem:[%s675 + $0x78] sm:$0xf]
        %v1092 = vsel %vm1070, %v866, %v1091
        %1093 = vst [vmem:[%s675 + $0x78] sm:$0xf] %v1092
        %1094 = vst [vmem:[%s675 + $0x84] sm:$0xf] %v875
        %v1095 = vld [vmem:[%s675 + $0x90] sm:$0xf]
        %v1096 = vsel %vm1070, %v882, %v1095
        %1097 = vst [vmem:[%s675 + $0x90] sm:$0xf] %v1096
        %1098 = vst [vmem:[%s675 + $0x9c] sm:$0xf] %v891
        %v1099 = vld [vmem:[%s675 + $0xa8] sm:$0xf]
        %v1100 = vsel %vm1070, %v898, %v1099
        %1101 = vst [vmem:[%s675 + $0xa8] sm:$0xf] %v1100
        %1102 = vst [vmem:[%s675 + $0xb4] sm:$0xf] %v907
        %v1103 = vld [vmem:[%s675 + $0xc0] sm:$0xf]
        %v1104 = vsel %vm1070, %v914, %v1103
        %1105 = vst [vmem:[%s675 + $0xc0] sm:$0xf] %v1104
        %1106 = vst [vmem:[%s675 + $0xcc] sm:$0xf] %v923
        %v1107 = vld [vmem:[%s675 + $0xd8] sm:$0xf]
        %v1108 = vsel %vm1070, %v930, %v1107
        %1109 = vst [vmem:[%s675 + $0xd8] sm:$0xf] %v1108
        %1110 = vst [vmem:[%s675 + $0xe4] sm:$0xf] %v939
        %v1111 = vld [vmem:[%s675 + $0xf0] sm:$0xf]
        %v1112 = vsel %vm1070, %v946, %v1111
        %1113 = vst [vmem:[%s675 + $0xf0] sm:$0xf] %v1112
        %1114 = vst [vmem:[%s675 + $0xfc] sm:$0xf] %v955
        %v1115 = vld [vmem:[%s675 + $0x108] sm:$0xf]
        %v1116 = vsel %vm1070, %v962, %v1115
        %1117 = vst [vmem:[%s675 + $0x108] sm:$0xf] %v1116
        %1118 = vst [vmem:[%s675 + $0x114] sm:$0xf] %v971
        %v1119 = vld [vmem:[%s675 + $0x120] sm:$0xf]
        %v1120 = vsel %vm1070, %v978, %v1119
        %1121 = vst [vmem:[%s675 + $0x120] sm:$0xf] %v1120
        %1122 = vst [vmem:[%s675 + $0x12c] sm:$0xf] %v987
        %v1123 = vld [vmem:[%s675 + $0x138] sm:$0xf]
        %v1124 = vsel %vm1070, %v994, %v1123
        %1125 = vst [vmem:[%s675 + $0x138] sm:$0xf] %v1124
        %1126 = vst [vmem:[%s675 + $0x144] sm:$0xf] %v1003
        %v1127 = vld [vmem:[%s675 + $0x150] sm:$0xf]
        %v1128 = vsel %vm1070, %v1010, %v1127
        %1129 = vst [vmem:[%s675 + $0x150] sm:$0xf] %v1128
        %1130 = vst [vmem:[%s675 + $0x15c] sm:$0xf] %v1019
        %v1131 = vld [vmem:[%s675 + $0x168] sm:$0xf]
        %v1132 = vsel %vm1070, %v1026, %v1131
        %1133 = vst [vmem:[%s675 + $0x168] sm:$0xf] %v1132
        %1134 = vst [vmem:[%s675 + $0x174] sm:$0xf] %v1035
        %1135 = vst [vmem:[%s675 + $0x4] sm:$0xf] %v634
        %1136 = vst [vmem:[%s675 + $0x10] sm:$0xf] %v635
        %1137 = vst [vmem:[%s675 + $0x1c] sm:$0xf] %v636
        %1138 = vst [vmem:[%s675 + $0x28] sm:$0xf] %v637
        %1139 = vst [vmem:[%s675 + $0x34] sm:$0xf] %v638
        %1140 = vst [vmem:[%s675 + $0x40] sm:$0xf] %v639
        %1141 = vst [vmem:[%s675 + $0x4c] sm:$0xf] %v640
        %1142 = vst [vmem:[%s675 + $0x58] sm:$0xf] %v641
        %1143 = vst [vmem:[%s675 + $0x64] sm:$0xf] %v642
        %1144 = vst [vmem:[%s675 + $0x70] sm:$0xf] %v643
        %1145 = vst [vmem:[%s675 + $0x7c] sm:$0xf] %v644
        %1146 = vst [vmem:[%s675 + $0x88] sm:$0xf] %v645
        %1147 = vst [vmem:[%s675 + $0x94] sm:$0xf] %v646
        %1148 = vst [vmem:[%s675 + $0xa0] sm:$0xf] %v647
        %1149 = vst [vmem:[%s675 + $0xac] sm:$0xf] %v648
        %1150 = vst [vmem:[%s675 + $0xb8] sm:$0xf] %v649
        %1151 = vst [vmem:[%s675 + $0xc4] sm:$0xf] %v650
        %1152 = vst [vmem:[%s675 + $0xd0] sm:$0xf] %v651
        %1153 = vst [vmem:[%s675 + $0xdc] sm:$0xf] %v652
        %1154 = vst [vmem:[%s675 + $0xe8] sm:$0xf] %v653
        %1155 = vst [vmem:[%s675 + $0xf4] sm:$0xf] %v654
        %1156 = vst [vmem:[%s675 + $0x100] sm:$0xf] %v655
        %1157 = vst [vmem:[%s675 + $0x10c] sm:$0xf] %v656
        %1158 = vst [vmem:[%s675 + $0x118] sm:$0xf] %v657
        %1159 = vst [vmem:[%s675 + $0x124] sm:$0xf] %v658
        %1160 = vst [vmem:[%s675 + $0x130] sm:$0xf] %v659
        %1161 = vst [vmem:[%s675 + $0x13c] sm:$0xf] %v660
        %1162 = vst [vmem:[%s675 + $0x148] sm:$0xf] %v661
        %1163 = vst [vmem:[%s675 + $0x154] sm:$0xf] %v662
        %1164 = vst [vmem:[%s675 + $0x160] sm:$0xf] %v663
        %1165 = vst [vmem:[%s675 + $0x16c] sm:$0xf] %v664
        %1166 = vst [vmem:[%s675 + $0x178] sm:$0xf] %v665
        %vm1167 = vsmask.f32 3328
        %vm1168 = vsmask.f32 7440
        %vm1169 = vmor %vm1167, %vm1168
        %v1170 = vrot.slane %v781, 4
        %v1171 = vrot.slane %v784, 5
        %v1172 = vor.u32 %v1170, %v1171
        %v1173 = vrot.slane %v1172, 4
        %v1174 = vrot.slane %v792, 5
        %v1175 = vsel %vm1169, %v1173, %v1174
        %v1176 = vrot.slane %v789, 4
        %v1177 = vor.u32 %v1176, %v1174
        %v1178 = vrot.slane %v1177, 4
        %v1179 = vrot.slane %v797, 4
        %v1180 = vrot.slane %v800, 5
        %v1181 = vor.u32 %v1179, %v1180
        %v1182 = vrot.slane %v1181, 4
        %v1183 = vrot.slane %v808, 5
        %v1184 = vsel %vm1169, %v1182, %v1183
        %v1185 = vrot.slane %v805, 4
        %v1186 = vor.u32 %v1185, %v1183
        %v1187 = vrot.slane %v1186, 4
        %v1188 = vrot.slane %v813, 4
        %v1189 = vrot.slane %v816, 5
        %v1190 = vor.u32 %v1188, %v1189
        %v1191 = vrot.slane %v1190, 4
        %v1192 = vrot.slane %v824, 5
        %v1193 = vsel %vm1169, %v1191, %v1192
        %v1194 = vrot.slane %v821, 4
        %v1195 = vor.u32 %v1194, %v1192
        %v1196 = vrot.slane %v1195, 4
        %v1197 = vrot.slane %v829, 4
        %v1198 = vrot.slane %v832, 5
        %v1199 = vor.u32 %v1197, %v1198
        %v1200 = vrot.slane %v1199, 4
        %v1201 = vrot.slane %v840, 5
        %v1202 = vsel %vm1169, %v1200, %v1201
        %v1203 = vrot.slane %v837, 4
        %v1204 = vor.u32 %v1203, %v1201
        %v1205 = vrot.slane %v1204, 4
        %v1206 = vrot.slane %v845, 4
        %v1207 = vrot.slane %v848, 5
        %v1208 = vor.u32 %v1206, %v1207
        %v1209 = vrot.slane %v1208, 4
        %v1210 = vrot.slane %v856, 5
        %v1211 = vsel %vm1169, %v1209, %v1210
        %v1212 = vrot.slane %v853, 4
        %v1213 = vor.u32 %v1212, %v1210
        %v1214 = vrot.slane %v1213, 4
        %v1215 = vrot.slane %v861, 4
        %v1216 = vrot.slane %v864, 5
        %v1217 = vor.u32 %v1215, %v1216
        %v1218 = vrot.slane %v1217, 4
        %v1219 = vrot.slane %v872, 5
        %v1220 = vsel %vm1169, %v1218, %v1219
        %v1221 = vrot.slane %v869, 4
        %v1222 = vor.u32 %v1221, %v1219
        %v1223 = vrot.slane %v1222, 4
        %v1224 = vrot.slane %v877, 4
        %v1225 = vrot.slane %v880, 5
        %v1226 = vor.u32 %v1224, %v1225
        %v1227 = vrot.slane %v1226, 4
        %v1228 = vrot.slane %v888, 5
        %v1229 = vsel %vm1169, %v1227, %v1228
        %v1230 = vrot.slane %v885, 4
        %v1231 = vor.u32 %v1230, %v1228
        %v1232 = vrot.slane %v1231, 4
        %v1233 = vrot.slane %v893, 4
        %v1234 = vrot.slane %v896, 5
        %v1235 = vor.u32 %v1233, %v1234
        %v1236 = vrot.slane %v1235, 4
        %v1237 = vrot.slane %v904, 5
        %v1238 = vsel %vm1169, %v1236, %v1237
        %v1239 = vrot.slane %v901, 4
        %v1240 = vor.u32 %v1239, %v1237
        %v1241 = vrot.slane %v1240, 4
        %v1242 = vrot.slane %v909, 4
        %v1243 = vrot.slane %v912, 5
        %v1244 = vor.u32 %v1242, %v1243
        %v1245 = vrot.slane %v1244, 4
        %v1246 = vrot.slane %v920, 5
        %v1247 = vsel %vm1169, %v1245, %v1246
        %v1248 = vrot.slane %v917, 4
        %v1249 = vor.u32 %v1248, %v1246
        %v1250 = vrot.slane %v1249, 4
        %v1251 = vrot.slane %v925, 4
        %v1252 = vrot.slane %v928, 5
        %v1253 = vor.u32 %v1251, %v1252
        %v1254 = vrot.slane %v1253, 4
        %v1255 = vrot.slane %v936, 5
        %v1256 = vsel %vm1169, %v1254, %v1255
        %v1257 = vrot.slane %v933, 4
        %v1258 = vor.u32 %v1257, %v1255
        %v1259 = vrot.slane %v1258, 4
        %v1260 = vrot.slane %v941, 4
        %v1261 = vrot.slane %v944, 5
        %v1262 = vor.u32 %v1260, %v1261
        %v1263 = vrot.slane %v1262, 4
        %v1264 = vrot.slane %v952, 5
        %v1265 = vsel %vm1169, %v1263, %v1264
        %v1266 = vrot.slane %v949, 4
        %v1267 = vor.u32 %v1266, %v1264
        %v1268 = vrot.slane %v1267, 4
        %v1269 = vrot.slane %v957, 4
        %v1270 = vrot.slane %v960, 5
        %v1271 = vor.u32 %v1269, %v1270
        %v1272 = vrot.slane %v1271, 4
        %v1273 = vrot.slane %v968, 5
        %v1274 = vsel %vm1169, %v1272, %v1273
        %v1275 = vrot.slane %v965, 4
        %v1276 = vor.u32 %v1275, %v1273
        %v1277 = vrot.slane %v1276, 4
        %v1278 = vrot.slane %v973, 4
        %v1279 = vrot.slane %v976, 5
        %v1280 = vor.u32 %v1278, %v1279
        %v1281 = vrot.slane %v1280, 4
        %v1282 = vrot.slane %v984, 5
        %v1283 = vsel %vm1169, %v1281, %v1282
        %v1284 = vrot.slane %v981, 4
        %v1285 = vor.u32 %v1284, %v1282
        %v1286 = vrot.slane %v1285, 4
        %v1287 = vrot.slane %v989, 4
        %v1288 = vrot.slane %v992, 5
        %v1289 = vor.u32 %v1287, %v1288
        %v1290 = vrot.slane %v1289, 4
        %v1291 = vrot.slane %v1000, 5
        %v1292 = vsel %vm1169, %v1290, %v1291
        %v1293 = vrot.slane %v997, 4
        %v1294 = vor.u32 %v1293, %v1291
        %v1295 = vrot.slane %v1294, 4
        %v1296 = vrot.slane %v1005, 4
        %v1297 = vrot.slane %v1008, 5
        %v1298 = vor.u32 %v1296, %v1297
        %v1299 = vrot.slane %v1298, 4
        %v1300 = vrot.slane %v1016, 5
        %v1301 = vsel %vm1169, %v1299, %v1300
        %v1302 = vrot.slane %v1013, 4
        %v1303 = vor.u32 %v1302, %v1300
        %v1304 = vrot.slane %v1303, 4
        %v1305 = vrot.slane %v1021, 4
        %v1306 = vrot.slane %v1024, 5
        %v1307 = vor.u32 %v1305, %v1306
        %v1308 = vrot.slane %v1307, 4
        %v1309 = vrot.slane %v1032, 5
        %v1310 = vsel %vm1169, %v1308, %v1309
        %v1311 = vrot.slane %v1029, 4
        %v1312 = vor.u32 %v1311, %v1309
        %v1313 = vrot.slane %v1312, 4
        %1346 = vst [vmem:[%s675 + $0x8] sm:$0xf] %v1175
        %vm1347 = vmand %vm1068, %vm1167
        %v1348 = vld [vmem:[%s675 + $0x14] sm:$0xf]
        %v1349 = vsel %vm1347, %v1178, %v1348
        %1350 = vst [vmem:[%s675 + $0x14] sm:$0xf] %v1349
        %1351 = vst [vmem:[%s675 + $0x20] sm:$0xf] %v1184
        %v1352 = vld [vmem:[%s675 + $0x2c] sm:$0xf]
        %v1353 = vsel %vm1347, %v1187, %v1352
        %1354 = vst [vmem:[%s675 + $0x2c] sm:$0xf] %v1353
        %1355 = vst [vmem:[%s675 + $0x38] sm:$0xf] %v1193
        %v1356 = vld [vmem:[%s675 + $0x44] sm:$0xf]
        %v1357 = vsel %vm1347, %v1196, %v1356
        %1358 = vst [vmem:[%s675 + $0x44] sm:$0xf] %v1357
        %1359 = vst [vmem:[%s675 + $0x50] sm:$0xf] %v1202
        %v1360 = vld [vmem:[%s675 + $0x5c] sm:$0xf]
        %v1361 = vsel %vm1347, %v1205, %v1360
        %1362 = vst [vmem:[%s675 + $0x5c] sm:$0xf] %v1361
        %1363 = vst [vmem:[%s675 + $0x68] sm:$0xf] %v1211
        %v1364 = vld [vmem:[%s675 + $0x74] sm:$0xf]
        %v1365 = vsel %vm1347, %v1214, %v1364
        %1366 = vst [vmem:[%s675 + $0x74] sm:$0xf] %v1365
        %1367 = vst [vmem:[%s675 + $0x80] sm:$0xf] %v1220
        %v1368 = vld [vmem:[%s675 + $0x8c] sm:$0xf]
        %v1369 = vsel %vm1347, %v1223, %v1368
        %1370 = vst [vmem:[%s675 + $0x8c] sm:$0xf] %v1369
        %1371 = vst [vmem:[%s675 + $0x98] sm:$0xf] %v1229
        %v1372 = vld [vmem:[%s675 + $0xa4] sm:$0xf]
        %v1373 = vsel %vm1347, %v1232, %v1372
        %1374 = vst [vmem:[%s675 + $0xa4] sm:$0xf] %v1373
        %1375 = vst [vmem:[%s675 + $0xb0] sm:$0xf] %v1238
        %v1376 = vld [vmem:[%s675 + $0xbc] sm:$0xf]
        %v1377 = vsel %vm1347, %v1241, %v1376
        %1378 = vst [vmem:[%s675 + $0xbc] sm:$0xf] %v1377
        %1379 = vst [vmem:[%s675 + $0xc8] sm:$0xf] %v1247
        %v1380 = vld [vmem:[%s675 + $0xd4] sm:$0xf]
        %v1381 = vsel %vm1347, %v1250, %v1380
        %1382 = vst [vmem:[%s675 + $0xd4] sm:$0xf] %v1381
        %1383 = vst [vmem:[%s675 + $0xe0] sm:$0xf] %v1256
        %v1384 = vld [vmem:[%s675 + $0xec] sm:$0xf]
        %v1385 = vsel %vm1347, %v1259, %v1384
        %1386 = vst [vmem:[%s675 + $0xec] sm:$0xf] %v1385
        %1387 = vst [vmem:[%s675 + $0xf8] sm:$0xf] %v1265
        %v1388 = vld [vmem:[%s675 + $0x104] sm:$0xf]
        %v1389 = vsel %vm1347, %v1268, %v1388
        %1390 = vst [vmem:[%s675 + $0x104] sm:$0xf] %v1389
        %1391 = vst [vmem:[%s675 + $0x110] sm:$0xf] %v1274
        %v1392 = vld [vmem:[%s675 + $0x11c] sm:$0xf]
        %v1393 = vsel %vm1347, %v1277, %v1392
        %1394 = vst [vmem:[%s675 + $0x11c] sm:$0xf] %v1393
        %1395 = vst [vmem:[%s675 + $0x128] sm:$0xf] %v1283
        %v1396 = vld [vmem:[%s675 + $0x134] sm:$0xf]
        %v1397 = vsel %vm1347, %v1286, %v1396
        %1398 = vst [vmem:[%s675 + $0x134] sm:$0xf] %v1397
        %1399 = vst [vmem:[%s675 + $0x140] sm:$0xf] %v1292
        %v1400 = vld [vmem:[%s675 + $0x14c] sm:$0xf]
        %v1401 = vsel %vm1347, %v1295, %v1400
        %1402 = vst [vmem:[%s675 + $0x14c] sm:$0xf] %v1401
        %1403 = vst [vmem:[%s675 + $0x158] sm:$0xf] %v1301
        %v1404 = vld [vmem:[%s675 + $0x164] sm:$0xf]
        %v1405 = vsel %vm1347, %v1304, %v1404
        %1406 = vst [vmem:[%s675 + $0x164] sm:$0xf] %v1405
        %1407 = vst [vmem:[%s675 + $0x170] sm:$0xf] %v1310
        %v1408 = vld [vmem:[%s675 + $0x17c] sm:$0xf]
        %v1409 = vsel %vm1347, %v1313, %v1408
        %1410 = vst [vmem:[%s675 + $0x17c] sm:$0xf] %v1409
        %v1411 = vld [vmem:[#allocation2] sm:$0xff]
        %v1412 = vld [vmem:[#allocation2 + $0x8] sm:$0xf]
        %v1413 = vld [vmem:[#allocation2 + $0xc] sm:$0xff]
        %v1414 = vld [vmem:[#allocation2 + $0x14] sm:$0xf]
        %v1415 = vld [vmem:[#allocation2 + $0x18] sm:$0xff]
        %v1416 = vld [vmem:[#allocation2 + $0x20] sm:$0xf]
        %v1417 = vld [vmem:[#allocation2 + $0x24] sm:$0xff]
        %v1418 = vld [vmem:[#allocation2 + $0x2c] sm:$0xf]
        %v1419 = vld [vmem:[#allocation2 + $0x30] sm:$0xff]
        %v1420 = vld [vmem:[#allocation2 + $0x38] sm:$0xf]
        %v1421 = vld [vmem:[#allocation2 + $0x3c] sm:$0xff]
        %v1422 = vld [vmem:[#allocation2 + $0x44] sm:$0xf]
        %v1423 = vld [vmem:[#allocation2 + $0x48] sm:$0xff]
        %v1424 = vld [vmem:[#allocation2 + $0x50] sm:$0xf]
        %v1425 = vld [vmem:[#allocation2 + $0x54] sm:$0xff]
        %v1426 = vld [vmem:[#allocation2 + $0x5c] sm:$0xf]
        %v1427 = vld [vmem:[#allocation2 + $0x60] sm:$0xff]
        %v1428 = vld [vmem:[#allocation2 + $0x68] sm:$0xf]
        %v1429 = vld [vmem:[#allocation2 + $0x6c] sm:$0xff]
        %v1430 = vld [vmem:[#allocation2 + $0x74] sm:$0xf]
        %v1431 = vld [vmem:[#allocation2 + $0x78] sm:$0xff]
        %v1432 = vld [vmem:[#allocation2 + $0x80] sm:$0xf]
        %v1433 = vld [vmem:[#allocation2 + $0x84] sm:$0xff]
        %v1434 = vld [vmem:[#allocation2 + $0x8c] sm:$0xf]
        %v1435 = vld [vmem:[#allocation2 + $0x90] sm:$0xff]
        %v1436 = vld [vmem:[#allocation2 + $0x98] sm:$0xf]
        %v1437 = vld [vmem:[#allocation2 + $0x9c] sm:$0xff]
        %v1438 = vld [vmem:[#allocation2 + $0xa4] sm:$0xf]
        %v1439 = vld [vmem:[#allocation2 + $0xa8] sm:$0xff]
        %v1440 = vld [vmem:[#allocation2 + $0xb0] sm:$0xf]
        %v1441 = vld [vmem:[#allocation2 + $0xb4] sm:$0xff]
        %v1442 = vld [vmem:[#allocation2 + $0xbc] sm:$0xf]
        %v1443 = vld [vmem:[#allocation2 + $0xc0] sm:$0xff]
        %v1444 = vld [vmem:[#allocation2 + $0xc8] sm:$0xf]
        %v1445 = vld [vmem:[#allocation2 + $0xcc] sm:$0xff]
        %v1446 = vld [vmem:[#allocation2 + $0xd4] sm:$0xf]
        %v1447 = vld [vmem:[#allocation2 + $0xd8] sm:$0xff]
        %v1448 = vld [vmem:[#allocation2 + $0xe0] sm:$0xf]
        %v1449 = vld [vmem:[#allocation2 + $0xe4] sm:$0xff]
        %v1450 = vld [vmem:[#allocation2 + $0xec] sm:$0xf]
        %v1451 = vld [vmem:[#allocation2 + $0xf0] sm:$0xff]
        %v1452 = vld [vmem:[#allocation2 + $0xf8] sm:$0xf]
        %v1453 = vld [vmem:[#allocation2 + $0xfc] sm:$0xff]
        %v1454 = vld [vmem:[#allocation2 + $0x104] sm:$0xf]
        %v1455 = vld [vmem:[#allocation2 + $0x108] sm:$0xff]
        %v1456 = vld [vmem:[#allocation2 + $0x110] sm:$0xf]
        %v1457 = vld [vmem:[#allocation2 + $0x114] sm:$0xff]
        %v1458 = vld [vmem:[#allocation2 + $0x11c] sm:$0xf]
        %v1459 = vld [vmem:[#allocation2 + $0x120] sm:$0xff]
        %v1460 = vld [vmem:[#allocation2 + $0x128] sm:$0xf]
        %v1461 = vld [vmem:[#allocation2 + $0x12c] sm:$0xff]
        %v1462 = vld [vmem:[#allocation2 + $0x134] sm:$0xf]
        %v1463 = vld [vmem:[#allocation2 + $0x138] sm:$0xff]
        %v1464 = vld [vmem:[#allocation2 + $0x140] sm:$0xf]
        %v1465 = vld [vmem:[#allocation2 + $0x144] sm:$0xff]
        %v1466 = vld [vmem:[#allocation2 + $0x14c] sm:$0xf]
        %v1467 = vld [vmem:[#allocation2 + $0x150] sm:$0xff]
        %v1468 = vld [vmem:[#allocation2 + $0x158] sm:$0xf]
        %v1469 = vld [vmem:[#allocation2 + $0x15c] sm:$0xff]
        %v1470 = vld [vmem:[#allocation2 + $0x164] sm:$0xf]
        %v1471 = vld [vmem:[#allocation2 + $0x168] sm:$0xff]
        %v1472 = vld [vmem:[#allocation2 + $0x170] sm:$0xf]
        %v1473 = vld [vmem:[#allocation2 + $0x174] sm:$0xff]
        %v1474 = vld [vmem:[#allocation2 + $0x17c] sm:$0xf]
        %v1475 = vld [vmem:[#allocation9] sm:$0xf]
        %v1476 = vld [vmem:[#allocation9 + $0x4] sm:$0xf]
        %v1477 = vld [vmem:[#allocation9 + $0x8] sm:$0xf]
        %v1478 = vld [vmem:[#allocation9 + $0xc] sm:$0xf]
        %v1479 = vld [vmem:[#allocation9 + $0x10] sm:$0xf]
        %v1480 = vld [vmem:[#allocation9 + $0x14] sm:$0xf]
        %v1481 = vld [vmem:[#allocation9 + $0x18] sm:$0xf]
        %v1482 = vld [vmem:[#allocation9 + $0x1c] sm:$0xf]
        %v1483 = vld [vmem:[#allocation9 + $0x20] sm:$0xf]
        %v1484 = vld [vmem:[#allocation9 + $0x24] sm:$0xf]
        %v1485 = vld [vmem:[#allocation9 + $0x28] sm:$0xf]
        %v1486 = vld [vmem:[#allocation9 + $0x2c] sm:$0xf]
        %v1487 = vld [vmem:[#allocation9 + $0x30] sm:$0xf]
        %v1488 = vld [vmem:[#allocation9 + $0x34] sm:$0xf]
        %v1489 = vld [vmem:[#allocation9 + $0x38] sm:$0xf]
        %v1490 = vld [vmem:[#allocation9 + $0x3c] sm:$0xf]
        %v1491 = vld [vmem:[#allocation9 + $0x40] sm:$0xf]
        %v1492 = vld [vmem:[#allocation9 + $0x44] sm:$0xf]
        %v1493 = vld [vmem:[#allocation9 + $0x48] sm:$0xf]
        %v1494 = vld [vmem:[#allocation9 + $0x4c] sm:$0xf]
        %v1495 = vld [vmem:[#allocation9 + $0x50] sm:$0xf]
        %v1496 = vld [vmem:[#allocation9 + $0x54] sm:$0xf]
        %v1497 = vld [vmem:[#allocation9 + $0x58] sm:$0xf]
        %v1498 = vld [vmem:[#allocation9 + $0x5c] sm:$0xf]
        %v1499 = vld [vmem:[#allocation9 + $0x60] sm:$0xf]
        %v1500 = vld [vmem:[#allocation9 + $0x64] sm:$0xf]
        %v1501 = vld [vmem:[#allocation9 + $0x68] sm:$0xf]
        %v1502 = vld [vmem:[#allocation9 + $0x6c] sm:$0xf]
        %v1503 = vld [vmem:[#allocation9 + $0x70] sm:$0xf]
        %v1504 = vld [vmem:[#allocation9 + $0x74] sm:$0xf]
        %v1505 = vld [vmem:[#allocation9 + $0x78] sm:$0xf]
        %v1506 = vld [vmem:[#allocation9 + $0x7c] sm:$0xf]
        %v1507 = vld [vmem:[#allocation9 + $0x80] sm:$0xf]
        %v1508 = vld [vmem:[#allocation9 + $0x84] sm:$0xf]
        %v1509 = vld [vmem:[#allocation9 + $0x88] sm:$0xf]
        %v1510 = vld [vmem:[#allocation9 + $0x8c] sm:$0xf]
        %v1511 = vld [vmem:[#allocation9 + $0x90] sm:$0xf]
        %v1512 = vld [vmem:[#allocation9 + $0x94] sm:$0xf]
        %v1513 = vld [vmem:[#allocation9 + $0x98] sm:$0xf]
        %v1514 = vld [vmem:[#allocation9 + $0x9c] sm:$0xf]
        %v1515 = vld [vmem:[#allocation9 + $0xa0] sm:$0xf]
        %v1516 = vld [vmem:[#allocation9 + $0xa4] sm:$0xf]
        %v1517 = vld [vmem:[#allocation9 + $0xa8] sm:$0xf]
        %v1518 = vld [vmem:[#allocation9 + $0xac] sm:$0xf]
        %v1519 = vld [vmem:[#allocation9 + $0xb0] sm:$0xf]
        %v1520 = vld [vmem:[#allocation9 + $0xb4] sm:$0xf]
        %v1521 = vld [vmem:[#allocation9 + $0xb8] sm:$0xf]
        %v1522 = vld [vmem:[#allocation9 + $0xbc] sm:$0xf]
        %v1523 = vld [vmem:[%s675] sm:$0xff]
        %v1524 = vld [vmem:[%s675 + $0x8] sm:$0xf]
        %v1525 = vld [vmem:[%s675 + $0xc] sm:$0xff]
        %v1526 = vld [vmem:[%s675 + $0x14] sm:$0xf]
        %v1527 = vld [vmem:[%s675 + $0x18] sm:$0xff]
        %v1528 = vld [vmem:[%s675 + $0x20] sm:$0xf]
        %v1529 = vld [vmem:[%s675 + $0x24] sm:$0xff]
        %v1530 = vld [vmem:[%s675 + $0x2c] sm:$0xf]
        %v1531 = vld [vmem:[%s675 + $0x30] sm:$0xff]
        %v1532 = vld [vmem:[%s675 + $0x38] sm:$0xf]
        %v1533 = vld [vmem:[%s675 + $0x3c] sm:$0xff]
        %v1534 = vld [vmem:[%s675 + $0x44] sm:$0xf]
        %v1535 = vld [vmem:[%s675 + $0x48] sm:$0xff]
        %v1536 = vld [vmem:[%s675 + $0x50] sm:$0xf]
        %v1537 = vld [vmem:[%s675 + $0x54] sm:$0xff]
        %v1538 = vld [vmem:[%s675 + $0x5c] sm:$0xf]
        %v1539 = vld [vmem:[%s675 + $0x60] sm:$0xff]
        %v1540 = vld [vmem:[%s675 + $0x68] sm:$0xf]
        %v1541 = vld [vmem:[%s675 + $0x6c] sm:$0xff]
        %v1542 = vld [vmem:[%s675 + $0x74] sm:$0xf]
        %v1543 = vld [vmem:[%s675 + $0x78] sm:$0xff]
        %v1544 = vld [vmem:[%s675 + $0x80] sm:$0xf]
        %v1545 = vld [vmem:[%s675 + $0x84] sm:$0xff]
        %v1546 = vld [vmem:[%s675 + $0x8c] sm:$0xf]
        %v1547 = vld [vmem:[%s675 + $0x90] sm:$0xff]
        %v1548 = vld [vmem:[%s675 + $0x98] sm:$0xf]
        %v1549 = vld [vmem:[%s675 + $0x9c] sm:$0xff]
        %v1550 = vld [vmem:[%s675 + $0xa4] sm:$0xf]
        %v1551 = vld [vmem:[%s675 + $0xa8] sm:$0xff]
        %v1552 = vld [vmem:[%s675 + $0xb0] sm:$0xf]
        %v1553 = vld [vmem:[%s675 + $0xb4] sm:$0xff]
        %v1554 = vld [vmem:[%s675 + $0xbc] sm:$0xf]
        %v1555 = vld [vmem:[%s675 + $0xc0] sm:$0xff]
        %v1556 = vld [vmem:[%s675 + $0xc8] sm:$0xf]
        %v1557 = vld [vmem:[%s675 + $0xcc] sm:$0xff]
        %v1558 = vld [vmem:[%s675 + $0xd4] sm:$0xf]
        %v1559 = vld [vmem:[%s675 + $0xd8] sm:$0xff]
        %v1560 = vld [vmem:[%s675 + $0xe0] sm:$0xf]
        %v1561 = vld [vmem:[%s675 + $0xe4] sm:$0xff]
        %v1562 = vld [vmem:[%s675 + $0xec] sm:$0xf]
        %v1563 = vld [vmem:[%s675 + $0xf0] sm:$0xff]
        %v1564 = vld [vmem:[%s675 + $0xf8] sm:$0xf]
        %v1565 = vld [vmem:[%s675 + $0xfc] sm:$0xff]
        %v1566 = vld [vmem:[%s675 + $0x104] sm:$0xf]
        %v1567 = vld [vmem:[%s675 + $0x108] sm:$0xff]
        %v1568 = vld [vmem:[%s675 + $0x110] sm:$0xf]
        %v1569 = vld [vmem:[%s675 + $0x114] sm:$0xff]
        %v1570 = vld [vmem:[%s675 + $0x11c] sm:$0xf]
        %v1571 = vld [vmem:[%s675 + $0x120] sm:$0xff]
        %v1572 = vld [vmem:[%s675 + $0x128] sm:$0xf]
        %v1573 = vld [vmem:[%s675 + $0x12c] sm:$0xff]
        %v1574 = vld [vmem:[%s675 + $0x134] sm:$0xf]
        %v1575 = vld [vmem:[%s675 + $0x138] sm:$0xff]
        %v1576 = vld [vmem:[%s675 + $0x140] sm:$0xf]
        %v1577 = vld [vmem:[%s675 + $0x144] sm:$0xff]
        %v1578 = vld [vmem:[%s675 + $0x14c] sm:$0xf]
        %v1579 = vld [vmem:[%s675 + $0x150] sm:$0xff]
        %v1580 = vld [vmem:[%s675 + $0x158] sm:$0xf]
        %v1581 = vld [vmem:[%s675 + $0x15c] sm:$0xff]
        %v1582 = vld [vmem:[%s675 + $0x164] sm:$0xf]
        %v1583 = vld [vmem:[%s675 + $0x168] sm:$0xff]
        %v1584 = vld [vmem:[%s675 + $0x170] sm:$0xf]
        %v1585 = vld [vmem:[%s675 + $0x174] sm:$0xff]
        %v1586 = vld [vmem:[%s675 + $0x17c] sm:$0xf]
        %v1587 = vld [vmem:[#allocation9 + $0xc0] sm:$0xf]
        %v1588 = vld [vmem:[#allocation9 + $0xc4] sm:$0xf]
        %v1589 = vld [vmem:[#allocation9 + $0xc8] sm:$0xf]
        %v1590 = vld [vmem:[#allocation9 + $0xcc] sm:$0xf]
        %v1591 = vld [vmem:[#allocation9 + $0xd0] sm:$0xf]
        %v1592 = vld [vmem:[#allocation9 + $0xd4] sm:$0xf]
        %v1593 = vld [vmem:[#allocation9 + $0xd8] sm:$0xf]
        %v1594 = vld [vmem:[#allocation9 + $0xdc] sm:$0xf]
        %v1595 = vld [vmem:[#allocation9 + $0xe0] sm:$0xf]
        %v1596 = vld [vmem:[#allocation9 + $0xe4] sm:$0xf]
        %v1597 = vld [vmem:[#allocation9 + $0xe8] sm:$0xf]
        %v1598 = vld [vmem:[#allocation9 + $0xec] sm:$0xf]
        %v1599 = vld [vmem:[#allocation9 + $0xf0] sm:$0xf]
        %v1600 = vld [vmem:[#allocation9 + $0xf4] sm:$0xf]
        %v1601 = vld [vmem:[#allocation9 + $0xf8] sm:$0xf]
        %v1602 = vld [vmem:[#allocation9 + $0xfc] sm:$0xf]
        %v1603 = vld [vmem:[#allocation9 + $0x100] sm:$0xf]
        %v1604 = vld [vmem:[#allocation9 + $0x104] sm:$0xf]
        %v1605 = vld [vmem:[#allocation9 + $0x108] sm:$0xf]
        %v1606 = vld [vmem:[#allocation9 + $0x10c] sm:$0xf]
        %v1607 = vld [vmem:[#allocation9 + $0x110] sm:$0xf]
        %v1608 = vld [vmem:[#allocation9 + $0x114] sm:$0xf]
        %v1609 = vld [vmem:[#allocation9 + $0x118] sm:$0xf]
        %v1610 = vld [vmem:[#allocation9 + $0x11c] sm:$0xf]
        %v1611 = vld [vmem:[#allocation9 + $0x120] sm:$0xf]
        %v1612 = vld [vmem:[#allocation9 + $0x124] sm:$0xf]
        %v1613 = vld [vmem:[#allocation9 + $0x128] sm:$0xf]
        %v1614 = vld [vmem:[#allocation9 + $0x12c] sm:$0xf]
        %v1615 = vld [vmem:[#allocation9 + $0x130] sm:$0xf]
        %v1616 = vld [vmem:[#allocation9 + $0x134] sm:$0xf]
        %v1617 = vld [vmem:[#allocation9 + $0x138] sm:$0xf]
        %v1618 = vld [vmem:[#allocation9 + $0x13c] sm:$0xf]
        %v1619 = vld [vmem:[#allocation9 + $0x140] sm:$0xf]
        %v1620 = vld [vmem:[#allocation9 + $0x144] sm:$0xf]
        %v1621 = vld [vmem:[#allocation9 + $0x148] sm:$0xf]
        %v1622 = vld [vmem:[#allocation9 + $0x14c] sm:$0xf]
        %v1623 = vld [vmem:[#allocation9 + $0x150] sm:$0xf]
        %v1624 = vld [vmem:[#allocation9 + $0x154] sm:$0xf]
        %v1625 = vld [vmem:[#allocation9 + $0x158] sm:$0xf]
        %v1626 = vld [vmem:[#allocation9 + $0x15c] sm:$0xf]
        %v1627 = vld [vmem:[#allocation9 + $0x160] sm:$0xf]
        %v1628 = vld [vmem:[#allocation9 + $0x164] sm:$0xf]
        %v1629 = vld [vmem:[#allocation9 + $0x168] sm:$0xf]
        %v1630 = vld [vmem:[#allocation9 + $0x16c] sm:$0xf]
        %v1631 = vld [vmem:[#allocation9 + $0x170] sm:$0xf]
        %v1632 = vld [vmem:[#allocation9 + $0x174] sm:$0xf]
        %v1633 = vld [vmem:[#allocation9 + $0x178] sm:$0xf]
        %v1634 = vld [vmem:[#allocation9 + $0x17c] sm:$0xf]
        %v1699 = vunpack.c.l.b16 %v1523
        %v1700 = vunpack.c.h.b16 %v1523
        %v1701 = vunpack.c.l.b16 %v1524
        %v1702 = vunpack.c.l.b16 %v1525
        %v1703 = vunpack.c.h.b16 %v1525
        %v1704 = vunpack.c.l.b16 %v1526
        %v1705 = vunpack.c.l.b16 %v1527
        %v1706 = vunpack.c.h.b16 %v1527
        %v1707 = vunpack.c.l.b16 %v1528
        %v1708 = vunpack.c.l.b16 %v1529
        %v1709 = vunpack.c.h.b16 %v1529
        %v1710 = vunpack.c.l.b16 %v1530
        %v1711 = vunpack.c.l.b16 %v1531
        %v1712 = vunpack.c.h.b16 %v1531
        %v1713 = vunpack.c.l.b16 %v1532
        %v1714 = vunpack.c.l.b16 %v1533
        %v1715 = vunpack.c.h.b16 %v1533
        %v1716 = vunpack.c.l.b16 %v1534
        %v1717 = vunpack.c.l.b16 %v1535
        %v1718 = vunpack.c.h.b16 %v1535
        %v1719 = vunpack.c.l.b16 %v1536
        %v1720 = vunpack.c.l.b16 %v1537
        %v1721 = vunpack.c.h.b16 %v1537
        %v1722 = vunpack.c.l.b16 %v1538
        %v1723 = vunpack.c.l.b16 %v1539
        %v1724 = vunpack.c.h.b16 %v1539
        %v1725 = vunpack.c.l.b16 %v1540
        %v1726 = vunpack.c.l.b16 %v1541
        %v1727 = vunpack.c.h.b16 %v1541
        %v1728 = vunpack.c.l.b16 %v1542
        %v1729 = vunpack.c.l.b16 %v1543
        %v1730 = vunpack.c.h.b16 %v1543
        %v1731 = vunpack.c.l.b16 %v1544
        %v1732 = vunpack.c.l.b16 %v1545
        %v1733 = vunpack.c.h.b16 %v1545
        %v1734 = vunpack.c.l.b16 %v1546
        %v1735 = vunpack.c.l.b16 %v1547
        %v1736 = vunpack.c.h.b16 %v1547
        %v1737 = vunpack.c.l.b16 %v1548
        %v1738 = vunpack.c.l.b16 %v1549
        %v1739 = vunpack.c.h.b16 %v1549
        %v1740 = vunpack.c.l.b16 %v1550
        %v1741 = vunpack.c.l.b16 %v1551
        %v1742 = vunpack.c.h.b16 %v1551
        %v1743 = vunpack.c.l.b16 %v1552
        %v1744 = vunpack.c.l.b16 %v1553
        %v1745 = vunpack.c.h.b16 %v1553
        %v1746 = vunpack.c.l.b16 %v1554
        %v1747 = vunpack.c.l.b16 %v1555
        %v1748 = vunpack.c.h.b16 %v1555
        %v1749 = vunpack.c.l.b16 %v1556
        %v1750 = vunpack.c.l.b16 %v1557
        %v1751 = vunpack.c.h.b16 %v1557
        %v1752 = vunpack.c.l.b16 %v1558
        %v1753 = vunpack.c.l.b16 %v1559
        %v1754 = vunpack.c.h.b16 %v1559
        %v1755 = vunpack.c.l.b16 %v1560
        %v1756 = vunpack.c.l.b16 %v1561
        %v1757 = vunpack.c.h.b16 %v1561
        %v1758 = vunpack.c.l.b16 %v1562
        %v1759 = vunpack.c.l.b16 %v1563
        %v1760 = vunpack.c.h.b16 %v1563
        %v1761 = vunpack.c.l.b16 %v1564
        %v1762 = vunpack.c.l.b16 %v1565
        %v1763 = vunpack.c.h.b16 %v1565
        %v1764 = vunpack.c.l.b16 %v1566
        %v1765 = vunpack.c.l.b16 %v1567
        %v1766 = vunpack.c.h.b16 %v1567
        %v1767 = vunpack.c.l.b16 %v1568
        %v1768 = vunpack.c.l.b16 %v1569
        %v1769 = vunpack.c.h.b16 %v1569
        %v1770 = vunpack.c.l.b16 %v1570
        %v1771 = vunpack.c.l.b16 %v1571
        %v1772 = vunpack.c.h.b16 %v1571
        %v1773 = vunpack.c.l.b16 %v1572
        %v1774 = vunpack.c.l.b16 %v1573
        %v1775 = vunpack.c.h.b16 %v1573
        %v1776 = vunpack.c.l.b16 %v1574
        %v1777 = vunpack.c.l.b16 %v1575
        %v1778 = vunpack.c.h.b16 %v1575
        %v1779 = vunpack.c.l.b16 %v1576
        %v1780 = vunpack.c.l.b16 %v1577
        %v1781 = vunpack.c.h.b16 %v1577
        %v1782 = vunpack.c.l.b16 %v1578
        %v1783 = vunpack.c.l.b16 %v1579
        %v1784 = vunpack.c.h.b16 %v1579
        %v1785 = vunpack.c.l.b16 %v1580
        %v1786 = vunpack.c.l.b16 %v1581
        %v1787 = vunpack.c.h.b16 %v1581
        %v1788 = vunpack.c.l.b16 %v1582
        %v1789 = vunpack.c.l.b16 %v1583
        %v1790 = vunpack.c.h.b16 %v1583
        %v1791 = vunpack.c.l.b16 %v1584
        %v1792 = vunpack.c.l.b16 %v1585
        %v1793 = vunpack.c.h.b16 %v1585
        %v1794 = vunpack.c.l.b16 %v1586
        %v1795 = vpack.c.b16 %v1702, %v1699
        %v1796 = vpack.c.b16 %v1703, %v1700
        %v1797 = vpack.c.b16 %v1704, %v1701
        %v1798 = vpack.c.b16 %v1708, %v1705
        %v1799 = vpack.c.b16 %v1709, %v1706
        %v1800 = vpack.c.b16 %v1710, %v1707
        %v1801 = vpack.c.b16 %v1714, %v1711
        %v1802 = vpack.c.b16 %v1715, %v1712
        %v1803 = vpack.c.b16 %v1716, %v1713
        %v1804 = vpack.c.b16 %v1720, %v1717
        %v1805 = vpack.c.b16 %v1721, %v1718
        %v1806 = vpack.c.b16 %v1722, %v1719
        %v1807 = vpack.c.b16 %v1726, %v1723
        %v1808 = vpack.c.b16 %v1727, %v1724
        %v1809 = vpack.c.b16 %v1728, %v1725
        %v1810 = vpack.c.b16 %v1732, %v1729
        %v1811 = vpack.c.b16 %v1733, %v1730
        %v1812 = vpack.c.b16 %v1734, %v1731
        %v1813 = vpack.c.b16 %v1738, %v1735
        %v1814 = vpack.c.b16 %v1739, %v1736
        %v1815 = vpack.c.b16 %v1740, %v1737
        %v1816 = vpack.c.b16 %v1744, %v1741
        %v1817 = vpack.c.b16 %v1745, %v1742
        %v1818 = vpack.c.b16 %v1746, %v1743
        %v1819 = vpack.c.b16 %v1750, %v1747
        %v1820 = vpack.c.b16 %v1751, %v1748
        %v1821 = vpack.c.b16 %v1752, %v1749
        %v1822 = vpack.c.b16 %v1756, %v1753
        %v1823 = vpack.c.b16 %v1757, %v1754
        %v1824 = vpack.c.b16 %v1758, %v1755
        %v1825 = vpack.c.b16 %v1762, %v1759
        %v1826 = vpack.c.b16 %v1763, %v1760
        %v1827 = vpack.c.b16 %v1764, %v1761
        %v1828 = vpack.c.b16 %v1768, %v1765
        %v1829 = vpack.c.b16 %v1769, %v1766
        %v1830 = vpack.c.b16 %v1770, %v1767
        %v1831 = vpack.c.b16 %v1774, %v1771
        %v1832 = vpack.c.b16 %v1775, %v1772
        %v1833 = vpack.c.b16 %v1776, %v1773
        %v1834 = vpack.c.b16 %v1780, %v1777
        %v1835 = vpack.c.b16 %v1781, %v1778
        %v1836 = vpack.c.b16 %v1782, %v1779
        %v1837 = vpack.c.b16 %v1786, %v1783
        %v1838 = vpack.c.b16 %v1787, %v1784
        %v1839 = vpack.c.b16 %v1788, %v1785
        %v1840 = vpack.c.b16 %v1792, %v1789
        %v1841 = vpack.c.b16 %v1793, %v1790
        %v1842 = vpack.c.b16 %v1794, %v1791
        %v1939 = vunpack.c.l.b16 %v1587
        %v1940 = vunpack.c.l.b16 %v1588
        %v1941 = vunpack.c.l.b16 %v1589
        %v1942 = vunpack.c.l.b16 %v1590
        %v1943 = vunpack.c.l.b16 %v1591
        %v1944 = vunpack.c.l.b16 %v1592
        %v1945 = vunpack.c.l.b16 %v1593
        %v1946 = vunpack.c.l.b16 %v1594
        %v1947 = vunpack.c.l.b16 %v1595
        %v1948 = vunpack.c.l.b16 %v1596
        %v1949 = vunpack.c.l.b16 %v1597
        %v1950 = vunpack.c.l.b16 %v1598
        %v1951 = vunpack.c.l.b16 %v1599
        %v1952 = vunpack.c.l.b16 %v1600
        %v1953 = vunpack.c.l.b16 %v1601
        %v1954 = vunpack.c.l.b16 %v1602
        %v1955 = vunpack.c.l.b16 %v1603
        %v1956 = vunpack.c.l.b16 %v1604
        %v1957 = vunpack.c.l.b16 %v1605
        %v1958 = vunpack.c.l.b16 %v1606
        %v1959 = vunpack.c.l.b16 %v1607
        %v1960 = vunpack.c.l.b16 %v1608
        %v1961 = vunpack.c.l.b16 %v1609
        %v1962 = vunpack.c.l.b16 %v1610
        %v1963 = vunpack.c.l.b16 %v1611
        %v1964 = vunpack.c.l.b16 %v1612
        %v1965 = vunpack.c.l.b16 %v1613
        %v1966 = vunpack.c.l.b16 %v1614
        %v1967 = vunpack.c.l.b16 %v1615
        %v1968 = vunpack.c.l.b16 %v1616
        %v1969 = vunpack.c.l.b16 %v1617
        %v1970 = vunpack.c.l.b16 %v1618
        %v1971 = vunpack.c.l.b16 %v1619
        %v1972 = vunpack.c.l.b16 %v1620
        %v1973 = vunpack.c.l.b16 %v1621
        %v1974 = vunpack.c.l.b16 %v1622
        %v1975 = vunpack.c.l.b16 %v1623
        %v1976 = vunpack.c.l.b16 %v1624
        %v1977 = vunpack.c.l.b16 %v1625
        %v1978 = vunpack.c.l.b16 %v1626
        %v1979 = vunpack.c.l.b16 %v1627
        %v1980 = vunpack.c.l.b16 %v1628
        %v1981 = vunpack.c.l.b16 %v1629
        %v1982 = vunpack.c.l.b16 %v1630
        %v1983 = vunpack.c.l.b16 %v1631
        %v1984 = vunpack.c.l.b16 %v1632
        %v1985 = vunpack.c.l.b16 %v1633
        %v1986 = vunpack.c.l.b16 %v1634
        %v1987 = vpack.c.b16 %v1940, %v1939
        %v1988 = vpack.c.b16 %v1942, %v1941
        %v1989 = vpack.c.b16 %v1944, %v1943
        %v1990 = vpack.c.b16 %v1946, %v1945
        %v1991 = vpack.c.b16 %v1948, %v1947
        %v1992 = vpack.c.b16 %v1950, %v1949
        %v1993 = vpack.c.b16 %v1952, %v1951
        %v1994 = vpack.c.b16 %v1954, %v1953
        %v1995 = vpack.c.b16 %v1956, %v1955
        %v1996 = vpack.c.b16 %v1958, %v1957
        %v1997 = vpack.c.b16 %v1960, %v1959
        %v1998 = vpack.c.b16 %v1962, %v1961
        %v1999 = vpack.c.b16 %v1964, %v1963
        %v2000 = vpack.c.b16 %v1966, %v1965
        %v2001 = vpack.c.b16 %v1968, %v1967
        %v2002 = vpack.c.b16 %v1970, %v1969
        %v2003 = vpack.c.b16 %v1972, %v1971
        %v2004 = vpack.c.b16 %v1974, %v1973
        %v2005 = vpack.c.b16 %v1976, %v1975
        %v2006 = vpack.c.b16 %v1978, %v1977
        %v2007 = vpack.c.b16 %v1980, %v1979
        %v2008 = vpack.c.b16 %v1982, %v1981
        %v2009 = vpack.c.b16 %v1984, %v1983
        %v2010 = vpack.c.b16 %v1986, %v1985
        %2035 = vmatpush.bf16.msra.mxu0 %v1994
        %2036 = vmatpush.bf16.msra.mxu0 %v1993
        %2037 = vmatpush.bf16.msra.mxu0 %v1992
        %2038 = vmatpush.bf16.msra.mxu0 %v1991
        %2039 = vmatpush.bf16.msra.mxu0 %v1990
        %2040 = vmatpush.bf16.msra.mxu0 %v1989
        %2041 = vmatpush.bf16.msra.mxu0 %v1988
        %2042 = vmatpush.bf16.msra.mxu0 %v1987
        %2043 = vmatmul.bf16.gmra.mxu0 %v1795
        %v2044 = vpop.f32.mrf.mxu0
        %v2045 = vadd.f32 0.0, %v2044
        %v2046 = vpop.f32.mrf.mxu0
        %v2047 = vadd.f32 0.0, %v2046
        %2048 = vmatmul.bf16.gmra.mxu0 %v1798
        %v2049 = vpop.f32.mrf.mxu0
        %v2050 = vadd.f32 0.0, %v2049
        %v2051 = vpop.f32.mrf.mxu0
        %v2052 = vadd.f32 0.0, %v2051
        %2053 = vmatmul.bf16.gmra.mxu0 %v1801
        %v2054 = vpop.f32.mrf.mxu0
        %v2055 = vadd.f32 0.0, %v2054
        %v2056 = vpop.f32.mrf.mxu0
        %v2057 = vadd.f32 0.0, %v2056
        %2058 = vmatmul.bf16.gmra.mxu0 %v1804
        %v2059 = vpop.f32.mrf.mxu0
        %v2060 = vadd.f32 0.0, %v2059
        %v2061 = vpop.f32.mrf.mxu0
        %v2062 = vadd.f32 0.0, %v2061
        %2063 = vmatmul.bf16.gmra.mxu0 %v1807
        %v2064 = vpop.f32.mrf.mxu0
        %v2065 = vadd.f32 0.0, %v2064
        %v2066 = vpop.f32.mrf.mxu0
        %v2067 = vadd.f32 0.0, %v2066
        %2068 = vmatmul.bf16.gmra.mxu0 %v1810
        %v2069 = vpop.f32.mrf.mxu0
        %v2070 = vadd.f32 0.0, %v2069
        %v2071 = vpop.f32.mrf.mxu0
        %v2072 = vadd.f32 0.0, %v2071
        %2073 = vmatmul.bf16.gmra.mxu0 %v1813
        %v2074 = vpop.f32.mrf.mxu0
        %v2075 = vadd.f32 0.0, %v2074
        %v2076 = vpop.f32.mrf.mxu0
        %v2077 = vadd.f32 0.0, %v2076
        %2078 = vmatmul.bf16.gmra.mxu0 %v1816
        %v2079 = vpop.f32.mrf.mxu0
        %v2080 = vadd.f32 0.0, %v2079
        %v2081 = vpop.f32.mrf.mxu0
        %v2082 = vadd.f32 0.0, %v2081
        %2083 = vmatmul.bf16.gmra.mxu0 %v1819
        %v2084 = vpop.f32.mrf.mxu0
        %v2085 = vadd.f32 0.0, %v2084
        %v2086 = vpop.f32.mrf.mxu0
        %v2087 = vadd.f32 0.0, %v2086
        %2088 = vmatmul.bf16.gmra.mxu0 %v1822
        %v2089 = vpop.f32.mrf.mxu0
        %v2090 = vadd.f32 0.0, %v2089
        %v2091 = vpop.f32.mrf.mxu0
        %v2092 = vadd.f32 0.0, %v2091
        %2093 = vmatmul.bf16.gmra.mxu0 %v1825
        %v2094 = vpop.f32.mrf.mxu0
        %v2095 = vadd.f32 0.0, %v2094
        %v2096 = vpop.f32.mrf.mxu0
        %v2097 = vadd.f32 0.0, %v2096
        %2098 = vmatmul.bf16.gmra.mxu0 %v1828
        %v2099 = vpop.f32.mrf.mxu0
        %v2100 = vadd.f32 0.0, %v2099
        %v2101 = vpop.f32.mrf.mxu0
        %v2102 = vadd.f32 0.0, %v2101
        %2103 = vmatmul.bf16.gmra.mxu0 %v1831
        %v2104 = vpop.f32.mrf.mxu0
        %v2105 = vadd.f32 0.0, %v2104
        %v2106 = vpop.f32.mrf.mxu0
        %v2107 = vadd.f32 0.0, %v2106
        %2108 = vmatmul.bf16.gmra.mxu0 %v1834
        %v2109 = vpop.f32.mrf.mxu0
        %v2110 = vadd.f32 0.0, %v2109
        %v2111 = vpop.f32.mrf.mxu0
        %v2112 = vadd.f32 0.0, %v2111
        %2113 = vmatmul.bf16.gmra.mxu0 %v1837
        %v2114 = vpop.f32.mrf.mxu0
        %v2115 = vadd.f32 0.0, %v2114
        %v2116 = vpop.f32.mrf.mxu0
        %v2117 = vadd.f32 0.0, %v2116
        %2118 = vmatmul.bf16.gmra.mxu0 %v1840
        %v2119 = vpop.f32.mrf.mxu0
        %v2120 = vadd.f32 0.0, %v2119
        %v2121 = vpop.f32.mrf.mxu0
        %v2122 = vadd.f32 0.0, %v2121
        %2123 = vdwg.mxu0
        %2124 = vmatpush.bf16.msra.mxu0 %v2002
        %2125 = vmatpush.bf16.msra.mxu0 %v2001
        %2126 = vmatpush.bf16.msra.mxu0 %v2000
        %2127 = vmatpush.bf16.msra.mxu0 %v1999
        %2128 = vmatpush.bf16.msra.mxu0 %v1998
        %2129 = vmatpush.bf16.msra.mxu0 %v1997
        %2130 = vmatpush.bf16.msra.mxu0 %v1996
        %2131 = vmatpush.bf16.msra.mxu0 %v1995
        %2132 = vmatmul.bf16.gmra.mxu0 %v1796
        %v2133 = vpop.f32.mrf.mxu0
        %v2134 = vadd.f32 %v2045, %v2133
        %v2135 = vpop.f32.mrf.mxu0
        %v2136 = vadd.f32 %v2047, %v2135
        %2137 = vmatmul.bf16.gmra.mxu0 %v1799
        %v2138 = vpop.f32.mrf.mxu0
        %v2139 = vadd.f32 %v2050, %v2138
        %v2140 = vpop.f32.mrf.mxu0
        %v2141 = vadd.f32 %v2052, %v2140
        %2142 = vmatmul.bf16.gmra.mxu0 %v1802
        %v2143 = vpop.f32.mrf.mxu0
        %v2144 = vadd.f32 %v2055, %v2143
        %v2145 = vpop.f32.mrf.mxu0
        %v2146 = vadd.f32 %v2057, %v2145
        %2147 = vmatmul.bf16.gmra.mxu0 %v1805
        %v2148 = vpop.f32.mrf.mxu0
        %v2149 = vadd.f32 %v2060, %v2148
        %v2150 = vpop.f32.mrf.mxu0
        %v2151 = vadd.f32 %v2062, %v2150
        %2152 = vmatmul.bf16.gmra.mxu0 %v1808
        %v2153 = vpop.f32.mrf.mxu0
        %v2154 = vadd.f32 %v2065, %v2153
        %v2155 = vpop.f32.mrf.mxu0
        %v2156 = vadd.f32 %v2067, %v2155
        %2157 = vmatmul.bf16.gmra.mxu0 %v1811
        %v2158 = vpop.f32.mrf.mxu0
        %v2159 = vadd.f32 %v2070, %v2158
        %v2160 = vpop.f32.mrf.mxu0
        %v2161 = vadd.f32 %v2072, %v2160
        %2162 = vmatmul.bf16.gmra.mxu0 %v1814
        %v2163 = vpop.f32.mrf.mxu0
        %v2164 = vadd.f32 %v2075, %v2163
        %v2165 = vpop.f32.mrf.mxu0
        %v2166 = vadd.f32 %v2077, %v2165
        %2167 = vmatmul.bf16.gmra.mxu0 %v1817
        %v2168 = vpop.f32.mrf.mxu0
        %v2169 = vadd.f32 %v2080, %v2168
        %v2170 = vpop.f32.mrf.mxu0
        %v2171 = vadd.f32 %v2082, %v2170
        %2172 = vmatmul.bf16.gmra.mxu0 %v1820
        %v2173 = vpop.f32.mrf.mxu0
        %v2174 = vadd.f32 %v2085, %v2173
        %v2175 = vpop.f32.mrf.mxu0
        %v2176 = vadd.f32 %v2087, %v2175
        %2177 = vmatmul.bf16.gmra.mxu0 %v1823
        %v2178 = vpop.f32.mrf.mxu0
        %v2179 = vadd.f32 %v2090, %v2178
        %v2180 = vpop.f32.mrf.mxu0
        %v2181 = vadd.f32 %v2092, %v2180
        %2182 = vmatmul.bf16.gmra.mxu0 %v1826
        %v2183 = vpop.f32.mrf.mxu0
        %v2184 = vadd.f32 %v2095, %v2183
        %v2185 = vpop.f32.mrf.mxu0
        %v2186 = vadd.f32 %v2097, %v2185
        %2187 = vmatmul.bf16.gmra.mxu0 %v1829
        %v2188 = vpop.f32.mrf.mxu0
        %v2189 = vadd.f32 %v2100, %v2188
        %v2190 = vpop.f32.mrf.mxu0
        %v2191 = vadd.f32 %v2102, %v2190
        %2192 = vmatmul.bf16.gmra.mxu0 %v1832
        %v2193 = vpop.f32.mrf.mxu0
        %v2194 = vadd.f32 %v2105, %v2193
        %v2195 = vpop.f32.mrf.mxu0
        %v2196 = vadd.f32 %v2107, %v2195
        %2197 = vmatmul.bf16.gmra.mxu0 %v1835
        %v2198 = vpop.f32.mrf.mxu0
        %v2199 = vadd.f32 %v2110, %v2198
        %v2200 = vpop.f32.mrf.mxu0
        %v2201 = vadd.f32 %v2112, %v2200
        %2202 = vmatmul.bf16.gmra.mxu0 %v1838
        %v2203 = vpop.f32.mrf.mxu0
        %v2204 = vadd.f32 %v2115, %v2203
        %v2205 = vpop.f32.mrf.mxu0
        %v2206 = vadd.f32 %v2117, %v2205
        %2207 = vmatmul.bf16.gmra.mxu0 %v1841
        %v2208 = vpop.f32.mrf.mxu0
        %v2209 = vadd.f32 %v2120, %v2208
        %v2210 = vpop.f32.mrf.mxu0
        %v2211 = vadd.f32 %v2122, %v2210
        %2212 = vdwg.mxu0
        %2213 = vmatpush.bf16.msra.mxu0 %v2010
        %2214 = vmatpush.bf16.msra.mxu0 %v2009
        %2215 = vmatpush.bf16.msra.mxu0 %v2008
        %2216 = vmatpush.bf16.msra.mxu0 %v2007
        %2217 = vmatpush.bf16.msra.mxu0 %v2006
        %2218 = vmatpush.bf16.msra.mxu0 %v2005
        %2219 = vmatpush.bf16.msra.mxu0 %v2004
        %2220 = vmatpush.bf16.msra.mxu0 %v2003
        %2221 = vmatmul.bf16.gmra.mxu0 %v1797
        %v2222 = vpop.f32.mrf.mxu0
        %v2223 = vadd.f32 %v2134, %v2222
        %v2224 = vpop.f32.mrf.mxu0
        %v2225 = vadd.f32 %v2136, %v2224
        %2226 = vmatmul.bf16.gmra.mxu0 %v1800
        %v2227 = vpop.f32.mrf.mxu0
        %v2228 = vadd.f32 %v2139, %v2227
        %v2229 = vpop.f32.mrf.mxu0
        %v2230 = vadd.f32 %v2141, %v2229
        %2231 = vmatmul.bf16.gmra.mxu0 %v1803
        %v2232 = vpop.f32.mrf.mxu0
        %v2233 = vadd.f32 %v2144, %v2232
        %v2234 = vpop.f32.mrf.mxu0
        %v2235 = vadd.f32 %v2146, %v2234
        %2236 = vmatmul.bf16.gmra.mxu0 %v1806
        %v2237 = vpop.f32.mrf.mxu0
        %v2238 = vadd.f32 %v2149, %v2237
        %v2239 = vpop.f32.mrf.mxu0
        %v2240 = vadd.f32 %v2151, %v2239
        %2241 = vmatmul.bf16.gmra.mxu0 %v1809
        %v2242 = vpop.f32.mrf.mxu0
        %v2243 = vadd.f32 %v2154, %v2242
        %v2244 = vpop.f32.mrf.mxu0
        %v2245 = vadd.f32 %v2156, %v2244
        %2246 = vmatmul.bf16.gmra.mxu0 %v1812
        %v2247 = vpop.f32.mrf.mxu0
        %v2248 = vadd.f32 %v2159, %v2247
        %v2249 = vpop.f32.mrf.mxu0
        %v2250 = vadd.f32 %v2161, %v2249
        %2251 = vmatmul.bf16.gmra.mxu0 %v1815
        %v2252 = vpop.f32.mrf.mxu0
        %v2253 = vadd.f32 %v2164, %v2252
        %v2254 = vpop.f32.mrf.mxu0
        %v2255 = vadd.f32 %v2166, %v2254
        %2256 = vmatmul.bf16.gmra.mxu0 %v1818
        %v2257 = vpop.f32.mrf.mxu0
        %v2258 = vadd.f32 %v2169, %v2257
        %v2259 = vpop.f32.mrf.mxu0
        %v2260 = vadd.f32 %v2171, %v2259
        %2261 = vmatmul.bf16.gmra.mxu0 %v1821
        %v2262 = vpop.f32.mrf.mxu0
        %v2263 = vadd.f32 %v2174, %v2262
        %v2264 = vpop.f32.mrf.mxu0
        %v2265 = vadd.f32 %v2176, %v2264
        %2266 = vmatmul.bf16.gmra.mxu0 %v1824
        %v2267 = vpop.f32.mrf.mxu0
        %v2268 = vadd.f32 %v2179, %v2267
        %v2269 = vpop.f32.mrf.mxu0
        %v2270 = vadd.f32 %v2181, %v2269
        %2271 = vmatmul.bf16.gmra.mxu0 %v1827
        %v2272 = vpop.f32.mrf.mxu0
        %v2273 = vadd.f32 %v2184, %v2272
        %v2274 = vpop.f32.mrf.mxu0
        %v2275 = vadd.f32 %v2186, %v2274
        %2276 = vmatmul.bf16.gmra.mxu0 %v1830
        %v2277 = vpop.f32.mrf.mxu0
        %v2278 = vadd.f32 %v2189, %v2277
        %v2279 = vpop.f32.mrf.mxu0
        %v2280 = vadd.f32 %v2191, %v2279
        %2281 = vmatmul.bf16.gmra.mxu0 %v1833
        %v2282 = vpop.f32.mrf.mxu0
        %v2283 = vadd.f32 %v2194, %v2282
        %v2284 = vpop.f32.mrf.mxu0
        %v2285 = vadd.f32 %v2196, %v2284
        %2286 = vmatmul.bf16.gmra.mxu0 %v1836
        %v2287 = vpop.f32.mrf.mxu0
        %v2288 = vadd.f32 %v2199, %v2287
        %v2289 = vpop.f32.mrf.mxu0
        %v2290 = vadd.f32 %v2201, %v2289
        %2291 = vmatmul.bf16.gmra.mxu0 %v1839
        %v2292 = vpop.f32.mrf.mxu0
        %v2293 = vadd.f32 %v2204, %v2292
        %v2294 = vpop.f32.mrf.mxu0
        %v2295 = vadd.f32 %v2206, %v2294
        %2296 = vmatmul.bf16.gmra.mxu0 %v1842
        %v2297 = vpop.f32.mrf.mxu0
        %v2298 = vadd.f32 %v2209, %v2297
        %v2299 = vpop.f32.mrf.mxu0
        %v2300 = vadd.f32 %v2211, %v2299
        %2301 = vdwg.mxu0
        %v2366 = vunpack.c.l.b16 %v1411
        %v2367 = vunpack.c.h.b16 %v1411
        %v2368 = vunpack.c.l.b16 %v1412
        %v2369 = vunpack.c.l.b16 %v1413
        %v2370 = vunpack.c.h.b16 %v1413
        %v2371 = vunpack.c.l.b16 %v1414
        %v2372 = vunpack.c.l.b16 %v1415
        %v2373 = vunpack.c.h.b16 %v1415
        %v2374 = vunpack.c.l.b16 %v1416
        %v2375 = vunpack.c.l.b16 %v1417
        %v2376 = vunpack.c.h.b16 %v1417
        %v2377 = vunpack.c.l.b16 %v1418
        %v2378 = vunpack.c.l.b16 %v1419
        %v2379 = vunpack.c.h.b16 %v1419
        %v2380 = vunpack.c.l.b16 %v1420
        %v2381 = vunpack.c.l.b16 %v1421
        %v2382 = vunpack.c.h.b16 %v1421
        %v2383 = vunpack.c.l.b16 %v1422
        %v2384 = vunpack.c.l.b16 %v1423
        %v2385 = vunpack.c.h.b16 %v1423
        %v2386 = vunpack.c.l.b16 %v1424
        %v2387 = vunpack.c.l.b16 %v1425
        %v2388 = vunpack.c.h.b16 %v1425
        %v2389 = vunpack.c.l.b16 %v1426
        %v2390 = vunpack.c.l.b16 %v1427
        %v2391 = vunpack.c.h.b16 %v1427
        %v2392 = vunpack.c.l.b16 %v1428
        %v2393 = vunpack.c.l.b16 %v1429
        %v2394 = vunpack.c.h.b16 %v1429
        %v2395 = vunpack.c.l.b16 %v1430
        %v2396 = vunpack.c.l.b16 %v1431
        %v2397 = vunpack.c.h.b16 %v1431
        %v2398 = vunpack.c.l.b16 %v1432
        %v2399 = vunpack.c.l.b16 %v1433
        %v2400 = vunpack.c.h.b16 %v1433
        %v2401 = vunpack.c.l.b16 %v1434
        %v2402 = vunpack.c.l.b16 %v1435
        %v2403 = vunpack.c.h.b16 %v1435
        %v2404 = vunpack.c.l.b16 %v1436
        %v2405 = vunpack.c.l.b16 %v1437
        %v2406 = vunpack.c.h.b16 %v1437
        %v2407 = vunpack.c.l.b16 %v1438
        %v2408 = vunpack.c.l.b16 %v1439
        %v2409 = vunpack.c.h.b16 %v1439
        %v2410 = vunpack.c.l.b16 %v1440
        %v2411 = vunpack.c.l.b16 %v1441
        %v2412 = vunpack.c.h.b16 %v1441
        %v2413 = vunpack.c.l.b16 %v1442
        %v2414 = vunpack.c.l.b16 %v1443
        %v2415 = vunpack.c.h.b16 %v1443
        %v2416 = vunpack.c.l.b16 %v1444
        %v2417 = vunpack.c.l.b16 %v1445
        %v2418 = vunpack.c.h.b16 %v1445
        %v2419 = vunpack.c.l.b16 %v1446
        %v2420 = vunpack.c.l.b16 %v1447
        %v2421 = vunpack.c.h.b16 %v1447
        %v2422 = vunpack.c.l.b16 %v1448
        %v2423 = vunpack.c.l.b16 %v1449
        %v2424 = vunpack.c.h.b16 %v1449
        %v2425 = vunpack.c.l.b16 %v1450
        %v2426 = vunpack.c.l.b16 %v1451
        %v2427 = vunpack.c.h.b16 %v1451
        %v2428 = vunpack.c.l.b16 %v1452
        %v2429 = vunpack.c.l.b16 %v1453
        %v2430 = vunpack.c.h.b16 %v1453
        %v2431 = vunpack.c.l.b16 %v1454
        %v2432 = vunpack.c.l.b16 %v1455
        %v2433 = vunpack.c.h.b16 %v1455
        %v2434 = vunpack.c.l.b16 %v1456
        %v2435 = vunpack.c.l.b16 %v1457
        %v2436 = vunpack.c.h.b16 %v1457
        %v2437 = vunpack.c.l.b16 %v1458
        %v2438 = vunpack.c.l.b16 %v1459
        %v2439 = vunpack.c.h.b16 %v1459
        %v2440 = vunpack.c.l.b16 %v1460
        %v2441 = vunpack.c.l.b16 %v1461
        %v2442 = vunpack.c.h.b16 %v1461
        %v2443 = vunpack.c.l.b16 %v1462
        %v2444 = vunpack.c.l.b16 %v1463
        %v2445 = vunpack.c.h.b16 %v1463
        %v2446 = vunpack.c.l.b16 %v1464
        %v2447 = vunpack.c.l.b16 %v1465
        %v2448 = vunpack.c.h.b16 %v1465
        %v2449 = vunpack.c.l.b16 %v1466
        %v2450 = vunpack.c.l.b16 %v1467
        %v2451 = vunpack.c.h.b16 %v1467
        %v2452 = vunpack.c.l.b16 %v1468
        %v2453 = vunpack.c.l.b16 %v1469
        %v2454 = vunpack.c.h.b16 %v1469
        %v2455 = vunpack.c.l.b16 %v1470
        %v2456 = vunpack.c.l.b16 %v1471
        %v2457 = vunpack.c.h.b16 %v1471
        %v2458 = vunpack.c.l.b16 %v1472
        %v2459 = vunpack.c.l.b16 %v1473
        %v2460 = vunpack.c.h.b16 %v1473
        %v2461 = vunpack.c.l.b16 %v1474
        %v2462 = vpack.c.b16 %v2369, %v2366
        %v2463 = vpack.c.b16 %v2370, %v2367
        %v2464 = vpack.c.b16 %v2371, %v2368
        %v2465 = vpack.c.b16 %v2375, %v2372
        %v2466 = vpack.c.b16 %v2376, %v2373
        %v2467 = vpack.c.b16 %v2377, %v2374
        %v2468 = vpack.c.b16 %v2381, %v2378
        %v2469 = vpack.c.b16 %v2382, %v2379
        %v2470 = vpack.c.b16 %v2383, %v2380
        %v2471 = vpack.c.b16 %v2387, %v2384
        %v2472 = vpack.c.b16 %v2388, %v2385
        %v2473 = vpack.c.b16 %v2389, %v2386
        %v2474 = vpack.c.b16 %v2393, %v2390
        %v2475 = vpack.c.b16 %v2394, %v2391
        %v2476 = vpack.c.b16 %v2395, %v2392
        %v2477 = vpack.c.b16 %v2399, %v2396
        %v2478 = vpack.c.b16 %v2400, %v2397
        %v2479 = vpack.c.b16 %v2401, %v2398
        %v2480 = vpack.c.b16 %v2405, %v2402
        %v2481 = vpack.c.b16 %v2406, %v2403
        %v2482 = vpack.c.b16 %v2407, %v2404
        %v2483 = vpack.c.b16 %v2411, %v2408
        %v2484 = vpack.c.b16 %v2412, %v2409
        %v2485 = vpack.c.b16 %v2413, %v2410
        %v2486 = vpack.c.b16 %v2417, %v2414
        %v2487 = vpack.c.b16 %v2418, %v2415
        %v2488 = vpack.c.b16 %v2419, %v2416
        %v2489 = vpack.c.b16 %v2423, %v2420
        %v2490 = vpack.c.b16 %v2424, %v2421
        %v2491 = vpack.c.b16 %v2425, %v2422
        %v2492 = vpack.c.b16 %v2429, %v2426
        %v2493 = vpack.c.b16 %v2430, %v2427
        %v2494 = vpack.c.b16 %v2431, %v2428
        %v2495 = vpack.c.b16 %v2435, %v2432
        %v2496 = vpack.c.b16 %v2436, %v2433
        %v2497 = vpack.c.b16 %v2437, %v2434
        %v2498 = vpack.c.b16 %v2441, %v2438
        %v2499 = vpack.c.b16 %v2442, %v2439
        %v2500 = vpack.c.b16 %v2443, %v2440
        %v2501 = vpack.c.b16 %v2447, %v2444
        %v2502 = vpack.c.b16 %v2448, %v2445
        %v2503 = vpack.c.b16 %v2449, %v2446
        %v2504 = vpack.c.b16 %v2453, %v2450
        %v2505 = vpack.c.b16 %v2454, %v2451
        %v2506 = vpack.c.b16 %v2455, %v2452
        %v2507 = vpack.c.b16 %v2459, %v2456
        %v2508 = vpack.c.b16 %v2460, %v2457
        %v2509 = vpack.c.b16 %v2461, %v2458
        %v2606 = vunpack.c.l.b16 %v1475
        %v2607 = vunpack.c.l.b16 %v1476
        %v2608 = vunpack.c.l.b16 %v1477
        %v2609 = vunpack.c.l.b16 %v1478
        %v2610 = vunpack.c.l.b16 %v1479
        %v2611 = vunpack.c.l.b16 %v1480
        %v2612 = vunpack.c.l.b16 %v1481
        %v2613 = vunpack.c.l.b16 %v1482
        %v2614 = vunpack.c.l.b16 %v1483
        %v2615 = vunpack.c.l.b16 %v1484
        %v2616 = vunpack.c.l.b16 %v1485
        %v2617 = vunpack.c.l.b16 %v1486
        %v2618 = vunpack.c.l.b16 %v1487
        %v2619 = vunpack.c.l.b16 %v1488
        %v2620 = vunpack.c.l.b16 %v1489
        %v2621 = vunpack.c.l.b16 %v1490
        %v2622 = vunpack.c.l.b16 %v1491
        %v2623 = vunpack.c.l.b16 %v1492
        %v2624 = vunpack.c.l.b16 %v1493
        %v2625 = vunpack.c.l.b16 %v1494
        %v2626 = vunpack.c.l.b16 %v1495
        %v2627 = vunpack.c.l.b16 %v1496
        %v2628 = vunpack.c.l.b16 %v1497
        %v2629 = vunpack.c.l.b16 %v1498
        %v2630 = vunpack.c.l.b16 %v1499
        %v2631 = vunpack.c.l.b16 %v1500
        %v2632 = vunpack.c.l.b16 %v1501
        %v2633 = vunpack.c.l.b16 %v1502
        %v2634 = vunpack.c.l.b16 %v1503
        %v2635 = vunpack.c.l.b16 %v1504
        %v2636 = vunpack.c.l.b16 %v1505
        %v2637 = vunpack.c.l.b16 %v1506
        %v2638 = vunpack.c.l.b16 %v1507
        %v2639 = vunpack.c.l.b16 %v1508
        %v2640 = vunpack.c.l.b16 %v1509
        %v2641 = vunpack.c.l.b16 %v1510
        %v2642 = vunpack.c.l.b16 %v1511
        %v2643 = vunpack.c.l.b16 %v1512
        %v2644 = vunpack.c.l.b16 %v1513
        %v2645 = vunpack.c.l.b16 %v1514
        %v2646 = vunpack.c.l.b16 %v1515
        %v2647 = vunpack.c.l.b16 %v1516
        %v2648 = vunpack.c.l.b16 %v1517
        %v2649 = vunpack.c.l.b16 %v1518
        %v2650 = vunpack.c.l.b16 %v1519
        %v2651 = vunpack.c.l.b16 %v1520
        %v2652 = vunpack.c.l.b16 %v1521
        %v2653 = vunpack.c.l.b16 %v1522
        %v2654 = vpack.c.b16 %v2607, %v2606
        %v2655 = vpack.c.b16 %v2609, %v2608
        %v2656 = vpack.c.b16 %v2611, %v2610
        %v2657 = vpack.c.b16 %v2613, %v2612
        %v2658 = vpack.c.b16 %v2615, %v2614
        %v2659 = vpack.c.b16 %v2617, %v2616
        %v2660 = vpack.c.b16 %v2619, %v2618
        %v2661 = vpack.c.b16 %v2621, %v2620
        %v2662 = vpack.c.b16 %v2623, %v2622
        %v2663 = vpack.c.b16 %v2625, %v2624
        %v2664 = vpack.c.b16 %v2627, %v2626
        %v2665 = vpack.c.b16 %v2629, %v2628
        %v2666 = vpack.c.b16 %v2631, %v2630
        %v2667 = vpack.c.b16 %v2633, %v2632
        %v2668 = vpack.c.b16 %v2635, %v2634
        %v2669 = vpack.c.b16 %v2637, %v2636
        %v2670 = vpack.c.b16 %v2639, %v2638
        %v2671 = vpack.c.b16 %v2641, %v2640
        %v2672 = vpack.c.b16 %v2643, %v2642
        %v2673 = vpack.c.b16 %v2645, %v2644
        %v2674 = vpack.c.b16 %v2647, %v2646
        %v2675 = vpack.c.b16 %v2649, %v2648
        %v2676 = vpack.c.b16 %v2651, %v2650
        %v2677 = vpack.c.b16 %v2653, %v2652
        %2702 = vmatpush.bf16.msra.mxu0 %v2661
        %2703 = vmatpush.bf16.msra.mxu0 %v2660
        %2704 = vmatpush.bf16.msra.mxu0 %v2659
        %2705 = vmatpush.bf16.msra.mxu0 %v2658
        %2706 = vmatpush.bf16.msra.mxu0 %v2657
        %2707 = vmatpush.bf16.msra.mxu0 %v2656
        %2708 = vmatpush.bf16.msra.mxu0 %v2655
        %2709 = vmatpush.bf16.msra.mxu0 %v2654
        %2710 = vmatmul.bf16.gmra.mxu0 %v2462
        %v2711 = vpop.f32.mrf.mxu0
        %v2712 = vadd.f32 %v2223, %v2711
        %v2713 = vpop.f32.mrf.mxu0
        %v2714 = vadd.f32 %v2225, %v2713
        %2715 = vmatmul.bf16.gmra.mxu0 %v2465
        %v2716 = vpop.f32.mrf.mxu0
        %v2717 = vadd.f32 %v2228, %v2716
        %v2718 = vpop.f32.mrf.mxu0
        %v2719 = vadd.f32 %v2230, %v2718
        %2720 = vmatmul.bf16.gmra.mxu0 %v2468
        %v2721 = vpop.f32.mrf.mxu0
        %v2722 = vadd.f32 %v2233, %v2721
        %v2723 = vpop.f32.mrf.mxu0
        %v2724 = vadd.f32 %v2235, %v2723
        %2725 = vmatmul.bf16.gmra.mxu0 %v2471
        %v2726 = vpop.f32.mrf.mxu0
        %v2727 = vadd.f32 %v2238, %v2726
        %v2728 = vpop.f32.mrf.mxu0
        %v2729 = vadd.f32 %v2240, %v2728
        %2730 = vmatmul.bf16.gmra.mxu0 %v2474
        %v2731 = vpop.f32.mrf.mxu0
        %v2732 = vadd.f32 %v2243, %v2731
        %v2733 = vpop.f32.mrf.mxu0
        %v2734 = vadd.f32 %v2245, %v2733
        %2735 = vmatmul.bf16.gmra.mxu0 %v2477
        %v2736 = vpop.f32.mrf.mxu0
        %v2737 = vadd.f32 %v2248, %v2736
        %v2738 = vpop.f32.mrf.mxu0
        %v2739 = vadd.f32 %v2250, %v2738
        %2740 = vmatmul.bf16.gmra.mxu0 %v2480
        %v2741 = vpop.f32.mrf.mxu0
        %v2742 = vadd.f32 %v2253, %v2741
        %v2743 = vpop.f32.mrf.mxu0
        %v2744 = vadd.f32 %v2255, %v2743
        %2745 = vmatmul.bf16.gmra.mxu0 %v2483
        %v2746 = vpop.f32.mrf.mxu0
        %v2747 = vadd.f32 %v2258, %v2746
        %v2748 = vpop.f32.mrf.mxu0
        %v2749 = vadd.f32 %v2260, %v2748
        %2750 = vmatmul.bf16.gmra.mxu0 %v2486
        %v2751 = vpop.f32.mrf.mxu0
        %v2752 = vadd.f32 %v2263, %v2751
        %v2753 = vpop.f32.mrf.mxu0
        %v2754 = vadd.f32 %v2265, %v2753
        %2755 = vmatmul.bf16.gmra.mxu0 %v2489
        %v2756 = vpop.f32.mrf.mxu0
        %v2757 = vadd.f32 %v2268, %v2756
        %v2758 = vpop.f32.mrf.mxu0
        %v2759 = vadd.f32 %v2270, %v2758
        %2760 = vmatmul.bf16.gmra.mxu0 %v2492
        %v2761 = vpop.f32.mrf.mxu0
        %v2762 = vadd.f32 %v2273, %v2761
        %v2763 = vpop.f32.mrf.mxu0
        %v2764 = vadd.f32 %v2275, %v2763
        %2765 = vmatmul.bf16.gmra.mxu0 %v2495
        %v2766 = vpop.f32.mrf.mxu0
        %v2767 = vadd.f32 %v2278, %v2766
        %v2768 = vpop.f32.mrf.mxu0
        %v2769 = vadd.f32 %v2280, %v2768
        %2770 = vmatmul.bf16.gmra.mxu0 %v2498
        %v2771 = vpop.f32.mrf.mxu0
        %v2772 = vadd.f32 %v2283, %v2771
        %v2773 = vpop.f32.mrf.mxu0
        %v2774 = vadd.f32 %v2285, %v2773
        %2775 = vmatmul.bf16.gmra.mxu0 %v2501
        %v2776 = vpop.f32.mrf.mxu0
        %v2777 = vadd.f32 %v2288, %v2776
        %v2778 = vpop.f32.mrf.mxu0
        %v2779 = vadd.f32 %v2290, %v2778
        %2780 = vmatmul.bf16.gmra.mxu0 %v2504
        %v2781 = vpop.f32.mrf.mxu0
        %v2782 = vadd.f32 %v2293, %v2781
        %v2783 = vpop.f32.mrf.mxu0
        %v2784 = vadd.f32 %v2295, %v2783
        %2785 = vmatmul.bf16.gmra.mxu0 %v2507
        %v2786 = vpop.f32.mrf.mxu0
        %v2787 = vadd.f32 %v2298, %v2786
        %v2788 = vpop.f32.mrf.mxu0
        %v2789 = vadd.f32 %v2300, %v2788
        %2790 = vdwg.mxu0
        %2791 = vmatpush.bf16.msra.mxu0 %v2669
        %2792 = vmatpush.bf16.msra.mxu0 %v2668
        %2793 = vmatpush.bf16.msra.mxu0 %v2667
        %2794 = vmatpush.bf16.msra.mxu0 %v2666
        %2795 = vmatpush.bf16.msra.mxu0 %v2665
        %2796 = vmatpush.bf16.msra.mxu0 %v2664
        %2797 = vmatpush.bf16.msra.mxu0 %v2663
        %2798 = vmatpush.bf16.msra.mxu0 %v2662
        %2799 = vmatmul.bf16.gmra.mxu0 %v2463
        %v2800 = vpop.f32.mrf.mxu0
        %v2801 = vadd.f32 %v2712, %v2800
        %v2802 = vpop.f32.mrf.mxu0
        %v2803 = vadd.f32 %v2714, %v2802
        %2804 = vmatmul.bf16.gmra.mxu0 %v2466
        %v2805 = vpop.f32.mrf.mxu0
        %v2806 = vadd.f32 %v2717, %v2805
        %v2807 = vpop.f32.mrf.mxu0
        %v2808 = vadd.f32 %v2719, %v2807
        %2809 = vmatmul.bf16.gmra.mxu0 %v2469
        %v2810 = vpop.f32.mrf.mxu0
        %v2811 = vadd.f32 %v2722, %v2810
        %v2812 = vpop.f32.mrf.mxu0
        %v2813 = vadd.f32 %v2724, %v2812
        %2814 = vmatmul.bf16.gmra.mxu0 %v2472
        %v2815 = vpop.f32.mrf.mxu0
        %v2816 = vadd.f32 %v2727, %v2815
        %v2817 = vpop.f32.mrf.mxu0
        %v2818 = vadd.f32 %v2729, %v2817
        %2819 = vmatmul.bf16.gmra.mxu0 %v2475
        %v2820 = vpop.f32.mrf.mxu0
        %v2821 = vadd.f32 %v2732, %v2820
        %v2822 = vpop.f32.mrf.mxu0
        %v2823 = vadd.f32 %v2734, %v2822
        %2824 = vmatmul.bf16.gmra.mxu0 %v2478
        %v2825 = vpop.f32.mrf.mxu0
        %v2826 = vadd.f32 %v2737, %v2825
        %v2827 = vpop.f32.mrf.mxu0
        %v2828 = vadd.f32 %v2739, %v2827
        %2829 = vmatmul.bf16.gmra.mxu0 %v2481
        %v2830 = vpop.f32.mrf.mxu0
        %v2831 = vadd.f32 %v2742, %v2830
        %v2832 = vpop.f32.mrf.mxu0
        %v2833 = vadd.f32 %v2744, %v2832
        %2834 = vmatmul.bf16.gmra.mxu0 %v2484
        %v2835 = vpop.f32.mrf.mxu0
        %v2836 = vadd.f32 %v2747, %v2835
        %v2837 = vpop.f32.mrf.mxu0
        %v2838 = vadd.f32 %v2749, %v2837
        %2839 = vmatmul.bf16.gmra.mxu0 %v2487
        %v2840 = vpop.f32.mrf.mxu0
        %v2841 = vadd.f32 %v2752, %v2840
        %v2842 = vpop.f32.mrf.mxu0
        %v2843 = vadd.f32 %v2754, %v2842
        %2844 = vmatmul.bf16.gmra.mxu0 %v2490
        %v2845 = vpop.f32.mrf.mxu0
        %v2846 = vadd.f32 %v2757, %v2845
        %v2847 = vpop.f32.mrf.mxu0
        %v2848 = vadd.f32 %v2759, %v2847
        %2849 = vmatmul.bf16.gmra.mxu0 %v2493
        %v2850 = vpop.f32.mrf.mxu0
        %v2851 = vadd.f32 %v2762, %v2850
        %v2852 = vpop.f32.mrf.mxu0
        %v2853 = vadd.f32 %v2764, %v2852
        %2854 = vmatmul.bf16.gmra.mxu0 %v2496
        %v2855 = vpop.f32.mrf.mxu0
        %v2856 = vadd.f32 %v2767, %v2855
        %v2857 = vpop.f32.mrf.mxu0
        %v2858 = vadd.f32 %v2769, %v2857
        %2859 = vmatmul.bf16.gmra.mxu0 %v2499
        %v2860 = vpop.f32.mrf.mxu0
        %v2861 = vadd.f32 %v2772, %v2860
        %v2862 = vpop.f32.mrf.mxu0
        %v2863 = vadd.f32 %v2774, %v2862
        %2864 = vmatmul.bf16.gmra.mxu0 %v2502
        %v2865 = vpop.f32.mrf.mxu0
        %v2866 = vadd.f32 %v2777, %v2865
        %v2867 = vpop.f32.mrf.mxu0
        %v2868 = vadd.f32 %v2779, %v2867
        %2869 = vmatmul.bf16.gmra.mxu0 %v2505
        %v2870 = vpop.f32.mrf.mxu0
        %v2871 = vadd.f32 %v2782, %v2870
        %v2872 = vpop.f32.mrf.mxu0
        %v2873 = vadd.f32 %v2784, %v2872
        %2874 = vmatmul.bf16.gmra.mxu0 %v2508
        %v2875 = vpop.f32.mrf.mxu0
        %v2876 = vadd.f32 %v2787, %v2875
        %v2877 = vpop.f32.mrf.mxu0
        %v2878 = vadd.f32 %v2789, %v2877
        %2879 = vdwg.mxu0
        %2880 = vmatpush.bf16.msra.mxu0 %v2677
        %2881 = vmatpush.bf16.msra.mxu0 %v2676
        %2882 = vmatpush.bf16.msra.mxu0 %v2675
        %2883 = vmatpush.bf16.msra.mxu0 %v2674
        %2884 = vmatpush.bf16.msra.mxu0 %v2673
        %2885 = vmatpush.bf16.msra.mxu0 %v2672
        %2886 = vmatpush.bf16.msra.mxu0 %v2671
        %2887 = vmatpush.bf16.msra.mxu0 %v2670
        %2888 = vmatmul.bf16.gmra.mxu0 %v2464
        %v2889 = vpop.f32.mrf.mxu0
        %v2890 = vadd.f32 %v2801, %v2889
        %v2891 = vpop.f32.mrf.mxu0
        %v2892 = vadd.f32 %v2803, %v2891
        %2893 = vmatmul.bf16.gmra.mxu0 %v2467
        %v2894 = vpop.f32.mrf.mxu0
        %v2895 = vadd.f32 %v2806, %v2894
        %v2896 = vpop.f32.mrf.mxu0
        %v2897 = vadd.f32 %v2808, %v2896
        %2898 = vmatmul.bf16.gmra.mxu0 %v2470
        %v2899 = vpop.f32.mrf.mxu0
        %v2900 = vadd.f32 %v2811, %v2899
        %v2901 = vpop.f32.mrf.mxu0
        %v2902 = vadd.f32 %v2813, %v2901
        %2903 = vmatmul.bf16.gmra.mxu0 %v2473
        %v2904 = vpop.f32.mrf.mxu0
        %v2905 = vadd.f32 %v2816, %v2904
        %v2906 = vpop.f32.mrf.mxu0
        %v2907 = vadd.f32 %v2818, %v2906
        %2908 = vmatmul.bf16.gmra.mxu0 %v2476
        %v2909 = vpop.f32.mrf.mxu0
        %v2910 = vadd.f32 %v2821, %v2909
        %v2911 = vpop.f32.mrf.mxu0
        %v2912 = vadd.f32 %v2823, %v2911
        %2913 = vmatmul.bf16.gmra.mxu0 %v2479
        %v2914 = vpop.f32.mrf.mxu0
        %v2915 = vadd.f32 %v2826, %v2914
        %v2916 = vpop.f32.mrf.mxu0
        %v2917 = vadd.f32 %v2828, %v2916
        %2918 = vmatmul.bf16.gmra.mxu0 %v2482
        %v2919 = vpop.f32.mrf.mxu0
        %v2920 = vadd.f32 %v2831, %v2919
        %v2921 = vpop.f32.mrf.mxu0
        %v2922 = vadd.f32 %v2833, %v2921
        %2923 = vmatmul.bf16.gmra.mxu0 %v2485
        %v2924 = vpop.f32.mrf.mxu0
        %v2925 = vadd.f32 %v2836, %v2924
        %v2926 = vpop.f32.mrf.mxu0
        %v2927 = vadd.f32 %v2838, %v2926
        %2928 = vmatmul.bf16.gmra.mxu0 %v2488
        %v2929 = vpop.f32.mrf.mxu0
        %v2930 = vadd.f32 %v2841, %v2929
        %v2931 = vpop.f32.mrf.mxu0
        %v2932 = vadd.f32 %v2843, %v2931
        %2933 = vmatmul.bf16.gmra.mxu0 %v2491
        %v2934 = vpop.f32.mrf.mxu0
        %v2935 = vadd.f32 %v2846, %v2934
        %v2936 = vpop.f32.mrf.mxu0
        %v2937 = vadd.f32 %v2848, %v2936
        %2938 = vmatmul.bf16.gmra.mxu0 %v2494
        %v2939 = vpop.f32.mrf.mxu0
        %v2940 = vadd.f32 %v2851, %v2939
        %v2941 = vpop.f32.mrf.mxu0
        %v2942 = vadd.f32 %v2853, %v2941
        %2943 = vmatmul.bf16.gmra.mxu0 %v2497
        %v2944 = vpop.f32.mrf.mxu0
        %v2945 = vadd.f32 %v2856, %v2944
        %v2946 = vpop.f32.mrf.mxu0
        %v2947 = vadd.f32 %v2858, %v2946
        %2948 = vmatmul.bf16.gmra.mxu0 %v2500
        %v2949 = vpop.f32.mrf.mxu0
        %v2950 = vadd.f32 %v2861, %v2949
        %v2951 = vpop.f32.mrf.mxu0
        %v2952 = vadd.f32 %v2863, %v2951
        %2953 = vmatmul.bf16.gmra.mxu0 %v2503
        %v2954 = vpop.f32.mrf.mxu0
        %v2955 = vadd.f32 %v2866, %v2954
        %v2956 = vpop.f32.mrf.mxu0
        %v2957 = vadd.f32 %v2868, %v2956
        %2958 = vmatmul.bf16.gmra.mxu0 %v2506
        %v2959 = vpop.f32.mrf.mxu0
        %v2960 = vadd.f32 %v2871, %v2959
        %v2961 = vpop.f32.mrf.mxu0
        %v2962 = vadd.f32 %v2873, %v2961
        %2963 = vmatmul.bf16.gmra.mxu0 %v2509
        %v2964 = vpop.f32.mrf.mxu0
        %v2965 = vadd.f32 %v2876, %v2964
        %v2966 = vpop.f32.mrf.mxu0
        %v2967 = vadd.f32 %v2878, %v2966
        %2968 = vdwg.mxu0
        %s2969 = scalar_lea.vmem [#allocation2], 48
        %v2970 = vld [vmem:[%s2969] sm:$0xff]
        %v2971 = vld [vmem:[%s2969 + $0x8] sm:$0xf]
        %v2972 = vld [vmem:[%s2969 + $0xc] sm:$0xff]
        %v2973 = vld [vmem:[%s2969 + $0x14] sm:$0xf]
        %v2974 = vld [vmem:[%s2969 + $0x18] sm:$0xff]
        %v2975 = vld [vmem:[%s2969 + $0x20] sm:$0xf]
        %v2976 = vld [vmem:[%s2969 + $0x24] sm:$0xff]
        %v2977 = vld [vmem:[%s2969 + $0x2c] sm:$0xf]
        %v2978 = vld [vmem:[%s2969 + $0x30] sm:$0xff]
        %v2979 = vld [vmem:[%s2969 + $0x38] sm:$0xf]
        %v2980 = vld [vmem:[%s2969 + $0x3c] sm:$0xff]
        %v2981 = vld [vmem:[%s2969 + $0x44] sm:$0xf]
        %v2982 = vld [vmem:[%s2969 + $0x48] sm:$0xff]
        %v2983 = vld [vmem:[%s2969 + $0x50] sm:$0xf]
        %v2984 = vld [vmem:[%s2969 + $0x54] sm:$0xff]
        %v2985 = vld [vmem:[%s2969 + $0x5c] sm:$0xf]
        %v2986 = vld [vmem:[%s2969 + $0x60] sm:$0xff]
        %v2987 = vld [vmem:[%s2969 + $0x68] sm:$0xf]
        %v2988 = vld [vmem:[%s2969 + $0x6c] sm:$0xff]
        %v2989 = vld [vmem:[%s2969 + $0x74] sm:$0xf]
        %v2990 = vld [vmem:[%s2969 + $0x78] sm:$0xff]
        %v2991 = vld [vmem:[%s2969 + $0x80] sm:$0xf]
        %v2992 = vld [vmem:[%s2969 + $0x84] sm:$0xff]
        %v2993 = vld [vmem:[%s2969 + $0x8c] sm:$0xf]
        %v2994 = vld [vmem:[%s2969 + $0x90] sm:$0xff]
        %v2995 = vld [vmem:[%s2969 + $0x98] sm:$0xf]
        %v2996 = vld [vmem:[%s2969 + $0x9c] sm:$0xff]
        %v2997 = vld [vmem:[%s2969 + $0xa4] sm:$0xf]
        %v2998 = vld [vmem:[%s2969 + $0xa8] sm:$0xff]
        %v2999 = vld [vmem:[%s2969 + $0xb0] sm:$0xf]
        %v3000 = vld [vmem:[%s2969 + $0xb4] sm:$0xff]
        %v3001 = vld [vmem:[%s2969 + $0xbc] sm:$0xf]
        %v3002 = vld [vmem:[%s2969 + $0xc0] sm:$0xff]
        %v3003 = vld [vmem:[%s2969 + $0xc8] sm:$0xf]
        %v3004 = vld [vmem:[%s2969 + $0xcc] sm:$0xff]
        %v3005 = vld [vmem:[%s2969 + $0xd4] sm:$0xf]
        %v3006 = vld [vmem:[%s2969 + $0xd8] sm:$0xff]
        %v3007 = vld [vmem:[%s2969 + $0xe0] sm:$0xf]
        %v3008 = vld [vmem:[%s2969 + $0xe4] sm:$0xff]
        %v3009 = vld [vmem:[%s2969 + $0xec] sm:$0xf]
        %v3010 = vld [vmem:[%s2969 + $0xf0] sm:$0xff]
        %v3011 = vld [vmem:[%s2969 + $0xf8] sm:$0xf]
        %v3012 = vld [vmem:[%s2969 + $0xfc] sm:$0xff]
        %v3013 = vld [vmem:[%s2969 + $0x104] sm:$0xf]
        %v3014 = vld [vmem:[%s2969 + $0x108] sm:$0xff]
        %v3015 = vld [vmem:[%s2969 + $0x110] sm:$0xf]
        %v3016 = vld [vmem:[%s2969 + $0x114] sm:$0xff]
        %v3017 = vld [vmem:[%s2969 + $0x11c] sm:$0xf]
        %v3018 = vld [vmem:[%s2969 + $0x120] sm:$0xff]
        %v3019 = vld [vmem:[%s2969 + $0x128] sm:$0xf]
        %v3020 = vld [vmem:[%s2969 + $0x12c] sm:$0xff]
        %v3021 = vld [vmem:[%s2969 + $0x134] sm:$0xf]
        %v3022 = vld [vmem:[%s2969 + $0x138] sm:$0xff]
        %v3023 = vld [vmem:[%s2969 + $0x140] sm:$0xf]
        %v3024 = vld [vmem:[%s2969 + $0x144] sm:$0xff]
        %v3025 = vld [vmem:[%s2969 + $0x14c] sm:$0xf]
        %v3026 = vld [vmem:[%s2969 + $0x150] sm:$0xff]
        %v3027 = vld [vmem:[%s2969 + $0x158] sm:$0xf]
        %v3028 = vld [vmem:[%s2969 + $0x15c] sm:$0xff]
        %v3029 = vld [vmem:[%s2969 + $0x164] sm:$0xf]
        %v3030 = vld [vmem:[%s2969 + $0x168] sm:$0xff]
        %v3031 = vld [vmem:[%s2969 + $0x170] sm:$0xf]
        %v3032 = vld [vmem:[%s2969 + $0x174] sm:$0xff]
        %v3033 = vld [vmem:[%s2969 + $0x17c] sm:$0xf]
        %v3034 = vld [vmem:[#allocation9 + $0x180] sm:$0xf]
        %v3035 = vld [vmem:[#allocation9 + $0x184] sm:$0xf]
        %v3036 = vld [vmem:[#allocation9 + $0x188] sm:$0xf]
        %v3037 = vld [vmem:[#allocation9 + $0x18c] sm:$0xf]
        %v3038 = vld [vmem:[#allocation9 + $0x190] sm:$0xf]
        %v3039 = vld [vmem:[#allocation9 + $0x194] sm:$0xf]
        %v3040 = vld [vmem:[#allocation9 + $0x198] sm:$0xf]
        %v3041 = vld [vmem:[#allocation9 + $0x19c] sm:$0xf]
        %v3042 = vld [vmem:[#allocation9 + $0x1a0] sm:$0xf]
        %v3043 = vld [vmem:[#allocation9 + $0x1a4] sm:$0xf]
        %v3044 = vld [vmem:[#allocation9 + $0x1a8] sm:$0xf]
        %v3045 = vld [vmem:[#allocation9 + $0x1ac] sm:$0xf]
        %v3046 = vld [vmem:[#allocation9 + $0x1b0] sm:$0xf]
        %v3047 = vld [vmem:[#allocation9 + $0x1b4] sm:$0xf]
        %v3048 = vld [vmem:[#allocation9 + $0x1b8] sm:$0xf]
        %v3049 = vld [vmem:[#allocation9 + $0x1bc] sm:$0xf]
        %v3050 = vld [vmem:[#allocation9 + $0x1c0] sm:$0xf]
        %v3051 = vld [vmem:[#allocation9 + $0x1c4] sm:$0xf]
        %v3052 = vld [vmem:[#allocation9 + $0x1c8] sm:$0xf]
        %v3053 = vld [vmem:[#allocation9 + $0x1cc] sm:$0xf]
        %v3054 = vld [vmem:[#allocation9 + $0x1d0] sm:$0xf]
        %v3055 = vld [vmem:[#allocation9 + $0x1d4] sm:$0xf]
        %v3056 = vld [vmem:[#allocation9 + $0x1d8] sm:$0xf]
        %v3057 = vld [vmem:[#allocation9 + $0x1dc] sm:$0xf]
        %v3058 = vld [vmem:[#allocation9 + $0x1e0] sm:$0xf]
        %v3059 = vld [vmem:[#allocation9 + $0x1e4] sm:$0xf]
        %v3060 = vld [vmem:[#allocation9 + $0x1e8] sm:$0xf]
        %v3061 = vld [vmem:[#allocation9 + $0x1ec] sm:$0xf]
        %v3062 = vld [vmem:[#allocation9 + $0x1f0] sm:$0xf]
        %v3063 = vld [vmem:[#allocation9 + $0x1f4] sm:$0xf]
        %v3064 = vld [vmem:[#allocation9 + $0x1f8] sm:$0xf]
        %v3065 = vld [vmem:[#allocation9 + $0x1fc] sm:$0xf]
        %v3066 = vld [vmem:[#allocation9 + $0x200] sm:$0xf]
        %v3067 = vld [vmem:[#allocation9 + $0x204] sm:$0xf]
        %v3068 = vld [vmem:[#allocation9 + $0x208] sm:$0xf]
        %v3069 = vld [vmem:[#allocation9 + $0x20c] sm:$0xf]
        %v3070 = vld [vmem:[#allocation9 + $0x210] sm:$0xf]
        %v3071 = vld [vmem:[#allocation9 + $0x214] sm:$0xf]
        %v3072 = vld [vmem:[#allocation9 + $0x218] sm:$0xf]
        %v3073 = vld [vmem:[#allocation9 + $0x21c] sm:$0xf]
        %v3074 = vld [vmem:[#allocation9 + $0x220] sm:$0xf]
        %v3075 = vld [vmem:[#allocation9 + $0x224] sm:$0xf]
        %v3076 = vld [vmem:[#allocation9 + $0x228] sm:$0xf]
        %v3077 = vld [vmem:[#allocation9 + $0x22c] sm:$0xf]
        %v3078 = vld [vmem:[#allocation9 + $0x230] sm:$0xf]
        %v3079 = vld [vmem:[#allocation9 + $0x234] sm:$0xf]
        %v3080 = vld [vmem:[#allocation9 + $0x238] sm:$0xf]
        %v3081 = vld [vmem:[#allocation9 + $0x23c] sm:$0xf]
        %v3146 = vunpack.c.l.b16 %v2970
        %v3147 = vunpack.c.h.b16 %v2970
        %v3148 = vunpack.c.l.b16 %v2971
        %v3149 = vunpack.c.l.b16 %v2972
        %v3150 = vunpack.c.h.b16 %v2972
        %v3151 = vunpack.c.l.b16 %v2973
        %v3152 = vunpack.c.l.b16 %v2974
        %v3153 = vunpack.c.h.b16 %v2974
        %v3154 = vunpack.c.l.b16 %v2975
        %v3155 = vunpack.c.l.b16 %v2976
        %v3156 = vunpack.c.h.b16 %v2976
        %v3157 = vunpack.c.l.b16 %v2977
        %v3158 = vunpack.c.l.b16 %v2978
        %v3159 = vunpack.c.h.b16 %v2978
        %v3160 = vunpack.c.l.b16 %v2979
        %v3161 = vunpack.c.l.b16 %v2980
        %v3162 = vunpack.c.h.b16 %v2980
        %v3163 = vunpack.c.l.b16 %v2981
        %v3164 = vunpack.c.l.b16 %v2982
        %v3165 = vunpack.c.h.b16 %v2982
        %v3166 = vunpack.c.l.b16 %v2983
        %v3167 = vunpack.c.l.b16 %v2984
        %v3168 = vunpack.c.h.b16 %v2984
        %v3169 = vunpack.c.l.b16 %v2985
        %v3170 = vunpack.c.l.b16 %v2986
        %v3171 = vunpack.c.h.b16 %v2986
        %v3172 = vunpack.c.l.b16 %v2987
        %v3173 = vunpack.c.l.b16 %v2988
        %v3174 = vunpack.c.h.b16 %v2988
        %v3175 = vunpack.c.l.b16 %v2989
        %v3176 = vunpack.c.l.b16 %v2990
        %v3177 = vunpack.c.h.b16 %v2990
        %v3178 = vunpack.c.l.b16 %v2991
        %v3179 = vunpack.c.l.b16 %v2992
        %v3180 = vunpack.c.h.b16 %v2992
        %v3181 = vunpack.c.l.b16 %v2993
        %v3182 = vunpack.c.l.b16 %v2994
        %v3183 = vunpack.c.h.b16 %v2994
        %v3184 = vunpack.c.l.b16 %v2995
        %v3185 = vunpack.c.l.b16 %v2996
        %v3186 = vunpack.c.h.b16 %v2996
        %v3187 = vunpack.c.l.b16 %v2997
        %v3188 = vunpack.c.l.b16 %v2998
        %v3189 = vunpack.c.h.b16 %v2998
        %v3190 = vunpack.c.l.b16 %v2999
        %v3191 = vunpack.c.l.b16 %v3000
        %v3192 = vunpack.c.h.b16 %v3000
        %v3193 = vunpack.c.l.b16 %v3001
        %v3194 = vunpack.c.l.b16 %v3002
        %v3195 = vunpack.c.h.b16 %v3002
        %v3196 = vunpack.c.l.b16 %v3003
        %v3197 = vunpack.c.l.b16 %v3004
        %v3198 = vunpack.c.h.b16 %v3004
        %v3199 = vunpack.c.l.b16 %v3005
        %v3200 = vunpack.c.l.b16 %v3006
        %v3201 = vunpack.c.h.b16 %v3006
        %v3202 = vunpack.c.l.b16 %v3007
        %v3203 = vunpack.c.l.b16 %v3008
        %v3204 = vunpack.c.h.b16 %v3008
        %v3205 = vunpack.c.l.b16 %v3009
        %v3206 = vunpack.c.l.b16 %v3010
        %v3207 = vunpack.c.h.b16 %v3010
        %v3208 = vunpack.c.l.b16 %v3011
        %v3209 = vunpack.c.l.b16 %v3012
        %v3210 = vunpack.c.h.b16 %v3012
        %v3211 = vunpack.c.l.b16 %v3013
        %v3212 = vunpack.c.l.b16 %v3014
        %v3213 = vunpack.c.h.b16 %v3014
        %v3214 = vunpack.c.l.b16 %v3015
        %v3215 = vunpack.c.l.b16 %v3016
        %v3216 = vunpack.c.h.b16 %v3016
        %v3217 = vunpack.c.l.b16 %v3017
        %v3218 = vunpack.c.l.b16 %v3018
        %v3219 = vunpack.c.h.b16 %v3018
        %v3220 = vunpack.c.l.b16 %v3019
        %v3221 = vunpack.c.l.b16 %v3020
        %v3222 = vunpack.c.h.b16 %v3020
        %v3223 = vunpack.c.l.b16 %v3021
        %v3224 = vunpack.c.l.b16 %v3022
        %v3225 = vunpack.c.h.b16 %v3022
        %v3226 = vunpack.c.l.b16 %v3023
        %v3227 = vunpack.c.l.b16 %v3024
        %v3228 = vunpack.c.h.b16 %v3024
        %v3229 = vunpack.c.l.b16 %v3025
        %v3230 = vunpack.c.l.b16 %v3026
        %v3231 = vunpack.c.h.b16 %v3026
        %v3232 = vunpack.c.l.b16 %v3027
        %v3233 = vunpack.c.l.b16 %v3028
        %v3234 = vunpack.c.h.b16 %v3028
        %v3235 = vunpack.c.l.b16 %v3029
        %v3236 = vunpack.c.l.b16 %v3030
        %v3237 = vunpack.c.h.b16 %v3030
        %v3238 = vunpack.c.l.b16 %v3031
        %v3239 = vunpack.c.l.b16 %v3032
        %v3240 = vunpack.c.h.b16 %v3032
        %v3241 = vunpack.c.l.b16 %v3033
        %v3242 = vpack.c.b16 %v3149, %v3146
        %v3243 = vpack.c.b16 %v3150, %v3147
        %v3244 = vpack.c.b16 %v3151, %v3148
        %v3245 = vpack.c.b16 %v3155, %v3152
        %v3246 = vpack.c.b16 %v3156, %v3153
        %v3247 = vpack.c.b16 %v3157, %v3154
        %v3248 = vpack.c.b16 %v3161, %v3158
        %v3249 = vpack.c.b16 %v3162, %v3159
        %v3250 = vpack.c.b16 %v3163, %v3160
        %v3251 = vpack.c.b16 %v3167, %v3164
        %v3252 = vpack.c.b16 %v3168, %v3165
        %v3253 = vpack.c.b16 %v3169, %v3166
        %v3254 = vpack.c.b16 %v3173, %v3170
        %v3255 = vpack.c.b16 %v3174, %v3171
        %v3256 = vpack.c.b16 %v3175, %v3172
        %v3257 = vpack.c.b16 %v3179, %v3176
        %v3258 = vpack.c.b16 %v3180, %v3177
        %v3259 = vpack.c.b16 %v3181, %v3178
        %v3260 = vpack.c.b16 %v3185, %v3182
        %v3261 = vpack.c.b16 %v3186, %v3183
        %v3262 = vpack.c.b16 %v3187, %v3184
        %v3263 = vpack.c.b16 %v3191, %v3188
        %v3264 = vpack.c.b16 %v3192, %v3189
        %v3265 = vpack.c.b16 %v3193, %v3190
        %v3266 = vpack.c.b16 %v3197, %v3194
        %v3267 = vpack.c.b16 %v3198, %v3195
        %v3268 = vpack.c.b16 %v3199, %v3196
        %v3269 = vpack.c.b16 %v3203, %v3200
        %v3270 = vpack.c.b16 %v3204, %v3201
        %v3271 = vpack.c.b16 %v3205, %v3202
        %v3272 = vpack.c.b16 %v3209, %v3206
        %v3273 = vpack.c.b16 %v3210, %v3207
        %v3274 = vpack.c.b16 %v3211, %v3208
        %v3275 = vpack.c.b16 %v3215, %v3212
        %v3276 = vpack.c.b16 %v3216, %v3213
        %v3277 = vpack.c.b16 %v3217, %v3214
        %v3278 = vpack.c.b16 %v3221, %v3218
        %v3279 = vpack.c.b16 %v3222, %v3219
        %v3280 = vpack.c.b16 %v3223, %v3220
        %v3281 = vpack.c.b16 %v3227, %v3224
        %v3282 = vpack.c.b16 %v3228, %v3225
        %v3283 = vpack.c.b16 %v3229, %v3226
        %v3284 = vpack.c.b16 %v3233, %v3230
        %v3285 = vpack.c.b16 %v3234, %v3231
        %v3286 = vpack.c.b16 %v3235, %v3232
        %v3287 = vpack.c.b16 %v3239, %v3236
        %v3288 = vpack.c.b16 %v3240, %v3237
        %v3289 = vpack.c.b16 %v3241, %v3238
        %v3386 = vunpack.c.l.b16 %v3034
        %v3387 = vunpack.c.l.b16 %v3035
        %v3388 = vunpack.c.l.b16 %v3036
        %v3389 = vunpack.c.l.b16 %v3037
        %v3390 = vunpack.c.l.b16 %v3038
        %v3391 = vunpack.c.l.b16 %v3039
        %v3392 = vunpack.c.l.b16 %v3040
        %v3393 = vunpack.c.l.b16 %v3041
        %v3394 = vunpack.c.l.b16 %v3042
        %v3395 = vunpack.c.l.b16 %v3043
        %v3396 = vunpack.c.l.b16 %v3044
        %v3397 = vunpack.c.l.b16 %v3045
        %v3398 = vunpack.c.l.b16 %v3046
        %v3399 = vunpack.c.l.b16 %v3047
        %v3400 = vunpack.c.l.b16 %v3048
        %v3401 = vunpack.c.l.b16 %v3049
        %v3402 = vunpack.c.l.b16 %v3050
        %v3403 = vunpack.c.l.b16 %v3051
        %v3404 = vunpack.c.l.b16 %v3052
        %v3405 = vunpack.c.l.b16 %v3053
        %v3406 = vunpack.c.l.b16 %v3054
        %v3407 = vunpack.c.l.b16 %v3055
        %v3408 = vunpack.c.l.b16 %v3056
        %v3409 = vunpack.c.l.b16 %v3057
        %v3410 = vunpack.c.l.b16 %v3058
        %v3411 = vunpack.c.l.b16 %v3059
        %v3412 = vunpack.c.l.b16 %v3060
        %v3413 = vunpack.c.l.b16 %v3061
        %v3414 = vunpack.c.l.b16 %v3062
        %v3415 = vunpack.c.l.b16 %v3063
        %v3416 = vunpack.c.l.b16 %v3064
        %v3417 = vunpack.c.l.b16 %v3065
        %v3418 = vunpack.c.l.b16 %v3066
        %v3419 = vunpack.c.l.b16 %v3067
        %v3420 = vunpack.c.l.b16 %v3068
        %v3421 = vunpack.c.l.b16 %v3069
        %v3422 = vunpack.c.l.b16 %v3070
        %v3423 = vunpack.c.l.b16 %v3071
        %v3424 = vunpack.c.l.b16 %v3072
        %v3425 = vunpack.c.l.b16 %v3073
        %v3426 = vunpack.c.l.b16 %v3074
        %v3427 = vunpack.c.l.b16 %v3075
        %v3428 = vunpack.c.l.b16 %v3076
        %v3429 = vunpack.c.l.b16 %v3077
        %v3430 = vunpack.c.l.b16 %v3078
        %v3431 = vunpack.c.l.b16 %v3079
        %v3432 = vunpack.c.l.b16 %v3080
        %v3433 = vunpack.c.l.b16 %v3081
        %v3434 = vpack.c.b16 %v3387, %v3386
        %v3435 = vpack.c.b16 %v3389, %v3388
        %v3436 = vpack.c.b16 %v3391, %v3390
        %v3437 = vpack.c.b16 %v3393, %v3392
        %v3438 = vpack.c.b16 %v3395, %v3394
        %v3439 = vpack.c.b16 %v3397, %v3396
        %v3440 = vpack.c.b16 %v3399, %v3398
        %v3441 = vpack.c.b16 %v3401, %v3400
        %v3442 = vpack.c.b16 %v3403, %v3402
        %v3443 = vpack.c.b16 %v3405, %v3404
        %v3444 = vpack.c.b16 %v3407, %v3406
        %v3445 = vpack.c.b16 %v3409, %v3408
        %v3446 = vpack.c.b16 %v3411, %v3410
        %v3447 = vpack.c.b16 %v3413, %v3412
        %v3448 = vpack.c.b16 %v3415, %v3414
        %v3449 = vpack.c.b16 %v3417, %v3416
        %v3450 = vpack.c.b16 %v3419, %v3418
        %v3451 = vpack.c.b16 %v3421, %v3420
        %v3452 = vpack.c.b16 %v3423, %v3422
        %v3453 = vpack.c.b16 %v3425, %v3424
        %v3454 = vpack.c.b16 %v3427, %v3426
        %v3455 = vpack.c.b16 %v3429, %v3428
        %v3456 = vpack.c.b16 %v3431, %v3430
        %v3457 = vpack.c.b16 %v3433, %v3432
        %3482 = vmatpush.bf16.msra.mxu0 %v3441
        %3483 = vmatpush.bf16.msra.mxu0 %v3440
        %3484 = vmatpush.bf16.msra.mxu0 %v3439
        %3485 = vmatpush.bf16.msra.mxu0 %v3438
        %3486 = vmatpush.bf16.msra.mxu0 %v3437
        %3487 = vmatpush.bf16.msra.mxu0 %v3436
        %3488 = vmatpush.bf16.msra.mxu0 %v3435
        %3489 = vmatpush.bf16.msra.mxu0 %v3434
        %3490 = vmatmul.bf16.gmra.mxu0 %v3242
        %v3491 = vpop.f32.mrf.mxu0
        %v3492 = vadd.f32 0.0, %v3491
        %v3493 = vpop.f32.mrf.mxu0
        %v3494 = vadd.f32 0.0, %v3493
        %3495 = vmatmul.bf16.gmra.mxu0 %v3245
        %v3496 = vpop.f32.mrf.mxu0
        %v3497 = vadd.f32 0.0, %v3496
        %v3498 = vpop.f32.mrf.mxu0
        %v3499 = vadd.f32 0.0, %v3498
        %3500 = vmatmul.bf16.gmra.mxu0 %v3248
        %v3501 = vpop.f32.mrf.mxu0
        %v3502 = vadd.f32 0.0, %v3501
        %v3503 = vpop.f32.mrf.mxu0
        %v3504 = vadd.f32 0.0, %v3503
        %3505 = vmatmul.bf16.gmra.mxu0 %v3251
        %v3506 = vpop.f32.mrf.mxu0
        %v3507 = vadd.f32 0.0, %v3506
        %v3508 = vpop.f32.mrf.mxu0
        %v3509 = vadd.f32 0.0, %v3508
        %3510 = vmatmul.bf16.gmra.mxu0 %v3254
        %v3511 = vpop.f32.mrf.mxu0
        %v3512 = vadd.f32 0.0, %v3511
        %v3513 = vpop.f32.mrf.mxu0
        %v3514 = vadd.f32 0.0, %v3513
        %3515 = vmatmul.bf16.gmra.mxu0 %v3257
        %v3516 = vpop.f32.mrf.mxu0
        %v3517 = vadd.f32 0.0, %v3516
        %v3518 = vpop.f32.mrf.mxu0
        %v3519 = vadd.f32 0.0, %v3518
        %3520 = vmatmul.bf16.gmra.mxu0 %v3260
        %v3521 = vpop.f32.mrf.mxu0
        %v3522 = vadd.f32 0.0, %v3521
        %v3523 = vpop.f32.mrf.mxu0
        %v3524 = vadd.f32 0.0, %v3523
        %3525 = vmatmul.bf16.gmra.mxu0 %v3263
        %v3526 = vpop.f32.mrf.mxu0
        %v3527 = vadd.f32 0.0, %v3526
        %v3528 = vpop.f32.mrf.mxu0
        %v3529 = vadd.f32 0.0, %v3528
        %3530 = vmatmul.bf16.gmra.mxu0 %v3266
        %v3531 = vpop.f32.mrf.mxu0
        %v3532 = vadd.f32 0.0, %v3531
        %v3533 = vpop.f32.mrf.mxu0
        %v3534 = vadd.f32 0.0, %v3533
        %3535 = vmatmul.bf16.gmra.mxu0 %v3269
        %v3536 = vpop.f32.mrf.mxu0
        %v3537 = vadd.f32 0.0, %v3536
        %v3538 = vpop.f32.mrf.mxu0
        %v3539 = vadd.f32 0.0, %v3538
        %3540 = vmatmul.bf16.gmra.mxu0 %v3272
        %v3541 = vpop.f32.mrf.mxu0
        %v3542 = vadd.f32 0.0, %v3541
        %v3543 = vpop.f32.mrf.mxu0
        %v3544 = vadd.f32 0.0, %v3543
        %3545 = vmatmul.bf16.gmra.mxu0 %v3275
        %v3546 = vpop.f32.mrf.mxu0
        %v3547 = vadd.f32 0.0, %v3546
        %v3548 = vpop.f32.mrf.mxu0
        %v3549 = vadd.f32 0.0, %v3548
        %3550 = vmatmul.bf16.gmra.mxu0 %v3278
        %v3551 = vpop.f32.mrf.mxu0
        %v3552 = vadd.f32 0.0, %v3551
        %v3553 = vpop.f32.mrf.mxu0
        %v3554 = vadd.f32 0.0, %v3553
        %3555 = vmatmul.bf16.gmra.mxu0 %v3281
        %v3556 = vpop.f32.mrf.mxu0
        %v3557 = vadd.f32 0.0, %v3556
        %v3558 = vpop.f32.mrf.mxu0
        %v3559 = vadd.f32 0.0, %v3558
        %3560 = vmatmul.bf16.gmra.mxu0 %v3284
        %v3561 = vpop.f32.mrf.mxu0
        %v3562 = vadd.f32 0.0, %v3561
        %v3563 = vpop.f32.mrf.mxu0
        %v3564 = vadd.f32 0.0, %v3563
        %3565 = vmatmul.bf16.gmra.mxu0 %v3287
        %v3566 = vpop.f32.mrf.mxu0
        %v3567 = vadd.f32 0.0, %v3566
        %v3568 = vpop.f32.mrf.mxu0
        %v3569 = vadd.f32 0.0, %v3568
        %3570 = vdwg.mxu0
        %3571 = vmatpush.bf16.msra.mxu0 %v3449
        %3572 = vmatpush.bf16.msra.mxu0 %v3448
        %3573 = vmatpush.bf16.msra.mxu0 %v3447
        %3574 = vmatpush.bf16.msra.mxu0 %v3446
        %3575 = vmatpush.bf16.msra.mxu0 %v3445
        %3576 = vmatpush.bf16.msra.mxu0 %v3444
        %3577 = vmatpush.bf16.msra.mxu0 %v3443
        %3578 = vmatpush.bf16.msra.mxu0 %v3442
        %3579 = vmatmul.bf16.gmra.mxu0 %v3243
        %v3580 = vpop.f32.mrf.mxu0
        %v3581 = vadd.f32 %v3492, %v3580
        %v3582 = vpop.f32.mrf.mxu0
        %v3583 = vadd.f32 %v3494, %v3582
        %3584 = vmatmul.bf16.gmra.mxu0 %v3246
        %v3585 = vpop.f32.mrf.mxu0
        %v3586 = vadd.f32 %v3497, %v3585
        %v3587 = vpop.f32.mrf.mxu0
        %v3588 = vadd.f32 %v3499, %v3587
        %3589 = vmatmul.bf16.gmra.mxu0 %v3249
        %v3590 = vpop.f32.mrf.mxu0
        %v3591 = vadd.f32 %v3502, %v3590
        %v3592 = vpop.f32.mrf.mxu0
        %v3593 = vadd.f32 %v3504, %v3592
        %3594 = vmatmul.bf16.gmra.mxu0 %v3252
        %v3595 = vpop.f32.mrf.mxu0
        %v3596 = vadd.f32 %v3507, %v3595
        %v3597 = vpop.f32.mrf.mxu0
        %v3598 = vadd.f32 %v3509, %v3597
        %3599 = vmatmul.bf16.gmra.mxu0 %v3255
        %v3600 = vpop.f32.mrf.mxu0
        %v3601 = vadd.f32 %v3512, %v3600
        %v3602 = vpop.f32.mrf.mxu0
        %v3603 = vadd.f32 %v3514, %v3602
        %3604 = vmatmul.bf16.gmra.mxu0 %v3258
        %v3605 = vpop.f32.mrf.mxu0
        %v3606 = vadd.f32 %v3517, %v3605
        %v3607 = vpop.f32.mrf.mxu0
        %v3608 = vadd.f32 %v3519, %v3607
        %3609 = vmatmul.bf16.gmra.mxu0 %v3261
        %v3610 = vpop.f32.mrf.mxu0
        %v3611 = vadd.f32 %v3522, %v3610
        %v3612 = vpop.f32.mrf.mxu0
        %v3613 = vadd.f32 %v3524, %v3612
        %3614 = vmatmul.bf16.gmra.mxu0 %v3264
        %v3615 = vpop.f32.mrf.mxu0
        %v3616 = vadd.f32 %v3527, %v3615
        %v3617 = vpop.f32.mrf.mxu0
        %v3618 = vadd.f32 %v3529, %v3617
        %3619 = vmatmul.bf16.gmra.mxu0 %v3267
        %v3620 = vpop.f32.mrf.mxu0
        %v3621 = vadd.f32 %v3532, %v3620
        %v3622 = vpop.f32.mrf.mxu0
        %v3623 = vadd.f32 %v3534, %v3622
        %3624 = vmatmul.bf16.gmra.mxu0 %v3270
        %v3625 = vpop.f32.mrf.mxu0
        %v3626 = vadd.f32 %v3537, %v3625
        %v3627 = vpop.f32.mrf.mxu0
        %v3628 = vadd.f32 %v3539, %v3627
        %3629 = vmatmul.bf16.gmra.mxu0 %v3273
        %v3630 = vpop.f32.mrf.mxu0
        %v3631 = vadd.f32 %v3542, %v3630
        %v3632 = vpop.f32.mrf.mxu0
        %v3633 = vadd.f32 %v3544, %v3632
        %3634 = vmatmul.bf16.gmra.mxu0 %v3276
        %v3635 = vpop.f32.mrf.mxu0
        %v3636 = vadd.f32 %v3547, %v3635
        %v3637 = vpop.f32.mrf.mxu0
        %v3638 = vadd.f32 %v3549, %v3637
        %3639 = vmatmul.bf16.gmra.mxu0 %v3279
        %v3640 = vpop.f32.mrf.mxu0
        %v3641 = vadd.f32 %v3552, %v3640
        %v3642 = vpop.f32.mrf.mxu0
        %v3643 = vadd.f32 %v3554, %v3642
        %3644 = vmatmul.bf16.gmra.mxu0 %v3282
        %v3645 = vpop.f32.mrf.mxu0
        %v3646 = vadd.f32 %v3557, %v3645
        %v3647 = vpop.f32.mrf.mxu0
        %v3648 = vadd.f32 %v3559, %v3647
        %3649 = vmatmul.bf16.gmra.mxu0 %v3285
        %v3650 = vpop.f32.mrf.mxu0
        %v3651 = vadd.f32 %v3562, %v3650
        %v3652 = vpop.f32.mrf.mxu0
        %v3653 = vadd.f32 %v3564, %v3652
        %3654 = vmatmul.bf16.gmra.mxu0 %v3288
        %v3655 = vpop.f32.mrf.mxu0
        %v3656 = vadd.f32 %v3567, %v3655
        %v3657 = vpop.f32.mrf.mxu0
        %v3658 = vadd.f32 %v3569, %v3657
        %3659 = vdwg.mxu0
        %3660 = vmatpush.bf16.msra.mxu0 %v3457
        %3661 = vmatpush.bf16.msra.mxu0 %v3456
        %3662 = vmatpush.bf16.msra.mxu0 %v3455
        %3663 = vmatpush.bf16.msra.mxu0 %v3454
        %3664 = vmatpush.bf16.msra.mxu0 %v3453
        %3665 = vmatpush.bf16.msra.mxu0 %v3452
        %3666 = vmatpush.bf16.msra.mxu0 %v3451
        %3667 = vmatpush.bf16.msra.mxu0 %v3450
        %3668 = vmatmul.bf16.gmra.mxu0 %v3244
        %v3669 = vpop.f32.mrf.mxu0
        %v3670 = vadd.f32 %v3581, %v3669
        %v3671 = vpop.f32.mrf.mxu0
        %v3672 = vadd.f32 %v3583, %v3671
        %3673 = vmatmul.bf16.gmra.mxu0 %v3247
        %v3674 = vpop.f32.mrf.mxu0
        %v3675 = vadd.f32 %v3586, %v3674
        %v3676 = vpop.f32.mrf.mxu0
        %v3677 = vadd.f32 %v3588, %v3676
        %3678 = vmatmul.bf16.gmra.mxu0 %v3250
        %v3679 = vpop.f32.mrf.mxu0
        %v3680 = vadd.f32 %v3591, %v3679
        %v3681 = vpop.f32.mrf.mxu0
        %v3682 = vadd.f32 %v3593, %v3681
        %3683 = vmatmul.bf16.gmra.mxu0 %v3253
        %v3684 = vpop.f32.mrf.mxu0
        %v3685 = vadd.f32 %v3596, %v3684
        %v3686 = vpop.f32.mrf.mxu0
        %v3687 = vadd.f32 %v3598, %v3686
        %3688 = vmatmul.bf16.gmra.mxu0 %v3256
        %v3689 = vpop.f32.mrf.mxu0
        %v3690 = vadd.f32 %v3601, %v3689
        %v3691 = vpop.f32.mrf.mxu0
        %v3692 = vadd.f32 %v3603, %v3691
        %3693 = vmatmul.bf16.gmra.mxu0 %v3259
        %v3694 = vpop.f32.mrf.mxu0
        %v3695 = vadd.f32 %v3606, %v3694
        %v3696 = vpop.f32.mrf.mxu0
        %v3697 = vadd.f32 %v3608, %v3696
        %3698 = vmatmul.bf16.gmra.mxu0 %v3262
        %v3699 = vpop.f32.mrf.mxu0
        %v3700 = vadd.f32 %v3611, %v3699
        %v3701 = vpop.f32.mrf.mxu0
        %v3702 = vadd.f32 %v3613, %v3701
        %3703 = vmatmul.bf16.gmra.mxu0 %v3265
        %v3704 = vpop.f32.mrf.mxu0
        %v3705 = vadd.f32 %v3616, %v3704
        %v3706 = vpop.f32.mrf.mxu0
        %v3707 = vadd.f32 %v3618, %v3706
        %3708 = vmatmul.bf16.gmra.mxu0 %v3268
        %v3709 = vpop.f32.mrf.mxu0
        %v3710 = vadd.f32 %v3621, %v3709
        %v3711 = vpop.f32.mrf.mxu0
        %v3712 = vadd.f32 %v3623, %v3711
        %3713 = vmatmul.bf16.gmra.mxu0 %v3271
        %v3714 = vpop.f32.mrf.mxu0
        %v3715 = vadd.f32 %v3626, %v3714
        %v3716 = vpop.f32.mrf.mxu0
        %v3717 = vadd.f32 %v3628, %v3716
        %3718 = vmatmul.bf16.gmra.mxu0 %v3274
        %v3719 = vpop.f32.mrf.mxu0
        %v3720 = vadd.f32 %v3631, %v3719
        %v3721 = vpop.f32.mrf.mxu0
        %v3722 = vadd.f32 %v3633, %v3721
        %3723 = vmatmul.bf16.gmra.mxu0 %v3277
        %v3724 = vpop.f32.mrf.mxu0
        %v3725 = vadd.f32 %v3636, %v3724
        %v3726 = vpop.f32.mrf.mxu0
        %v3727 = vadd.f32 %v3638, %v3726
        %3728 = vmatmul.bf16.gmra.mxu0 %v3280
        %v3729 = vpop.f32.mrf.mxu0
        %v3730 = vadd.f32 %v3641, %v3729
        %v3731 = vpop.f32.mrf.mxu0
        %v3732 = vadd.f32 %v3643, %v3731
        %3733 = vmatmul.bf16.gmra.mxu0 %v3283
        %v3734 = vpop.f32.mrf.mxu0
        %v3735 = vadd.f32 %v3646, %v3734
        %v3736 = vpop.f32.mrf.mxu0
        %v3737 = vadd.f32 %v3648, %v3736
        %3738 = vmatmul.bf16.gmra.mxu0 %v3286
        %v3739 = vpop.f32.mrf.mxu0
        %v3740 = vadd.f32 %v3651, %v3739
        %v3741 = vpop.f32.mrf.mxu0
        %v3742 = vadd.f32 %v3653, %v3741
        %3743 = vmatmul.bf16.gmra.mxu0 %v3289
        %v3744 = vpop.f32.mrf.mxu0
        %v3745 = vadd.f32 %v3656, %v3744
        %v3746 = vpop.f32.mrf.mxu0
        %v3747 = vadd.f32 %v3658, %v3746
        %3748 = vdwg.mxu0
        %v3749 = vadd.f32 %v2890, %v3670
        %v3750 = vadd.f32 %v2892, %v3672
        %v3751 = vadd.f32 %v2895, %v3675
        %v3752 = vadd.f32 %v2897, %v3677
        %v3753 = vadd.f32 %v2900, %v3680
        %v3754 = vadd.f32 %v2902, %v3682
        %v3755 = vadd.f32 %v2905, %v3685
        %v3756 = vadd.f32 %v2907, %v3687
        %v3757 = vadd.f32 %v2910, %v3690
        %v3758 = vadd.f32 %v2912, %v3692
        %v3759 = vadd.f32 %v2915, %v3695
        %v3760 = vadd.f32 %v2917, %v3697
        %v3761 = vadd.f32 %v2920, %v3700
        %v3762 = vadd.f32 %v2922, %v3702
        %v3763 = vadd.f32 %v2925, %v3705
        %v3764 = vadd.f32 %v2927, %v3707
        %v3765 = vadd.f32 %v2930, %v3710
        %v3766 = vadd.f32 %v2932, %v3712
        %v3767 = vadd.f32 %v2935, %v3715
        %v3768 = vadd.f32 %v2937, %v3717
        %v3769 = vadd.f32 %v2940, %v3720
        %v3770 = vadd.f32 %v2942, %v3722
        %v3771 = vadd.f32 %v2945, %v3725
        %v3772 = vadd.f32 %v2947, %v3727
        %v3773 = vadd.f32 %v2950, %v3730
        %v3774 = vadd.f32 %v2952, %v3732
        %v3775 = vadd.f32 %v2955, %v3735
        %v3776 = vadd.f32 %v2957, %v3737
        %v3777 = vadd.f32 %v2960, %v3740
        %v3778 = vadd.f32 %v2962, %v3742
        %v3779 = vadd.f32 %v2965, %v3745
        %v3780 = vadd.f32 %v2967, %v3747
        %v3781 = vld [vmem:[%s4] sm:$0x1]
        %v3783 = vperm.slane %v3781, 0
        %v3785 = vadd.f32 %v3749, %v3783
        %v3786 = vadd.f32 %v3750, %v3783
        %v3787 = vadd.f32 %v3751, %v3783
        %v3788 = vadd.f32 %v3752, %v3783
        %v3789 = vadd.f32 %v3753, %v3783
        %v3790 = vadd.f32 %v3754, %v3783
        %v3791 = vadd.f32 %v3755, %v3783
        %v3792 = vadd.f32 %v3756, %v3783
        %v3793 = vadd.f32 %v3757, %v3783
        %v3794 = vadd.f32 %v3758, %v3783
        %v3795 = vadd.f32 %v3759, %v3783
        %v3796 = vadd.f32 %v3760, %v3783
        %v3797 = vadd.f32 %v3761, %v3783
        %v3798 = vadd.f32 %v3762, %v3783
        %v3799 = vadd.f32 %v3763, %v3783
        %v3800 = vadd.f32 %v3764, %v3783
        %v3801 = vadd.f32 %v3765, %v3783
        %v3802 = vadd.f32 %v3766, %v3783
        %v3803 = vadd.f32 %v3767, %v3783
        %v3804 = vadd.f32 %v3768, %v3783
        %v3805 = vadd.f32 %v3769, %v3783
        %v3806 = vadd.f32 %v3770, %v3783
        %v3807 = vadd.f32 %v3771, %v3783
        %v3808 = vadd.f32 %v3772, %v3783
        %v3809 = vadd.f32 %v3773, %v3783
        %v3810 = vadd.f32 %v3774, %v3783
        %v3811 = vadd.f32 %v3775, %v3783
        %v3812 = vadd.f32 %v3776, %v3783
        %v3813 = vadd.f32 %v3777, %v3783
        %v3814 = vadd.f32 %v3778, %v3783
        %v3815 = vadd.f32 %v3779, %v3783
        %v3816 = vadd.f32 %v3780, %v3783
        %v3817 = vmax.f32 %v3785, 0.0
        %v3818 = vmax.f32 %v3786, 0.0
        %v3819 = vmax.f32 %v3787, 0.0
        %v3820 = vmax.f32 %v3788, 0.0
        %v3821 = vmax.f32 %v3789, 0.0
        %v3822 = vmax.f32 %v3790, 0.0
        %v3823 = vmax.f32 %v3791, 0.0
        %v3824 = vmax.f32 %v3792, 0.0
        %v3825 = vmax.f32 %v3793, 0.0
        %v3826 = vmax.f32 %v3794, 0.0
        %v3827 = vmax.f32 %v3795, 0.0
        %v3828 = vmax.f32 %v3796, 0.0
        %v3829 = vmax.f32 %v3797, 0.0
        %v3830 = vmax.f32 %v3798, 0.0
        %v3831 = vmax.f32 %v3799, 0.0
        %v3832 = vmax.f32 %v3800, 0.0
        %v3833 = vmax.f32 %v3801, 0.0
        %v3834 = vmax.f32 %v3802, 0.0
        %v3835 = vmax.f32 %v3803, 0.0
        %v3836 = vmax.f32 %v3804, 0.0
        %v3837 = vmax.f32 %v3805, 0.0
        %v3838 = vmax.f32 %v3806, 0.0
        %v3839 = vmax.f32 %v3807, 0.0
        %v3840 = vmax.f32 %v3808, 0.0
        %v3841 = vmax.f32 %v3809, 0.0
        %v3842 = vmax.f32 %v3810, 0.0
        %v3843 = vmax.f32 %v3811, 0.0
        %v3844 = vmax.f32 %v3812, 0.0
        %v3845 = vmax.f32 %v3813, 0.0
        %v3846 = vmax.f32 %v3814, 0.0
        %v3847 = vmax.f32 %v3815, 0.0
        %v3848 = vmax.f32 %v3816, 0.0
        %v3849 = vmax.f32 %v3817, %v3819
        %v3850 = vmax.f32 %v3818, %v3820
        %v3851 = vmax.f32 %v3821, %v3823
        %v3852 = vmax.f32 %v3822, %v3824
        %v3853 = vmax.f32 %v3825, %v3827
        %v3854 = vmax.f32 %v3826, %v3828
        %v3855 = vmax.f32 %v3829, %v3831
        %v3856 = vmax.f32 %v3830, %v3832
        %v3857 = vmax.f32 %v3833, %v3835
        %v3858 = vmax.f32 %v3834, %v3836
        %v3859 = vmax.f32 %v3837, %v3839
        %v3860 = vmax.f32 %v3838, %v3840
        %v3861 = vmax.f32 %v3841, %v3843
        %v3862 = vmax.f32 %v3842, %v3844
        %v3863 = vmax.f32 %v3845, %v3847
        %v3864 = vmax.f32 %v3846, %v3848
        %3865 = vst [vmem:[#allocation3] sm:$0xff] %v3849
        %3866 = vst [vmem:[#allocation3 + $0x8] sm:$0xff] %v3850
        %3867 = vst [vmem:[#allocation3 + $0x10] sm:$0xff] %v3851
        %3868 = vst [vmem:[#allocation3 + $0x18] sm:$0xff] %v3852
        %3869 = vst [vmem:[#allocation3 + $0x20] sm:$0xff] %v3853
        %3870 = vst [vmem:[#allocation3 + $0x28] sm:$0xff] %v3854
        %3871 = vst [vmem:[#allocation3 + $0x30] sm:$0xff] %v3855
        %3872 = vst [vmem:[#allocation3 + $0x38] sm:$0xff] %v3856
        %3873 = vst [vmem:[#allocation3 + $0x40] sm:$0xff] %v3857
        %3874 = vst [vmem:[#allocation3 + $0x48] sm:$0xff] %v3858
        %3875 = vst [vmem:[#allocation3 + $0x50] sm:$0xff] %v3859
        %3876 = vst [vmem:[#allocation3 + $0x58] sm:$0xff] %v3860
        %3877 = vst [vmem:[#allocation3 + $0x60] sm:$0xff] %v3861
        %3878 = vst [vmem:[#allocation3 + $0x68] sm:$0xff] %v3862
        %3879 = vst [vmem:[#allocation3 + $0x70] sm:$0xff] %v3863
        %3880 = vst [vmem:[#allocation3 + $0x78] sm:$0xff] %v3864
        %3881 = vxpose.xlu0.b32.start [1/16] %v3817, 128
        %3882 = vxpose.xlu0.b32.cont [2/16] %v3818, 128
        %3883 = vxpose.xlu0.b32.cont [3/16] %v3819, 128
        %3884 = vxpose.xlu0.b32.cont [4/16] %v3820, 128
        %3885 = vxpose.xlu0.b32.cont [5/16] %v3821, 128
        %3886 = vxpose.xlu0.b32.cont [6/16] %v3822, 128
        %3887 = vxpose.xlu0.b32.cont [7/16] %v3823, 128
        %3888 = vxpose.xlu0.b32.cont [8/16] %v3824, 128
        %3889 = vxpose.xlu0.b32.cont [9/16] %v3825, 128
        %3890 = vxpose.xlu0.b32.cont [10/16] %v3826, 128
        %3891 = vxpose.xlu0.b32.cont [11/16] %v3827, 128
        %3892 = vxpose.xlu0.b32.cont [12/16] %v3828, 128
        %3893 = vxpose.xlu0.b32.cont [13/16] %v3829, 128
        %3894 = vxpose.xlu0.b32.cont [14/16] %v3830, 128
        %3895 = vxpose.xlu0.b32.cont [15/16] %v3831, 128
        %3896 = vxpose.xlu0.b32.end [16/16] %v3832, 128
        %v3897 = vpop.trf.xlu0
        %v3898 = vpop.trf.xlu0
        %v3899 = vpop.trf.xlu0
        %v3900 = vpop.trf.xlu0
        %v3901 = vpop.trf.xlu0
        %v3902 = vpop.trf.xlu0
        %v3903 = vpop.trf.xlu0
        %v3904 = vpop.trf.xlu0
        %v3905 = vpop.trf.xlu0
        %v3906 = vpop.trf.xlu0
        %v3907 = vpop.trf.xlu0
        %v3908 = vpop.trf.xlu0
        %v3909 = vpop.trf.xlu0
        %v3910 = vpop.trf.xlu0
        %v3911 = vpop.trf.xlu0
        %v3912 = vpop.trf.xlu0
        %3913 = vxpose.xlu0.b32.start [1/16] %v3833, 128
        %3914 = vxpose.xlu0.b32.cont [2/16] %v3834, 128
        %3915 = vxpose.xlu0.b32.cont [3/16] %v3835, 128
        %3916 = vxpose.xlu0.b32.cont [4/16] %v3836, 128
        %3917 = vxpose.xlu0.b32.cont [5/16] %v3837, 128
        %3918 = vxpose.xlu0.b32.cont [6/16] %v3838, 128
        %3919 = vxpose.xlu0.b32.cont [7/16] %v3839, 128
        %3920 = vxpose.xlu0.b32.cont [8/16] %v3840, 128
        %3921 = vxpose.xlu0.b32.cont [9/16] %v3841, 128
        %3922 = vxpose.xlu0.b32.cont [10/16] %v3842, 128
        %3923 = vxpose.xlu0.b32.cont [11/16] %v3843, 128
        %3924 = vxpose.xlu0.b32.cont [12/16] %v3844, 128
        %3925 = vxpose.xlu0.b32.cont [13/16] %v3845, 128
        %3926 = vxpose.xlu0.b32.cont [14/16] %v3846, 128
        %3927 = vxpose.xlu0.b32.cont [15/16] %v3847, 128
        %3928 = vxpose.xlu0.b32.end [16/16] %v3848, 128
        %v3929 = vpop.trf.xlu0
        %v3930 = vpop.trf.xlu0
        %v3931 = vpop.trf.xlu0
        %v3932 = vpop.trf.xlu0
        %v3933 = vpop.trf.xlu0
        %v3934 = vpop.trf.xlu0
        %v3935 = vpop.trf.xlu0
        %v3936 = vpop.trf.xlu0
        %v3937 = vpop.trf.xlu0
        %v3938 = vpop.trf.xlu0
        %v3939 = vpop.trf.xlu0
        %v3940 = vpop.trf.xlu0
        %v3941 = vpop.trf.xlu0
        %v3942 = vpop.trf.xlu0
        %v3943 = vpop.trf.xlu0
        %v3944 = vpop.trf.xlu0
        %3945 = vst [vmem:[%s308] sm:$0xff] %v3897
        %3946 = vst [vmem:[%s308 + $0x8] sm:$0xff] %v3929
        %v3947 = vld [vmem:[#allocation3] ss:$2 sm:$0xff]
        %s3948 = scalar_lea.vmem [#allocation3], 16
        %v3949 = vld [vmem:[%s3948] ss:$2 sm:$0xff]
        %s3950 = scalar_lea.vmem [#allocation3], 32
        %v3951 = vld [vmem:[%s3950] ss:$2 sm:$0xff]
        %s3952 = scalar_lea.vmem [#allocation3], 48
        %v3953 = vld [vmem:[%s3952] ss:$2 sm:$0xff]
        %s3954 = scalar_lea.vmem [#allocation3], 64
        %v3955 = vld [vmem:[%s3954] ss:$2 sm:$0xff]
        %s3956 = scalar_lea.vmem [#allocation3], 80
        %v3957 = vld [vmem:[%s3956] ss:$2 sm:$0xff]
        %s3958 = scalar_lea.vmem [#allocation3], 96
        %v3959 = vld [vmem:[%s3958] ss:$2 sm:$0xff]
        %s3960 = scalar_lea.vmem [#allocation3], 112
        %v3961 = vld [vmem:[%s3960] ss:$2 sm:$0xff]
        %s3962 = scalar_lea.vmem [#allocation3], 1
        %v3963 = vld [vmem:[%s3962] ss:$2 sm:$0xff]
        %s3964 = scalar_lea.vmem [#allocation3], 17
        %v3965 = vld [vmem:[%s3964] ss:$2 sm:$0xff]
        %s3966 = scalar_lea.vmem [#allocation3], 33
        %v3967 = vld [vmem:[%s3966] ss:$2 sm:$0xff]
        %s3968 = scalar_lea.vmem [#allocation3], 49
        %v3969 = vld [vmem:[%s3968] ss:$2 sm:$0xff]
        %s3970 = scalar_lea.vmem [#allocation3], 65
        %v3971 = vld [vmem:[%s3970] ss:$2 sm:$0xff]
        %s3972 = scalar_lea.vmem [#allocation3], 81
        %v3973 = vld [vmem:[%s3972] ss:$2 sm:$0xff]
        %s3974 = scalar_lea.vmem [#allocation3], 97
        %v3975 = vld [vmem:[%s3974] ss:$2 sm:$0xff]
        %s3976 = scalar_lea.vmem [#allocation3], 113
        %v3977 = vld [vmem:[%s3976] ss:$2 sm:$0xff]
        %v3978 = vmax.f32 %v3947, %v3963
        %v3979 = vmax.f32 %v3949, %v3965
        %v3980 = vmax.f32 %v3951, %v3967
        %v3981 = vmax.f32 %v3953, %v3969
        %v3982 = vmax.f32 %v3955, %v3971
        %v3983 = vmax.f32 %v3957, %v3973
        %v3984 = vmax.f32 %v3959, %v3975
        %v3985 = vmax.f32 %v3961, %v3977
        %3986 = vxpose.xlu0.b32.start [1/16] %v3978, 128
        %3987 = vxpose.xlu0.b32.cont [2/16] %v3979, 128
        %3988 = vxpose.xlu0.b32.cont [3/16] %v3980, 128
        %3989 = vxpose.xlu0.b32.cont [4/16] %v3981, 128
        %3990 = vxpose.xlu0.b32.cont [5/16] %v3982, 128
        %3991 = vxpose.xlu0.b32.cont [6/16] %v3983, 128
        %3992 = vxpose.xlu0.b32.cont [7/16] %v3984, 128
        %3993 = vxpose.xlu0.b32.cont [8/16] %v3985, 128
        %3994 = vxpose.xlu0.b32.cont [9/16] 0.0, 128
        %3995 = vxpose.xlu0.b32.cont [10/16] 0.0, 128
        %3996 = vxpose.xlu0.b32.cont [11/16] 0.0, 128
        %3997 = vxpose.xlu0.b32.cont [12/16] 0.0, 128
        %3998 = vxpose.xlu0.b32.cont [13/16] 0.0, 128
        %3999 = vxpose.xlu0.b32.cont [14/16] 0.0, 128
        %4000 = vxpose.xlu0.b32.cont [15/16] 0.0, 128
        %4001 = vxpose.xlu0.b32.end [16/16] 0.0, 128
        %v4002 = vpop.trf.xlu0
        %v4003 = vpop.trf.xlu0
        %v4004 = vpop.trf.xlu0
        %v4005 = vpop.trf.xlu0
        %v4006 = vpop.trf.xlu0
        %v4007 = vpop.trf.xlu0
        %v4008 = vpop.trf.xlu0
        %v4009 = vpop.trf.xlu0
        %v4010 = vpop.trf.xlu0
        %v4011 = vpop.trf.xlu0
        %v4012 = vpop.trf.xlu0
        %v4013 = vpop.trf.xlu0
        %v4014 = vpop.trf.xlu0
        %v4015 = vpop.trf.xlu0
        %v4016 = vpop.trf.xlu0
        %v4017 = vpop.trf.xlu0
        %vm4018 = vcmask 523264
        %4019 = vst.msk [vmem:[%s315] sm:$0xff] %vm4018, %v4002
        %s4020 = sand.u32 %s146, 1
        %s4021 = scalar_lea.sflag [#allocation6], %s4020
        %s4022 = sand.u32 %s146, 1
        %s4023 = smul.addr %s4022, 16
        %s4024 = scalar_lea.vmem [#allocation10], %s4023
        %s4025 = sand.u32 %s172, 1
        %s4026 = scalar_lea.sflag [#allocation12], %s4025
        %s4027 = sand.u32 %s172, 1
        %s4028 = smul.addr %s4027, 8
        %s4029 = scalar_lea.vmem [#allocation11], %s4028
        // Predicated region
        $region53: #{tpu_custom_call.1} parent=39 // pred_check
          %p4030 = pneg %p156
        $region54: #{tpu_custom_call.1} parent=39 // pred_check_branch
          %4032 = sbr.rel (%p4030) target = $region56
        $region55: #{tpu_custom_call.1} parent=39 // pred_region
          %4034 = vsyncadd %s4021, 0
          %s4035 = smul.addr %s28, 2
          %s4036 = smul.addr %s4035, 8
          %s4037 = scalar_lea.hbm %s5, %s4036
          %s4039 = sshll.u32 %s4024, 4
          %s4040 = int_to_ptr.vmem [resolvable:$true] %s4039
          %s4041 = sshll.u32 %s4037, 4
          %s4042 = int_to_ptr.hbm [resolvable:$true] %s4041
          %4044 = dma.vmem_to_hbm [thread:$0]  %s4040, 256, %s4042, %s4021
        $region56: #{tpu_custom_call.1} parent=39 // pred_fallthru
          _
        // Predicated region
        $region57: #{tpu_custom_call.1} parent=39 // pred_check
          %p4045 = pneg %p182
        $region58: #{tpu_custom_call.1} parent=39 // pred_check_branch
          %4047 = sbr.rel (%p4045) target = $region60
        $region59: #{tpu_custom_call.1} parent=39 // pred_region
          %4049 = vsyncadd %s4026, 0
          %s4050 = smul.addr %s28, 8
          %s4051 = scalar_lea.hbm %s6, %s4050
          %s4053 = sshll.u32 %s4029, 4
          %s4054 = int_to_ptr.vmem [resolvable:$true] %s4053
          %s4055 = sshll.u32 %s4051, 4
          %s4056 = int_to_ptr.hbm [resolvable:$true] %s4055
          %4058 = dma.vmem_to_hbm [thread:$0]  %s4054, 128, %s4056, %s4026
        $region60: #{tpu_custom_call.1} parent=39 // pred_fallthru
          _
      $region40: #{tpu_custom_call.1} parent=5 // pred_fallthru
        _
      %p4059 = scmp.le.s32.totalorder 2, %s23
      // Predicated region
      $region61: #{tpu_custom_call.1} parent=5 // pred_check
        %p4060 = pneg %p4059
      $region62: #{tpu_custom_call.1} parent=5 // pred_check_branch
        %4062 = sbr.rel (%p4060) target = $region64
      $region63: #{tpu_custom_call.1} parent=5 // pred_region
        %s4063 = ssub.s32 %s23, 2
        // Predicated region
        $region65: #{tpu_custom_call.1} parent=63 // pred_check
          %p4064 = pneg %p162
        $region66: #{tpu_custom_call.1} parent=63 // pred_check_branch
          %4066 = sbr.rel (%p4064) target = $region68
        $region67: #{tpu_custom_call.1} parent=63 // pred_region
          %s4067 = sand.u32 %s147, 1
          %s4068 = scalar_lea.sflag [#allocation6], %s4067
          %s4069 = sand.u32 %s147, 1
          %s4070 = smul.addr %s4069, 16
          %s4071 = scalar_lea.vmem [#allocation10], %s4070
          %4073 = dma.done %s4068, 256
        $region68: #{tpu_custom_call.1} parent=63 // pred_fallthru
          _
        // Predicated region
        $region69: #{tpu_custom_call.1} parent=63 // pred_check
          %p4074 = pneg %p188
        $region70: #{tpu_custom_call.1} parent=63 // pred_check_branch
          %4076 = sbr.rel (%p4074) target = $region72
        $region71: #{tpu_custom_call.1} parent=63 // pred_region
          %s4077 = sand.u32 %s173, 1
          %s4078 = scalar_lea.sflag [#allocation12], %s4077
          %s4079 = sand.u32 %s173, 1
          %s4080 = smul.addr %s4079, 8
          %s4081 = scalar_lea.vmem [#allocation11], %s4080
          %4083 = dma.done %s4078, 128
        $region72: #{tpu_custom_call.1} parent=63 // pred_fallthru
          _
      $region64: #{tpu_custom_call.1} parent=5 // pred_fallthru
        _
    $region6: #{tpu_custom_call.1} parent=1 // loop_footer
      %s27 = sadd.s32 1, %s23
    $region7: #{tpu_custom_call.1} parent=1 // loop_footer_branch
      %22 = sbr.rel target = $region3
    $region8: #{tpu_custom_call.1} parent=1 // loop_exit
      _
    %4084 = vsyncpa [#allocation5], 1
    %s4085 = scalar_lea.sflag [#allocation5], 1
    %4086 = vsyncpa %s4085, 1
    %4087 = vsyncpa [#allocation8], 1
    %4088 = vsyncpa [#allocation6], 1
    %s4089 = scalar_lea.sflag [#allocation6], 1
    %4090 = vsyncpa %s4089, 1
    %4091 = vsyncpa [#allocation12], 1
    %s4092 = scalar_lea.sflag [#allocation12], 1
    %4093 = vsyncpa %s4092, 1

</llo_original>
